<compile_context>
chip_gen: v7x
topology: tpu7x:2x2x1
jax: 0.10.0
libtpu: 0.0.40
codegen_flags: <defaults>
</compile_context>

<pallas_src>
import math
from functools import partial

import jax
import jax.numpy as jnp
from jax.experimental import pallas as pl
from jax.experimental.pallas import tpu as pltpu

F32 = jnp.float32
BF16 = jnp.bfloat16
OUT_PAD = 128                    # lane-dense width for the final head output
VMEM_LIMIT = 16 * 1024 * 1024    # tiny footprint; safely below v7x's 64 MiB physical VMEM


# ----------------------------- in-kernel helpers -----------------------------

def _gelu(v):
    # exact (erf) GELU — matches torch.nn.GELU default; computed in f32
    return 0.5 * v * (1.0 + jax.lax.erf(v * (1.0 / math.sqrt(2.0))))


def _ln(v, g, b, eps=1e-5):
    mu = jnp.mean(v, axis=-1, keepdims=True)
    vc = v - mu
    var = jnp.mean(vc * vc, axis=-1, keepdims=True)
    return vc * jax.lax.rsqrt(var + eps) * g + b


def _mm(a_f32, w_bf16):
    # activations cast to bf16 at the MXU boundary; weights are already bf16; f32 accumulation
    return jnp.dot(a_f32.astype(BF16), w_bf16, preferred_element_type=F32)


# ----------------------------- fully fused forward kernel -----------------------------

def _fused_forward_kernel(*refs, n_layers, n_heads, n_hidden):
    xy_ref = refs[0]          # (1, N, din) input block for this batch element
    out_ref = refs[-2]        # (1, N, OUT_PAD) lane-dense output block
    att_sc = refs[-1]         # (N, h) f32 VMEM scratch for per-head attention outputs
    params = refs[1:-2]
    pos = 0

    def take(n):
        nonlocal pos
        vals = params[pos:pos + n]
        pos += n
        return vals

    h = n_hidden
    dh = h // n_heads

    # --- preprocess MLP (+placeholder fused) ---
    pre_w1, pre_b1, pre_w2, pre_b2, ph = take(5)
    x = xy_ref[0].astype(F32)                                    # (N, din)
    y = _gelu(_mm(x, pre_w1[...]) + pre_b1[...])
    z = _mm(y, pre_w2[...]) + pre_b2[...] + ph[...]              # residual stream, stays in VMEM

    # --- transformer blocks, statically unrolled; z never leaves the chip ---
    for li in range(n_layers):
        last = li == n_layers - 1
        (ln1g, ln1b, wqkv, wout, bout,
         ln2g, ln2b, wm1, bm1, wm2, bm2) = take(11)

        # attention sublayer: LN1 -> QKV -> per-head softmax(QK^T)V -> out-proj -> +res
        y = _ln(z, ln1g[...], ln1b[...])
        qkv = _mm(y, wqkv[...])                                  # (N, 3h); 1/sqrt(dh) folded into Q cols
        for hh in range(n_heads):                                # static loop, all heads in one grid cell
            q = qkv[:, hh * dh:(hh + 1) * dh].astype(BF16)
            k = qkv[:, h + hh * dh: h + (hh + 1) * dh].astype(BF16)
            v = qkv[:, 2 * h + hh * dh: 2 * h + (hh + 1) * dh].astype(BF16)
            s = jax.lax.dot_general(q, k, (((1,), (1,)), ((), ())),
                                    preferred_element_type=F32)  # (N, N), no transpose op
            m = jnp.max(s, axis=-1, keepdims=True)
            p = jnp.exp(s - m)
            l = jnp.sum(p, axis=-1, keepdims=True)
            o = jnp.dot(p.astype(BF16), v, preferred_element_type=F32)     # (N, dh)
            att_sc[:, hh * dh:(hh + 1) * dh] = o * pl.reciprocal(l, approx=True)  # EUP, not VPU divide
        z = _mm(att_sc[...], wout[...]) + bout[...] + z          # out-proj + residual fused

        # MLP sublayer: LN2 -> Linear(4h) gelu -> Linear(h) -> +res
        y = _ln(z, ln2g[...], ln2b[...])
        y = _gelu(_mm(y, wm1[...]) + bm1[...])
        z = _mm(y, wm2[...]) + bm2[...] + z

        if last:
            # LN3 -> head; weights pre-padded to OUT_PAD lanes -> dense (unmasked) stores
            ln3g, ln3b, whead, bhead = take(4)
            y = _ln(z, ln3g[...], ln3b[...])
            out_ref[0] = (_mm(y, whead[...]) + bhead[...]).astype(out_ref.dtype)


def forward(kernel_args, a, x, fx):
    B, N, _ = x.shape
    xy = jnp.concatenate([x, fx], axis=-1)
    din = xy.shape[-1]

    in_specs = [pl.BlockSpec((1, N, din), lambda b: (b, 0, 0))]
    # all weights are 2-D, VMEM-resident, invariant across the grid
    in_specs += [pl.BlockSpec(p.shape, lambda b: (0, 0)) for p in kernel_args]

    out = pl.pallas_call(
        partial(_fused_forward_kernel,
                n_layers=a.n_layers, n_heads=a.n_heads, n_hidden=a.n_hidden),
        out_shape=jax.ShapeDtypeStruct((B, N, OUT_PAD), jnp.float32),
        grid=(B,),
        in_specs=in_specs,
        out_specs=pl.BlockSpec((1, N, OUT_PAD), lambda b: (b, 0, 0)),
        scratch_shapes=[pltpu.VMEM((N, a.n_hidden), F32)],
        compiler_params=pltpu.CompilerParams(
            dimension_semantics=("parallel",),       # megacore: one batch element per TC on v7x
            vmem_limit_bytes=VMEM_LIMIT),
    )(xy, *kernel_args)

    return out[..., :a.out_dim]                      # drop the lane padding added for dense stores


# ----------------------------- parameters -----------------------------

class Args:
    space_dim = 2
    fun_dim = 3
    n_hidden = 32
    n_heads = 4
    n_layers = 2
    mlp_ratio = 4
    out_dim = 1
    dropout = 0.0           # inference no-op
    act = "gelu"
    unified_pos = False
    time_input = False


def trunc_normal(key, shape, std=0.02):
    return std * jax.random.truncated_normal(key, -2.0, 2.0, shape, jnp.float32)


def init_params(key, a: Args):
    keys = iter(jax.random.split(key, 128))
    h, mh = a.n_hidden, a.n_hidden * a.mlp_ratio
    din = a.fun_dim + a.space_dim
    p = {
        "pre_w1": trunc_normal(next(keys), (din, 2 * h)),
        "pre_b1": jnp.zeros((2 * h,), jnp.float32),
        "pre_w2": trunc_normal(next(keys), (2 * h, h)),
        "pre_b2": jnp.zeros((h,), jnp.float32),
        "placeholder": jax.random.uniform(next(keys), (h,), jnp.float32) / h,
        "blocks": [],
    }
    for li in range(a.n_layers):
        blk = {
            "ln1_g": jnp.ones((h,), jnp.float32), "ln1_b": jnp.zeros((h,), jnp.float32),
            "w_qkv": trunc_normal(next(keys), (h, 3 * h)),     # to_qkv: bias=False
            "w_out": trunc_normal(next(keys), (h, h)),
            "b_out": jnp.zeros((h,), jnp.float32),
            "ln2_g": jnp.ones((h,), jnp.float32), "ln2_b": jnp.zeros((h,), jnp.float32),
            "w_mlp1": trunc_normal(next(keys), (h, mh)),
            "b_mlp1": jnp.zeros((mh,), jnp.float32),
            "w_mlp2": trunc_normal(next(keys), (mh, h)),
            "b_mlp2": jnp.zeros((h,), jnp.float32),
        }
        if li == a.n_layers - 1:
            blk["ln3_g"] = jnp.ones((h,), jnp.float32)
            blk["ln3_b"] = jnp.zeros((h,), jnp.float32)
            blk["w_head"] = trunc_normal(next(keys), (h, a.out_dim))
            blk["b_head"] = jnp.zeros((a.out_dim,), jnp.float32)
        p["blocks"].append(blk)
    return p


def pack_kernel_args(p, a: Args):
    """One-time packing: bf16 matmul weights (attention scale folded into Q columns),
    2-D f32 biases/LN params, head weights zero-padded to OUT_PAD lanes."""
    h = a.n_hidden
    dh = h // a.n_heads
    scale = dh ** -0.5

    def w(m):
        return m.astype(BF16)

    flat = [w(p["pre_w1"]), p["pre_b1"].reshape(1, -1),
            w(p["pre_w2"]), p["pre_b2"].reshape(1, -1),
            p["placeholder"].reshape(1, -1)]
    n_blocks = len(p["blocks"])
    for li, blk in enumerate(p["blocks"]):
        wqkv = blk["w_qkv"].at[:, :h].multiply(scale)          # fold 1/sqrt(dh) into Q columns
        flat += [blk["ln1_g"].reshape(1, -1), blk["ln1_b"].reshape(1, -1),
                 w(wqkv),
                 w(blk["w_out"]), blk["b_out"].reshape(1, -1),
                 blk["ln2_g"].reshape(1, -1), blk["ln2_b"].reshape(1, -1),
                 w(blk["w_mlp1"]), blk["b_mlp1"].reshape(1, -1),
                 w(blk["w_mlp2"]), blk["b_mlp2"].reshape(1, -1)]
        if li == n_blocks - 1:
            out_dim = blk["w_head"].shape[1]
            whead = jnp.zeros((h, OUT_PAD), BF16).at[:, :out_dim].set(blk["w_head"].astype(BF16))
            bhead = jnp.zeros((1, OUT_PAD), F32).at[0, :out_dim].set(blk["b_head"])
            flat += [blk["ln3_g"].reshape(1, -1), blk["ln3_b"].reshape(1, -1), whead, bhead]
    return flat


# ----------------------------- pure-JAX f32 reference -----------------------------

def ref_forward(params, a: Args, x, fx):
    def ln(v, g, b):
        mu = v.mean(-1, keepdims=True)
        var = ((v - mu) ** 2).mean(-1, keepdims=True)
        return (v - mu) * jax.lax.rsqrt(var + 1e-5) * g + b

    def gelu(v):
        return 0.5 * v * (1.0 + jax.lax.erf(v / math.sqrt(2.0)))

    B, N, _ = x.shape
    h, H = a.n_hidden, a.n_heads
    dh = h // H
    z = jnp.concatenate([x, fx], axis=-1)
    z = gelu(z @ params["pre_w1"] + params["pre_b1"]) @ params["pre_w2"] + params["pre_b2"]
    z = z + params["placeholder"][None, None, :]
    for li, blk in enumerate(params["blocks"]):
        y = ln(z, blk["ln1_g"], blk["ln1_b"])
        qkv = (y @ blk["w_qkv"]).reshape(B, N, 3, H, dh).transpose(2, 0, 3, 1, 4)
        q, k, v = qkv[0], qkv[1], qkv[2]
        s = jnp.einsum("bhnd,bhmd->bhnm", q, k) / math.sqrt(dh)
        p = jax.nn.softmax(s, axis=-1)
        o = jnp.einsum("bhnm,bhmd->bhnd", p, v).transpose(0, 2, 1, 3).reshape(B, N, h)
        z = o @ blk["w_out"] + blk["b_out"] + z
        y = ln(z, blk["ln2_g"], blk["ln2_b"])
        y = gelu(y @ blk["w_mlp1"] + blk["b_mlp1"]) @ blk["w_mlp2"] + blk["b_mlp2"]
        z = y + z
        if li == a.n_layers - 1:
            z = ln(z, blk["ln3_g"], blk["ln3_b"]) @ blk["w_head"] + blk["b_head"]
    return z


# ----------------------------- main -----------------------------

if __name__ == "__main__":
    a = Args()
    key = jax.random.PRNGKey(0)
    k_param, k_x, k_fx = jax.random.split(key, 3)

    B, N = 2, 64
    x = jax.random.normal(k_x, (B, N, a.space_dim), jnp.float32)
    fx = jax.random.normal(k_fx, (B, N, a.fun_dim), jnp.float32)

    params = init_params(k_param, a)
    kernel_args = pack_kernel_args(params, a)     # bf16 / padded / folded — done once

    out = forward(kernel_args, a, x, fx)
    out = jax.block_until_ready(out)

    ref = ref_forward(params, a, x, fx)
    assert out.shape == (B, N, a.out_dim), out.shape
    # Kernel uses bf16 MXU operands (f32 accumulation) + approx reciprocal vs. a pure-f32
    # reference, so compare at bf16-level tolerance.
    assert jnp.allclose(out, ref, rtol=2e-2, atol=2e-2), float(jnp.max(jnp.abs(out - ref)))

    print("KERNEL_OK")
</pallas_src>

<mosaic_0001>
module attributes {stable_mosaic.version = 11 : i64} {
  func.func @_fused_forward_kernel(%arg0: i32, %arg1: memref<1x64x5xf32, #tpu.memory_space<vmem>>, %arg2: memref<5x64xbf16, #tpu.memory_space<vmem>>, %arg3: memref<1x64xf32, #tpu.memory_space<vmem>>, %arg4: memref<64x32xbf16, #tpu.memory_space<vmem>>, %arg5: memref<1x32xf32, #tpu.memory_space<vmem>>, %arg6: memref<1x32xf32, #tpu.memory_space<vmem>>, %arg7: memref<1x32xf32, #tpu.memory_space<vmem>>, %arg8: memref<1x32xf32, #tpu.memory_space<vmem>>, %arg9: memref<32x96xbf16, #tpu.memory_space<vmem>>, %arg10: memref<32x32xbf16, #tpu.memory_space<vmem>>, %arg11: memref<1x32xf32, #tpu.memory_space<vmem>>, %arg12: memref<1x32xf32, #tpu.memory_space<vmem>>, %arg13: memref<1x32xf32, #tpu.memory_space<vmem>>, %arg14: memref<32x128xbf16, #tpu.memory_space<vmem>>, %arg15: memref<1x128xf32, #tpu.memory_space<vmem>>, %arg16: memref<128x32xbf16, #tpu.memory_space<vmem>>, %arg17: memref<1x32xf32, #tpu.memory_space<vmem>>, %arg18: memref<1x32xf32, #tpu.memory_space<vmem>>, %arg19: memref<1x32xf32, #tpu.memory_space<vmem>>, %arg20: memref<32x96xbf16, #tpu.memory_space<vmem>>, %arg21: memref<32x32xbf16, #tpu.memory_space<vmem>>, %arg22: memref<1x32xf32, #tpu.memory_space<vmem>>, %arg23: memref<1x32xf32, #tpu.memory_space<vmem>>, %arg24: memref<1x32xf32, #tpu.memory_space<vmem>>, %arg25: memref<32x128xbf16, #tpu.memory_space<vmem>>, %arg26: memref<1x128xf32, #tpu.memory_space<vmem>>, %arg27: memref<128x32xbf16, #tpu.memory_space<vmem>>, %arg28: memref<1x32xf32, #tpu.memory_space<vmem>>, %arg29: memref<1x32xf32, #tpu.memory_space<vmem>>, %arg30: memref<1x32xf32, #tpu.memory_space<vmem>>, %arg31: memref<32x128xbf16, #tpu.memory_space<vmem>>, %arg32: memref<1x128xf32, #tpu.memory_space<vmem>>, %arg33: memref<1x64x128xf32, #tpu.memory_space<vmem>>, %arg34: memref<64x32xf32, #tpu.memory_space<vmem>>) attributes {dimension_semantics = [#tpu.dimension_semantics<parallel>], iteration_bounds = array<i64: 2>, scalar_prefetch = 0 : i64, scratch_operands = 1 : i64, tpu.core_type = #tpu.core_type<tc>, window_params = [{transform_indices = @transform_0, window_bounds = array<i64: 1, 64, 5>}, {pipeline_mode = #tpu.pipeline_mode<synchronous>, transform_indices = @transform_1, window_bounds = array<i64: 5, 64>}, {pipeline_mode = #tpu.pipeline_mode<synchronous>, transform_indices = @transform_2, window_bounds = array<i64: 1, 64>}, {pipeline_mode = #tpu.pipeline_mode<synchronous>, transform_indices = @transform_3, window_bounds = array<i64: 64, 32>}, {pipeline_mode = #tpu.pipeline_mode<synchronous>, transform_indices = @transform_4, window_bounds = array<i64: 1, 32>}, {pipeline_mode = #tpu.pipeline_mode<synchronous>, transform_indices = @transform_5, window_bounds = array<i64: 1, 32>}, {pipeline_mode = #tpu.pipeline_mode<synchronous>, transform_indices = @transform_6, window_bounds = array<i64: 1, 32>}, {pipeline_mode = #tpu.pipeline_mode<synchronous>, transform_indices = @transform_7, window_bounds = array<i64: 1, 32>}, {pipeline_mode = #tpu.pipeline_mode<synchronous>, transform_indices = @transform_8, window_bounds = array<i64: 32, 96>}, {pipeline_mode = #tpu.pipeline_mode<synchronous>, transform_indices = @transform_9, window_bounds = array<i64: 32, 32>}, {pipeline_mode = #tpu.pipeline_mode<synchronous>, transform_indices = @transform_10, window_bounds = array<i64: 1, 32>}, {pipeline_mode = #tpu.pipeline_mode<synchronous>, transform_indices = @transform_11, window_bounds = array<i64: 1, 32>}, {pipeline_mode = #tpu.pipeline_mode<synchronous>, transform_indices = @transform_12, window_bounds = array<i64: 1, 32>}, {pipeline_mode = #tpu.pipeline_mode<synchronous>, transform_indices = @transform_13, window_bounds = array<i64: 32, 128>}, {pipeline_mode = #tpu.pipeline_mode<synchronous>, transform_indices = @transform_14, window_bounds = array<i64: 1, 128>}, {pipeline_mode = #tpu.pipeline_mode<synchronous>, transform_indices = @transform_15, window_bounds = array<i64: 128, 32>}, {pipeline_mode = #tpu.pipeline_mode<synchronous>, transform_indices = @transform_16, window_bounds = array<i64: 1, 32>}, {pipeline_mode = #tpu.pipeline_mode<synchronous>, transform_indices = @transform_17, window_bounds = array<i64: 1, 32>}, {pipeline_mode = #tpu.pipeline_mode<synchronous>, transform_indices = @transform_18, window_bounds = array<i64: 1, 32>}, {pipeline_mode = #tpu.pipeline_mode<synchronous>, transform_indices = @transform_19, window_bounds = array<i64: 32, 96>}, {pipeline_mode = #tpu.pipeline_mode<synchronous>, transform_indices = @transform_20, window_bounds = array<i64: 32, 32>}, {pipeline_mode = #tpu.pipeline_mode<synchronous>, transform_indices = @transform_21, window_bounds = array<i64: 1, 32>}, {pipeline_mode = #tpu.pipeline_mode<synchronous>, transform_indices = @transform_22, window_bounds = array<i64: 1, 32>}, {pipeline_mode = #tpu.pipeline_mode<synchronous>, transform_indices = @transform_23, window_bounds = array<i64: 1, 32>}, {pipeline_mode = #tpu.pipeline_mode<synchronous>, transform_indices = @transform_24, window_bounds = array<i64: 32, 128>}, {pipeline_mode = #tpu.pipeline_mode<synchronous>, transform_indices = @transform_25, window_bounds = array<i64: 1, 128>}, {pipeline_mode = #tpu.pipeline_mode<synchronous>, transform_indices = @transform_26, window_bounds = array<i64: 128, 32>}, {pipeline_mode = #tpu.pipeline_mode<synchronous>, transform_indices = @transform_27, window_bounds = array<i64: 1, 32>}, {pipeline_mode = #tpu.pipeline_mode<synchronous>, transform_indices = @transform_28, window_bounds = array<i64: 1, 32>}, {pipeline_mode = #tpu.pipeline_mode<synchronous>, transform_indices = @transform_29, window_bounds = array<i64: 1, 32>}, {pipeline_mode = #tpu.pipeline_mode<synchronous>, transform_indices = @transform_30, window_bounds = array<i64: 32, 128>}, {pipeline_mode = #tpu.pipeline_mode<synchronous>, transform_indices = @transform_31, window_bounds = array<i64: 1, 128>}, {transform_indices = @transform_32, window_bounds = array<i64: 1, 64, 128>}]} {
    %c0 = arith.constant 0 : index
    %c0_0 = arith.constant 0 : index
    %c0_1 = arith.constant 0 : index
    %0 = vector.load %arg1[%c0, %c0_0, %c0_1] : memref<1x64x5xf32, #tpu.memory_space<vmem>>, vector<1x64x5xf32>
    %1 = vector.shape_cast %0 : vector<1x64x5xf32> to vector<64x5xf32>
    %c0_2 = arith.constant 0 : index
    %c0_3 = arith.constant 0 : index
    %2 = vector.load %arg2[%c0_2, %c0_3] : memref<5x64xbf16, #tpu.memory_space<vmem>>, vector<5x64xbf16>
    %3 = arith.truncf %1 : vector<64x5xf32> to vector<64x5xbf16>
    %cst = arith.constant dense<0.000000e+00> : vector<64x64xf32>
    %4 = tpu.matmul %3, %2, %cst {dimension_numbers = #tpu.dot_dimension_numbers<[1], [0], [0], [1], [0, 0, 1, 1], [], []>} : vector<64x5xbf16>, vector<5x64xbf16>, vector<64x64xf32> -> vector<64x64xf32>
    %c0_4 = arith.constant 0 : index
    %c0_5 = arith.constant 0 : index
    %5 = vector.load %arg3[%c0_4, %c0_5] : memref<1x64xf32, #tpu.memory_space<vmem>>, vector<1x64xf32>
    %6 = vector.broadcast %5 : vector<1x64xf32> to vector<64x64xf32>
    %7 = arith.addf %4, %6 : vector<64x64xf32>
    %cst_6 = arith.constant 5.000000e-01 : f32
    %8 = vector.broadcast %cst_6 : f32 to vector<64x64xf32>
    %9 = arith.mulf %8, %7 : vector<64x64xf32>
    %cst_7 = arith.constant 0.707106769 : f32
    %10 = vector.broadcast %cst_7 : f32 to vector<64x64xf32>
    %11 = arith.mulf %7, %10 : vector<64x64xf32>
    %12 = math.erf %11 : vector<64x64xf32>
    %cst_8 = arith.constant 1.000000e+00 : f32
    %13 = vector.broadcast %cst_8 : f32 to vector<64x64xf32>
    %14 = arith.addf %13, %12 : vector<64x64xf32>
    %15 = arith.mulf %9, %14 : vector<64x64xf32>
    %c0_9 = arith.constant 0 : index
    %c0_10 = arith.constant 0 : index
    %16 = vector.load %arg4[%c0_9, %c0_10] : memref<64x32xbf16, #tpu.memory_space<vmem>>, vector<64x32xbf16>
    %17 = arith.truncf %15 : vector<64x64xf32> to vector<64x64xbf16>
    %cst_11 = arith.constant dense<0.000000e+00> : vector<64x32xf32>
    %18 = tpu.matmul %17, %16, %cst_11 {dimension_numbers = #tpu.dot_dimension_numbers<[1], [0], [0], [1], [0, 0, 1, 1], [], []>} : vector<64x64xbf16>, vector<64x32xbf16>, vector<64x32xf32> -> vector<64x32xf32>
    %c0_12 = arith.constant 0 : index
    %c0_13 = arith.constant 0 : index
    %19 = vector.load %arg5[%c0_12, %c0_13] : memref<1x32xf32, #tpu.memory_space<vmem>>, vector<1x32xf32>
    %20 = vector.broadcast %19 : vector<1x32xf32> to vector<64x32xf32>
    %21 = arith.addf %18, %20 : vector<64x32xf32>
    %c0_14 = arith.constant 0 : index
    %c0_15 = arith.constant 0 : index
    %22 = vector.load %arg6[%c0_14, %c0_15] : memref<1x32xf32, #tpu.memory_space<vmem>>, vector<1x32xf32>
    %23 = vector.broadcast %22 : vector<1x32xf32> to vector<64x32xf32>
    %24 = arith.addf %21, %23 : vector<64x32xf32>
    %c0_16 = arith.constant 0 : index
    %c0_17 = arith.constant 0 : index
    %25 = vector.load %arg7[%c0_16, %c0_17] : memref<1x32xf32, #tpu.memory_space<vmem>>, vector<1x32xf32>
    %c0_18 = arith.constant 0 : index
    %c0_19 = arith.constant 0 : index
    %26 = vector.load %arg8[%c0_18, %c0_19] : memref<1x32xf32, #tpu.memory_space<vmem>>, vector<1x32xf32>
    %cst_20 = arith.constant dense<0.000000e+00> : vector<64xf32>
    %27 = vector.multi_reduction <add>, %24, %cst_20 [1] : vector<64x32xf32> to vector<64xf32>
    %28 = vector.shape_cast %27 : vector<64xf32> to vector<64x1xf32>
    %cst_21 = arith.constant 3.200000e+01 : f32
    %29 = vector.broadcast %cst_21 : f32 to vector<64x1xf32>
    %30 = arith.divf %28, %29 : vector<64x1xf32>
    %31 = vector.broadcast %30 : vector<64x1xf32> to vector<64x32xf32>
    %32 = arith.subf %24, %31 : vector<64x32xf32>
    %33 = arith.mulf %32, %32 : vector<64x32xf32>
    %cst_22 = arith.constant dense<0.000000e+00> : vector<64xf32>
    %34 = vector.multi_reduction <add>, %33, %cst_22 [1] : vector<64x32xf32> to vector<64xf32>
    %35 = vector.shape_cast %34 : vector<64xf32> to vector<64x1xf32>
    %cst_23 = arith.constant 3.200000e+01 : f32
    %36 = vector.broadcast %cst_23 : f32 to vector<64x1xf32>
    %37 = arith.divf %35, %36 : vector<64x1xf32>
    %cst_24 = arith.constant 9.99999974E-6 : f32
    %38 = vector.broadcast %cst_24 : f32 to vector<64x1xf32>
    %39 = arith.addf %37, %38 : vector<64x1xf32>
    %40 = math.rsqrt %39 : vector<64x1xf32>
    %41 = vector.broadcast %40 : vector<64x1xf32> to vector<64x32xf32>
    %42 = arith.mulf %32, %41 : vector<64x32xf32>
    %43 = vector.broadcast %25 : vector<1x32xf32> to vector<64x32xf32>
    %44 = arith.mulf %42, %43 : vector<64x32xf32>
    %45 = vector.broadcast %26 : vector<1x32xf32> to vector<64x32xf32>
    %46 = arith.addf %44, %45 : vector<64x32xf32>
    %c0_25 = arith.constant 0 : index
    %c0_26 = arith.constant 0 : index
    %47 = vector.load %arg9[%c0_25, %c0_26] : memref<32x96xbf16, #tpu.memory_space<vmem>>, vector<32x96xbf16>
    %48 = arith.truncf %46 : vector<64x32xf32> to vector<64x32xbf16>
    %cst_27 = arith.constant dense<0.000000e+00> : vector<64x96xf32>
    %49 = tpu.matmul %48, %47, %cst_27 {dimension_numbers = #tpu.dot_dimension_numbers<[1], [0], [0], [1], [0, 0, 1, 1], [], []>} : vector<64x32xbf16>, vector<32x96xbf16>, vector<64x96xf32> -> vector<64x96xf32>
    %50 = vector.extract_strided_slice %49 {offsets = [0, 0], sizes = [64, 8], strides = [1, 1]} : vector<64x96xf32> to vector<64x8xf32>
    %51 = arith.truncf %50 : vector<64x8xf32> to vector<64x8xbf16>
    %52 = vector.extract_strided_slice %49 {offsets = [0, 32], sizes = [64, 8], strides = [1, 1]} : vector<64x96xf32> to vector<64x8xf32>
    %53 = arith.truncf %52 : vector<64x8xf32> to vector<64x8xbf16>
    %54 = vector.extract_strided_slice %49 {offsets = [0, 64], sizes = [64, 8], strides = [1, 1]} : vector<64x96xf32> to vector<64x8xf32>
    %55 = arith.truncf %54 : vector<64x8xf32> to vector<64x8xbf16>
    %cst_28 = arith.constant dense<0.000000e+00> : vector<64x64xf32>
    %56 = tpu.matmul %51, %53, %cst_28 {dimension_numbers = #tpu.dot_dimension_numbers<[1], [1], [0], [0], [0, 0, 1, 0], [], []>} : vector<64x8xbf16>, vector<64x8xbf16>, vector<64x64xf32> -> vector<64x64xf32>
    %cst_29 = arith.constant dense<0xFF800000> : vector<64xf32>
    %57 = vector.multi_reduction <maximumf>, %56, %cst_29 [1] : vector<64x64xf32> to vector<64xf32>
    %58 = vector.shape_cast %57 : vector<64xf32> to vector<64x1xf32>
    %59 = vector.broadcast %58 : vector<64x1xf32> to vector<64x64xf32>
    %60 = arith.subf %56, %59 : vector<64x64xf32>
    %61 = math.exp %60 : vector<64x64xf32>
    %cst_30 = arith.constant dense<0.000000e+00> : vector<64xf32>
    %62 = vector.multi_reduction <add>, %61, %cst_30 [1] : vector<64x64xf32> to vector<64xf32>
    %63 = vector.shape_cast %62 : vector<64xf32> to vector<64x1xf32>
    %64 = arith.truncf %61 : vector<64x64xf32> to vector<64x64xbf16>
    %cst_31 = arith.constant dense<0.000000e+00> : vector<64x8xf32>
    %65 = tpu.matmul %64, %55, %cst_31 {dimension_numbers = #tpu.dot_dimension_numbers<[1], [0], [0], [1], [0, 0, 1, 1], [], []>} : vector<64x64xbf16>, vector<64x8xbf16>, vector<64x8xf32> -> vector<64x8xf32>
    %66 = tpu.reciprocal %63 {approx = true} : vector<64x1xf32> -> vector<64x1xf32>
    %67 = vector.broadcast %66 : vector<64x1xf32> to vector<64x8xf32>
    %68 = arith.mulf %65, %67 : vector<64x8xf32>
    %c0_32 = arith.constant 0 : index
    %c0_33 = arith.constant 0 : index
    %69 = vector.load %arg34[%c0_32, %c0_33] : memref<64x32xf32, #tpu.memory_space<vmem>>, vector<64x8xf32>
    tpu.vector_store %arg34[%c0_32, %c0_33], %68 {strides = array<i32>} : memref<64x32xf32, #tpu.memory_space<vmem>>, vector<64x8xf32>,
    %70 = vector.extract_strided_slice %49 {offsets = [0, 8], sizes = [64, 8], strides = [1, 1]} : vector<64x96xf32> to vector<64x8xf32>
    %71 = arith.truncf %70 : vector<64x8xf32> to vector<64x8xbf16>
    %72 = vector.extract_strided_slice %49 {offsets = [0, 40], sizes = [64, 8], strides = [1, 1]} : vector<64x96xf32> to vector<64x8xf32>
    %73 = arith.truncf %72 : vector<64x8xf32> to vector<64x8xbf16>
    %74 = vector.extract_strided_slice %49 {offsets = [0, 72], sizes = [64, 8], strides = [1, 1]} : vector<64x96xf32> to vector<64x8xf32>
    %75 = arith.truncf %74 : vector<64x8xf32> to vector<64x8xbf16>
    %cst_34 = arith.constant dense<0.000000e+00> : vector<64x64xf32>
    %76 = tpu.matmul %71, %73, %cst_34 {dimension_numbers = #tpu.dot_dimension_numbers<[1], [1], [0], [0], [0, 0, 1, 0], [], []>} : vector<64x8xbf16>, vector<64x8xbf16>, vector<64x64xf32> -> vector<64x64xf32>
    %cst_35 = arith.constant dense<0xFF800000> : vector<64xf32>
    %77 = vector.multi_reduction <maximumf>, %76, %cst_35 [1] : vector<64x64xf32> to vector<64xf32>
    %78 = vector.shape_cast %77 : vector<64xf32> to vector<64x1xf32>
    %79 = vector.broadcast %78 : vector<64x1xf32> to vector<64x64xf32>
    %80 = arith.subf %76, %79 : vector<64x64xf32>
    %81 = math.exp %80 : vector<64x64xf32>
    %cst_36 = arith.constant dense<0.000000e+00> : vector<64xf32>
    %82 = vector.multi_reduction <add>, %81, %cst_36 [1] : vector<64x64xf32> to vector<64xf32>
    %83 = vector.shape_cast %82 : vector<64xf32> to vector<64x1xf32>
    %84 = arith.truncf %81 : vector<64x64xf32> to vector<64x64xbf16>
    %cst_37 = arith.constant dense<0.000000e+00> : vector<64x8xf32>
    %85 = tpu.matmul %84, %75, %cst_37 {dimension_numbers = #tpu.dot_dimension_numbers<[1], [0], [0], [1], [0, 0, 1, 1], [], []>} : vector<64x64xbf16>, vector<64x8xbf16>, vector<64x8xf32> -> vector<64x8xf32>
    %86 = tpu.reciprocal %83 {approx = true} : vector<64x1xf32> -> vector<64x1xf32>
    %87 = vector.broadcast %86 : vector<64x1xf32> to vector<64x8xf32>
    %88 = arith.mulf %85, %87 : vector<64x8xf32>
    %c0_38 = arith.constant 0 : index
    %c8 = arith.constant 8 : index
    %89 = vector.load %arg34[%c0_38, %c8] : memref<64x32xf32, #tpu.memory_space<vmem>>, vector<64x8xf32>
    tpu.vector_store %arg34[%c0_38, %c8], %88 {strides = array<i32>} : memref<64x32xf32, #tpu.memory_space<vmem>>, vector<64x8xf32>,
    %90 = vector.extract_strided_slice %49 {offsets = [0, 16], sizes = [64, 8], strides = [1, 1]} : vector<64x96xf32> to vector<64x8xf32>
    %91 = arith.truncf %90 : vector<64x8xf32> to vector<64x8xbf16>
    %92 = vector.extract_strided_slice %49 {offsets = [0, 48], sizes = [64, 8], strides = [1, 1]} : vector<64x96xf32> to vector<64x8xf32>
    %93 = arith.truncf %92 : vector<64x8xf32> to vector<64x8xbf16>
    %94 = vector.extract_strided_slice %49 {offsets = [0, 80], sizes = [64, 8], strides = [1, 1]} : vector<64x96xf32> to vector<64x8xf32>
    %95 = arith.truncf %94 : vector<64x8xf32> to vector<64x8xbf16>
    %cst_39 = arith.constant dense<0.000000e+00> : vector<64x64xf32>
    %96 = tpu.matmul %91, %93, %cst_39 {dimension_numbers = #tpu.dot_dimension_numbers<[1], [1], [0], [0], [0, 0, 1, 0], [], []>} : vector<64x8xbf16>, vector<64x8xbf16>, vector<64x64xf32> -> vector<64x64xf32>
    %cst_40 = arith.constant dense<0xFF800000> : vector<64xf32>
    %97 = vector.multi_reduction <maximumf>, %96, %cst_40 [1] : vector<64x64xf32> to vector<64xf32>
    %98 = vector.shape_cast %97 : vector<64xf32> to vector<64x1xf32>
    %99 = vector.broadcast %98 : vector<64x1xf32> to vector<64x64xf32>
    %100 = arith.subf %96, %99 : vector<64x64xf32>
    %101 = math.exp %100 : vector<64x64xf32>
    %cst_41 = arith.constant dense<0.000000e+00> : vector<64xf32>
    %102 = vector.multi_reduction <add>, %101, %cst_41 [1] : vector<64x64xf32> to vector<64xf32>
    %103 = vector.shape_cast %102 : vector<64xf32> to vector<64x1xf32>
    %104 = arith.truncf %101 : vector<64x64xf32> to vector<64x64xbf16>
    %cst_42 = arith.constant dense<0.000000e+00> : vector<64x8xf32>
    %105 = tpu.matmul %104, %95, %cst_42 {dimension_numbers = #tpu.dot_dimension_numbers<[1], [0], [0], [1], [0, 0, 1, 1], [], []>} : vector<64x64xbf16>, vector<64x8xbf16>, vector<64x8xf32> -> vector<64x8xf32>
    %106 = tpu.reciprocal %103 {approx = true} : vector<64x1xf32> -> vector<64x1xf32>
    %107 = vector.broadcast %106 : vector<64x1xf32> to vector<64x8xf32>
    %108 = arith.mulf %105, %107 : vector<64x8xf32>
    %c0_43 = arith.constant 0 : index
    %c16 = arith.constant 16 : index
    %109 = vector.load %arg34[%c0_43, %c16] : memref<64x32xf32, #tpu.memory_space<vmem>>, vector<64x8xf32>
    tpu.vector_store %arg34[%c0_43, %c16], %108 {strides = array<i32>} : memref<64x32xf32, #tpu.memory_space<vmem>>, vector<64x8xf32>,
    %110 = vector.extract_strided_slice %49 {offsets = [0, 24], sizes = [64, 8], strides = [1, 1]} : vector<64x96xf32> to vector<64x8xf32>
    %111 = arith.truncf %110 : vector<64x8xf32> to vector<64x8xbf16>
    %112 = vector.extract_strided_slice %49 {offsets = [0, 56], sizes = [64, 8], strides = [1, 1]} : vector<64x96xf32> to vector<64x8xf32>
    %113 = arith.truncf %112 : vector<64x8xf32> to vector<64x8xbf16>
    %114 = vector.extract_strided_slice %49 {offsets = [0, 88], sizes = [64, 8], strides = [1, 1]} : vector<64x96xf32> to vector<64x8xf32>
    %115 = arith.truncf %114 : vector<64x8xf32> to vector<64x8xbf16>
    %cst_44 = arith.constant dense<0.000000e+00> : vector<64x64xf32>
    %116 = tpu.matmul %111, %113, %cst_44 {dimension_numbers = #tpu.dot_dimension_numbers<[1], [1], [0], [0], [0, 0, 1, 0], [], []>} : vector<64x8xbf16>, vector<64x8xbf16>, vector<64x64xf32> -> vector<64x64xf32>
    %cst_45 = arith.constant dense<0xFF800000> : vector<64xf32>
    %117 = vector.multi_reduction <maximumf>, %116, %cst_45 [1] : vector<64x64xf32> to vector<64xf32>
    %118 = vector.shape_cast %117 : vector<64xf32> to vector<64x1xf32>
    %119 = vector.broadcast %118 : vector<64x1xf32> to vector<64x64xf32>
    %120 = arith.subf %116, %119 : vector<64x64xf32>
    %121 = math.exp %120 : vector<64x64xf32>
    %cst_46 = arith.constant dense<0.000000e+00> : vector<64xf32>
    %122 = vector.multi_reduction <add>, %121, %cst_46 [1] : vector<64x64xf32> to vector<64xf32>
    %123 = vector.shape_cast %122 : vector<64xf32> to vector<64x1xf32>
    %124 = arith.truncf %121 : vector<64x64xf32> to vector<64x64xbf16>
    %cst_47 = arith.constant dense<0.000000e+00> : vector<64x8xf32>
    %125 = tpu.matmul %124, %115, %cst_47 {dimension_numbers = #tpu.dot_dimension_numbers<[1], [0], [0], [1], [0, 0, 1, 1], [], []>} : vector<64x64xbf16>, vector<64x8xbf16>, vector<64x8xf32> -> vector<64x8xf32>
    %126 = tpu.reciprocal %123 {approx = true} : vector<64x1xf32> -> vector<64x1xf32>
    %127 = vector.broadcast %126 : vector<64x1xf32> to vector<64x8xf32>
    %128 = arith.mulf %125, %127 : vector<64x8xf32>
    %c0_48 = arith.constant 0 : index
    %c24 = arith.constant 24 : index
    %129 = vector.load %arg34[%c0_48, %c24] : memref<64x32xf32, #tpu.memory_space<vmem>>, vector<64x8xf32>
    tpu.vector_store %arg34[%c0_48, %c24], %128 {strides = array<i32>} : memref<64x32xf32, #tpu.memory_space<vmem>>, vector<64x8xf32>,
    %c0_49 = arith.constant 0 : index
    %c0_50 = arith.constant 0 : index
    %130 = vector.load %arg34[%c0_49, %c0_50] : memref<64x32xf32, #tpu.memory_space<vmem>>, vector<64x32xf32>
    %c0_51 = arith.constant 0 : index
    %c0_52 = arith.constant 0 : index
    %131 = vector.load %arg10[%c0_51, %c0_52] : memref<32x32xbf16, #tpu.memory_space<vmem>>, vector<32x32xbf16>
    %132 = arith.truncf %130 : vector<64x32xf32> to vector<64x32xbf16>
    %cst_53 = arith.constant dense<0.000000e+00> : vector<64x32xf32>
    %133 = tpu.matmul %132, %131, %cst_53 {dimension_numbers = #tpu.dot_dimension_numbers<[1], [0], [0], [1], [0, 0, 1, 1], [], []>} : vector<64x32xbf16>, vector<32x32xbf16>, vector<64x32xf32> -> vector<64x32xf32>
    %c0_54 = arith.constant 0 : index
    %c0_55 = arith.constant 0 : index
    %134 = vector.load %arg11[%c0_54, %c0_55] : memref<1x32xf32, #tpu.memory_space<vmem>>, vector<1x32xf32>
    %135 = vector.broadcast %134 : vector<1x32xf32> to vector<64x32xf32>
    %136 = arith.addf %133, %135 : vector<64x32xf32>
    %137 = arith.addf %136, %24 : vector<64x32xf32>
    %c0_56 = arith.constant 0 : index
    %c0_57 = arith.constant 0 : index
    %138 = vector.load %arg12[%c0_56, %c0_57] : memref<1x32xf32, #tpu.memory_space<vmem>>, vector<1x32xf32>
    %c0_58 = arith.constant 0 : index
    %c0_59 = arith.constant 0 : index
    %139 = vector.load %arg13[%c0_58, %c0_59] : memref<1x32xf32, #tpu.memory_space<vmem>>, vector<1x32xf32>
    %cst_60 = arith.constant dense<0.000000e+00> : vector<64xf32>
    %140 = vector.multi_reduction <add>, %137, %cst_60 [1] : vector<64x32xf32> to vector<64xf32>
    %141 = vector.shape_cast %140 : vector<64xf32> to vector<64x1xf32>
    %cst_61 = arith.constant 3.200000e+01 : f32
    %142 = vector.broadcast %cst_61 : f32 to vector<64x1xf32>
    %143 = arith.divf %141, %142 : vector<64x1xf32>
    %144 = vector.broadcast %143 : vector<64x1xf32> to vector<64x32xf32>
    %145 = arith.subf %137, %144 : vector<64x32xf32>
    %146 = arith.mulf %145, %145 : vector<64x32xf32>
    %cst_62 = arith.constant dense<0.000000e+00> : vector<64xf32>
    %147 = vector.multi_reduction <add>, %146, %cst_62 [1] : vector<64x32xf32> to vector<64xf32>
    %148 = vector.shape_cast %147 : vector<64xf32> to vector<64x1xf32>
    %cst_63 = arith.constant 3.200000e+01 : f32
    %149 = vector.broadcast %cst_63 : f32 to vector<64x1xf32>
    %150 = arith.divf %148, %149 : vector<64x1xf32>
    %cst_64 = arith.constant 9.99999974E-6 : f32
    %151 = vector.broadcast %cst_64 : f32 to vector<64x1xf32>
    %152 = arith.addf %150, %151 : vector<64x1xf32>
    %153 = math.rsqrt %152 : vector<64x1xf32>
    %154 = vector.broadcast %153 : vector<64x1xf32> to vector<64x32xf32>
    %155 = arith.mulf %145, %154 : vector<64x32xf32>
    %156 = vector.broadcast %138 : vector<1x32xf32> to vector<64x32xf32>
    %157 = arith.mulf %155, %156 : vector<64x32xf32>
    %158 = vector.broadcast %139 : vector<1x32xf32> to vector<64x32xf32>
    %159 = arith.addf %157, %158 : vector<64x32xf32>
    %c0_65 = arith.constant 0 : index
    %c0_66 = arith.constant 0 : index
    %160 = vector.load %arg14[%c0_65, %c0_66] : memref<32x128xbf16, #tpu.memory_space<vmem>>, vector<32x128xbf16>
    %161 = arith.truncf %159 : vector<64x32xf32> to vector<64x32xbf16>
    %cst_67 = arith.constant dense<0.000000e+00> : vector<64x128xf32>
    %162 = tpu.matmul %161, %160, %cst_67 {dimension_numbers = #tpu.dot_dimension_numbers<[1], [0], [0], [1], [0, 0, 1, 1], [], []>} : vector<64x32xbf16>, vector<32x128xbf16>, vector<64x128xf32> -> vector<64x128xf32>
    %c0_68 = arith.constant 0 : index
    %c0_69 = arith.constant 0 : index
    %163 = vector.load %arg15[%c0_68, %c0_69] : memref<1x128xf32, #tpu.memory_space<vmem>>, vector<1x128xf32>
    %164 = vector.broadcast %163 : vector<1x128xf32> to vector<64x128xf32>
    %165 = arith.addf %162, %164 : vector<64x128xf32>
    %cst_70 = arith.constant 5.000000e-01 : f32
    %166 = vector.broadcast %cst_70 : f32 to vector<64x128xf32>
    %167 = arith.mulf %166, %165 : vector<64x128xf32>
    %cst_71 = arith.constant 0.707106769 : f32
    %168 = vector.broadcast %cst_71 : f32 to vector<64x128xf32>
    %169 = arith.mulf %165, %168 : vector<64x128xf32>
    %170 = math.erf %169 : vector<64x128xf32>
    %cst_72 = arith.constant 1.000000e+00 : f32
    %171 = vector.broadcast %cst_72 : f32 to vector<64x128xf32>
    %172 = arith.addf %171, %170 : vector<64x128xf32>
    %173 = arith.mulf %167, %172 : vector<64x128xf32>
    %c0_73 = arith.constant 0 : index
    %c0_74 = arith.constant 0 : index
    %174 = vector.load %arg16[%c0_73, %c0_74] : memref<128x32xbf16, #tpu.memory_space<vmem>>, vector<128x32xbf16>
    %175 = arith.truncf %173 : vector<64x128xf32> to vector<64x128xbf16>
    %cst_75 = arith.constant dense<0.000000e+00> : vector<64x32xf32>
    %176 = tpu.matmul %175, %174, %cst_75 {dimension_numbers = #tpu.dot_dimension_numbers<[1], [0], [0], [1], [0, 0, 1, 1], [], []>} : vector<64x128xbf16>, vector<128x32xbf16>, vector<64x32xf32> -> vector<64x32xf32>
    %c0_76 = arith.constant 0 : index
    %c0_77 = arith.constant 0 : index
    %177 = vector.load %arg17[%c0_76, %c0_77] : memref<1x32xf32, #tpu.memory_space<vmem>>, vector<1x32xf32>
    %178 = vector.broadcast %177 : vector<1x32xf32> to vector<64x32xf32>
    %179 = arith.addf %176, %178 : vector<64x32xf32>
    %180 = arith.addf %179, %137 : vector<64x32xf32>
    %c0_78 = arith.constant 0 : index
    %c0_79 = arith.constant 0 : index
    %181 = vector.load %arg18[%c0_78, %c0_79] : memref<1x32xf32, #tpu.memory_space<vmem>>, vector<1x32xf32>
    %c0_80 = arith.constant 0 : index
    %c0_81 = arith.constant 0 : index
    %182 = vector.load %arg19[%c0_80, %c0_81] : memref<1x32xf32, #tpu.memory_space<vmem>>, vector<1x32xf32>
    %cst_82 = arith.constant dense<0.000000e+00> : vector<64xf32>
    %183 = vector.multi_reduction <add>, %180, %cst_82 [1] : vector<64x32xf32> to vector<64xf32>
    %184 = vector.shape_cast %183 : vector<64xf32> to vector<64x1xf32>
    %cst_83 = arith.constant 3.200000e+01 : f32
    %185 = vector.broadcast %cst_83 : f32 to vector<64x1xf32>
    %186 = arith.divf %184, %185 : vector<64x1xf32>
    %187 = vector.broadcast %186 : vector<64x1xf32> to vector<64x32xf32>
    %188 = arith.subf %180, %187 : vector<64x32xf32>
    %189 = arith.mulf %188, %188 : vector<64x32xf32>
    %cst_84 = arith.constant dense<0.000000e+00> : vector<64xf32>
    %190 = vector.multi_reduction <add>, %189, %cst_84 [1] : vector<64x32xf32> to vector<64xf32>
    %191 = vector.shape_cast %190 : vector<64xf32> to vector<64x1xf32>
    %cst_85 = arith.constant 3.200000e+01 : f32
    %192 = vector.broadcast %cst_85 : f32 to vector<64x1xf32>
    %193 = arith.divf %191, %192 : vector<64x1xf32>
    %cst_86 = arith.constant 9.99999974E-6 : f32
    %194 = vector.broadcast %cst_86 : f32 to vector<64x1xf32>
    %195 = arith.addf %193, %194 : vector<64x1xf32>
    %196 = math.rsqrt %195 : vector<64x1xf32>
    %197 = vector.broadcast %196 : vector<64x1xf32> to vector<64x32xf32>
    %198 = arith.mulf %188, %197 : vector<64x32xf32>
    %199 = vector.broadcast %181 : vector<1x32xf32> to vector<64x32xf32>
    %200 = arith.mulf %198, %199 : vector<64x32xf32>
    %201 = vector.broadcast %182 : vector<1x32xf32> to vector<64x32xf32>
    %202 = arith.addf %200, %201 : vector<64x32xf32>
    %c0_87 = arith.constant 0 : index
    %c0_88 = arith.constant 0 : index
    %203 = vector.load %arg20[%c0_87, %c0_88] : memref<32x96xbf16, #tpu.memory_space<vmem>>, vector<32x96xbf16>
    %204 = arith.truncf %202 : vector<64x32xf32> to vector<64x32xbf16>
    %cst_89 = arith.constant dense<0.000000e+00> : vector<64x96xf32>
    %205 = tpu.matmul %204, %203, %cst_89 {dimension_numbers = #tpu.dot_dimension_numbers<[1], [0], [0], [1], [0, 0, 1, 1], [], []>} : vector<64x32xbf16>, vector<32x96xbf16>, vector<64x96xf32> -> vector<64x96xf32>
    %206 = vector.extract_strided_slice %205 {offsets = [0, 0], sizes = [64, 8], strides = [1, 1]} : vector<64x96xf32> to vector<64x8xf32>
    %207 = arith.truncf %206 : vector<64x8xf32> to vector<64x8xbf16>
    %208 = vector.extract_strided_slice %205 {offsets = [0, 32], sizes = [64, 8], strides = [1, 1]} : vector<64x96xf32> to vector<64x8xf32>
    %209 = arith.truncf %208 : vector<64x8xf32> to vector<64x8xbf16>
    %210 = vector.extract_strided_slice %205 {offsets = [0, 64], sizes = [64, 8], strides = [1, 1]} : vector<64x96xf32> to vector<64x8xf32>
    %211 = arith.truncf %210 : vector<64x8xf32> to vector<64x8xbf16>
    %cst_90 = arith.constant dense<0.000000e+00> : vector<64x64xf32>
    %212 = tpu.matmul %207, %209, %cst_90 {dimension_numbers = #tpu.dot_dimension_numbers<[1], [1], [0], [0], [0, 0, 1, 0], [], []>} : vector<64x8xbf16>, vector<64x8xbf16>, vector<64x64xf32> -> vector<64x64xf32>
    %cst_91 = arith.constant dense<0xFF800000> : vector<64xf32>
    %213 = vector.multi_reduction <maximumf>, %212, %cst_91 [1] : vector<64x64xf32> to vector<64xf32>
    %214 = vector.shape_cast %213 : vector<64xf32> to vector<64x1xf32>
    %215 = vector.broadcast %214 : vector<64x1xf32> to vector<64x64xf32>
    %216 = arith.subf %212, %215 : vector<64x64xf32>
    %217 = math.exp %216 : vector<64x64xf32>
    %cst_92 = arith.constant dense<0.000000e+00> : vector<64xf32>
    %218 = vector.multi_reduction <add>, %217, %cst_92 [1] : vector<64x64xf32> to vector<64xf32>
    %219 = vector.shape_cast %218 : vector<64xf32> to vector<64x1xf32>
    %220 = arith.truncf %217 : vector<64x64xf32> to vector<64x64xbf16>
    %cst_93 = arith.constant dense<0.000000e+00> : vector<64x8xf32>
    %221 = tpu.matmul %220, %211, %cst_93 {dimension_numbers = #tpu.dot_dimension_numbers<[1], [0], [0], [1], [0, 0, 1, 1], [], []>} : vector<64x64xbf16>, vector<64x8xbf16>, vector<64x8xf32> -> vector<64x8xf32>
    %222 = tpu.reciprocal %219 {approx = true} : vector<64x1xf32> -> vector<64x1xf32>
    %223 = vector.broadcast %222 : vector<64x1xf32> to vector<64x8xf32>
    %224 = arith.mulf %221, %223 : vector<64x8xf32>
    %c0_94 = arith.constant 0 : index
    %c0_95 = arith.constant 0 : index
    %225 = vector.load %arg34[%c0_94, %c0_95] : memref<64x32xf32, #tpu.memory_space<vmem>>, vector<64x8xf32>
    tpu.vector_store %arg34[%c0_94, %c0_95], %224 {strides = array<i32>} : memref<64x32xf32, #tpu.memory_space<vmem>>, vector<64x8xf32>,
    %226 = vector.extract_strided_slice %205 {offsets = [0, 8], sizes = [64, 8], strides = [1, 1]} : vector<64x96xf32> to vector<64x8xf32>
    %227 = arith.truncf %226 : vector<64x8xf32> to vector<64x8xbf16>
    %228 = vector.extract_strided_slice %205 {offsets = [0, 40], sizes = [64, 8], strides = [1, 1]} : vector<64x96xf32> to vector<64x8xf32>
    %229 = arith.truncf %228 : vector<64x8xf32> to vector<64x8xbf16>
    %230 = vector.extract_strided_slice %205 {offsets = [0, 72], sizes = [64, 8], strides = [1, 1]} : vector<64x96xf32> to vector<64x8xf32>
    %231 = arith.truncf %230 : vector<64x8xf32> to vector<64x8xbf16>
    %cst_96 = arith.constant dense<0.000000e+00> : vector<64x64xf32>
    %232 = tpu.matmul %227, %229, %cst_96 {dimension_numbers = #tpu.dot_dimension_numbers<[1], [1], [0], [0], [0, 0, 1, 0], [], []>} : vector<64x8xbf16>, vector<64x8xbf16>, vector<64x64xf32> -> vector<64x64xf32>
    %cst_97 = arith.constant dense<0xFF800000> : vector<64xf32>
    %233 = vector.multi_reduction <maximumf>, %232, %cst_97 [1] : vector<64x64xf32> to vector<64xf32>
    %234 = vector.shape_cast %233 : vector<64xf32> to vector<64x1xf32>
    %235 = vector.broadcast %234 : vector<64x1xf32> to vector<64x64xf32>
    %236 = arith.subf %232, %235 : vector<64x64xf32>
    %237 = math.exp %236 : vector<64x64xf32>
    %cst_98 = arith.constant dense<0.000000e+00> : vector<64xf32>
    %238 = vector.multi_reduction <add>, %237, %cst_98 [1] : vector<64x64xf32> to vector<64xf32>
    %239 = vector.shape_cast %238 : vector<64xf32> to vector<64x1xf32>
    %240 = arith.truncf %237 : vector<64x64xf32> to vector<64x64xbf16>
    %cst_99 = arith.constant dense<0.000000e+00> : vector<64x8xf32>
    %241 = tpu.matmul %240, %231, %cst_99 {dimension_numbers = #tpu.dot_dimension_numbers<[1], [0], [0], [1], [0, 0, 1, 1], [], []>} : vector<64x64xbf16>, vector<64x8xbf16>, vector<64x8xf32> -> vector<64x8xf32>
    %242 = tpu.reciprocal %239 {approx = true} : vector<64x1xf32> -> vector<64x1xf32>
    %243 = vector.broadcast %242 : vector<64x1xf32> to vector<64x8xf32>
    %244 = arith.mulf %241, %243 : vector<64x8xf32>
    %c0_100 = arith.constant 0 : index
    %c8_101 = arith.constant 8 : index
    %245 = vector.load %arg34[%c0_100, %c8_101] : memref<64x32xf32, #tpu.memory_space<vmem>>, vector<64x8xf32>
    tpu.vector_store %arg34[%c0_100, %c8_101], %244 {strides = array<i32>} : memref<64x32xf32, #tpu.memory_space<vmem>>, vector<64x8xf32>,
    %246 = vector.extract_strided_slice %205 {offsets = [0, 16], sizes = [64, 8], strides = [1, 1]} : vector<64x96xf32> to vector<64x8xf32>
    %247 = arith.truncf %246 : vector<64x8xf32> to vector<64x8xbf16>
    %248 = vector.extract_strided_slice %205 {offsets = [0, 48], sizes = [64, 8], strides = [1, 1]} : vector<64x96xf32> to vector<64x8xf32>
    %249 = arith.truncf %248 : vector<64x8xf32> to vector<64x8xbf16>
    %250 = vector.extract_strided_slice %205 {offsets = [0, 80], sizes = [64, 8], strides = [1, 1]} : vector<64x96xf32> to vector<64x8xf32>
    %251 = arith.truncf %250 : vector<64x8xf32> to vector<64x8xbf16>
    %cst_102 = arith.constant dense<0.000000e+00> : vector<64x64xf32>
    %252 = tpu.matmul %247, %249, %cst_102 {dimension_numbers = #tpu.dot_dimension_numbers<[1], [1], [0], [0], [0, 0, 1, 0], [], []>} : vector<64x8xbf16>, vector<64x8xbf16>, vector<64x64xf32> -> vector<64x64xf32>
    %cst_103 = arith.constant dense<0xFF800000> : vector<64xf32>
    %253 = vector.multi_reduction <maximumf>, %252, %cst_103 [1] : vector<64x64xf32> to vector<64xf32>
    %254 = vector.shape_cast %253 : vector<64xf32> to vector<64x1xf32>
    %255 = vector.broadcast %254 : vector<64x1xf32> to vector<64x64xf32>
    %256 = arith.subf %252, %255 : vector<64x64xf32>
    %257 = math.exp %256 : vector<64x64xf32>
    %cst_104 = arith.constant dense<0.000000e+00> : vector<64xf32>
    %258 = vector.multi_reduction <add>, %257, %cst_104 [1] : vector<64x64xf32> to vector<64xf32>
    %259 = vector.shape_cast %258 : vector<64xf32> to vector<64x1xf32>
    %260 = arith.truncf %257 : vector<64x64xf32> to vector<64x64xbf16>
    %cst_105 = arith.constant dense<0.000000e+00> : vector<64x8xf32>
    %261 = tpu.matmul %260, %251, %cst_105 {dimension_numbers = #tpu.dot_dimension_numbers<[1], [0], [0], [1], [0, 0, 1, 1], [], []>} : vector<64x64xbf16>, vector<64x8xbf16>, vector<64x8xf32> -> vector<64x8xf32>
    %262 = tpu.reciprocal %259 {approx = true} : vector<64x1xf32> -> vector<64x1xf32>
    %263 = vector.broadcast %262 : vector<64x1xf32> to vector<64x8xf32>
    %264 = arith.mulf %261, %263 : vector<64x8xf32>
    %c0_106 = arith.constant 0 : index
    %c16_107 = arith.constant 16 : index
    %265 = vector.load %arg34[%c0_106, %c16_107] : memref<64x32xf32, #tpu.memory_space<vmem>>, vector<64x8xf32>
    tpu.vector_store %arg34[%c0_106, %c16_107], %264 {strides = array<i32>} : memref<64x32xf32, #tpu.memory_space<vmem>>, vector<64x8xf32>,
    %266 = vector.extract_strided_slice %205 {offsets = [0, 24], sizes = [64, 8], strides = [1, 1]} : vector<64x96xf32> to vector<64x8xf32>
    %267 = arith.truncf %266 : vector<64x8xf32> to vector<64x8xbf16>
    %268 = vector.extract_strided_slice %205 {offsets = [0, 56], sizes = [64, 8], strides = [1, 1]} : vector<64x96xf32> to vector<64x8xf32>
    %269 = arith.truncf %268 : vector<64x8xf32> to vector<64x8xbf16>
    %270 = vector.extract_strided_slice %205 {offsets = [0, 88], sizes = [64, 8], strides = [1, 1]} : vector<64x96xf32> to vector<64x8xf32>
    %271 = arith.truncf %270 : vector<64x8xf32> to vector<64x8xbf16>
    %cst_108 = arith.constant dense<0.000000e+00> : vector<64x64xf32>
    %272 = tpu.matmul %267, %269, %cst_108 {dimension_numbers = #tpu.dot_dimension_numbers<[1], [1], [0], [0], [0, 0, 1, 0], [], []>} : vector<64x8xbf16>, vector<64x8xbf16>, vector<64x64xf32> -> vector<64x64xf32>
    %cst_109 = arith.constant dense<0xFF800000> : vector<64xf32>
    %273 = vector.multi_reduction <maximumf>, %272, %cst_109 [1] : vector<64x64xf32> to vector<64xf32>
    %274 = vector.shape_cast %273 : vector<64xf32> to vector<64x1xf32>
    %275 = vector.broadcast %274 : vector<64x1xf32> to vector<64x64xf32>
    %276 = arith.subf %272, %275 : vector<64x64xf32>
    %277 = math.exp %276 : vector<64x64xf32>
    %cst_110 = arith.constant dense<0.000000e+00> : vector<64xf32>
    %278 = vector.multi_reduction <add>, %277, %cst_110 [1] : vector<64x64xf32> to vector<64xf32>
    %279 = vector.shape_cast %278 : vector<64xf32> to vector<64x1xf32>
    %280 = arith.truncf %277 : vector<64x64xf32> to vector<64x64xbf16>
    %cst_111 = arith.constant dense<0.000000e+00> : vector<64x8xf32>
    %281 = tpu.matmul %280, %271, %cst_111 {dimension_numbers = #tpu.dot_dimension_numbers<[1], [0], [0], [1], [0, 0, 1, 1], [], []>} : vector<64x64xbf16>, vector<64x8xbf16>, vector<64x8xf32> -> vector<64x8xf32>
    %282 = tpu.reciprocal %279 {approx = true} : vector<64x1xf32> -> vector<64x1xf32>
    %283 = vector.broadcast %282 : vector<64x1xf32> to vector<64x8xf32>
    %284 = arith.mulf %281, %283 : vector<64x8xf32>
    %c0_112 = arith.constant 0 : index
    %c24_113 = arith.constant 24 : index
    %285 = vector.load %arg34[%c0_112, %c24_113] : memref<64x32xf32, #tpu.memory_space<vmem>>, vector<64x8xf32>
    tpu.vector_store %arg34[%c0_112, %c24_113], %284 {strides = array<i32>} : memref<64x32xf32, #tpu.memory_space<vmem>>, vector<64x8xf32>,
    %c0_114 = arith.constant 0 : index
    %c0_115 = arith.constant 0 : index
    %286 = vector.load %arg34[%c0_114, %c0_115] : memref<64x32xf32, #tpu.memory_space<vmem>>, vector<64x32xf32>
    %c0_116 = arith.constant 0 : index
    %c0_117 = arith.constant 0 : index
    %287 = vector.load %arg21[%c0_116, %c0_117] : memref<32x32xbf16, #tpu.memory_space<vmem>>, vector<32x32xbf16>
    %288 = arith.truncf %286 : vector<64x32xf32> to vector<64x32xbf16>
    %cst_118 = arith.constant dense<0.000000e+00> : vector<64x32xf32>
    %289 = tpu.matmul %288, %287, %cst_118 {dimension_numbers = #tpu.dot_dimension_numbers<[1], [0], [0], [1], [0, 0, 1, 1], [], []>} : vector<64x32xbf16>, vector<32x32xbf16>, vector<64x32xf32> -> vector<64x32xf32>
    %c0_119 = arith.constant 0 : index
    %c0_120 = arith.constant 0 : index
    %290 = vector.load %arg22[%c0_119, %c0_120] : memref<1x32xf32, #tpu.memory_space<vmem>>, vector<1x32xf32>
    %291 = vector.broadcast %290 : vector<1x32xf32> to vector<64x32xf32>
    %292 = arith.addf %289, %291 : vector<64x32xf32>
    %293 = arith.addf %292, %180 : vector<64x32xf32>
    %c0_121 = arith.constant 0 : index
    %c0_122 = arith.constant 0 : index
    %294 = vector.load %arg23[%c0_121, %c0_122] : memref<1x32xf32, #tpu.memory_space<vmem>>, vector<1x32xf32>
    %c0_123 = arith.constant 0 : index
    %c0_124 = arith.constant 0 : index
    %295 = vector.load %arg24[%c0_123, %c0_124] : memref<1x32xf32, #tpu.memory_space<vmem>>, vector<1x32xf32>
    %cst_125 = arith.constant dense<0.000000e+00> : vector<64xf32>
    %296 = vector.multi_reduction <add>, %293, %cst_125 [1] : vector<64x32xf32> to vector<64xf32>
    %297 = vector.shape_cast %296 : vector<64xf32> to vector<64x1xf32>
    %cst_126 = arith.constant 3.200000e+01 : f32
    %298 = vector.broadcast %cst_126 : f32 to vector<64x1xf32>
    %299 = arith.divf %297, %298 : vector<64x1xf32>
    %300 = vector.broadcast %299 : vector<64x1xf32> to vector<64x32xf32>
    %301 = arith.subf %293, %300 : vector<64x32xf32>
    %302 = arith.mulf %301, %301 : vector<64x32xf32>
    %cst_127 = arith.constant dense<0.000000e+00> : vector<64xf32>
    %303 = vector.multi_reduction <add>, %302, %cst_127 [1] : vector<64x32xf32> to vector<64xf32>
    %304 = vector.shape_cast %303 : vector<64xf32> to vector<64x1xf32>
    %cst_128 = arith.constant 3.200000e+01 : f32
    %305 = vector.broadcast %cst_128 : f32 to vector<64x1xf32>
    %306 = arith.divf %304, %305 : vector<64x1xf32>
    %cst_129 = arith.constant 9.99999974E-6 : f32
    %307 = vector.broadcast %cst_129 : f32 to vector<64x1xf32>
    %308 = arith.addf %306, %307 : vector<64x1xf32>
    %309 = math.rsqrt %308 : vector<64x1xf32>
    %310 = vector.broadcast %309 : vector<64x1xf32> to vector<64x32xf32>
    %311 = arith.mulf %301, %310 : vector<64x32xf32>
    %312 = vector.broadcast %294 : vector<1x32xf32> to vector<64x32xf32>
    %313 = arith.mulf %311, %312 : vector<64x32xf32>
    %314 = vector.broadcast %295 : vector<1x32xf32> to vector<64x32xf32>
    %315 = arith.addf %313, %314 : vector<64x32xf32>
    %c0_130 = arith.constant 0 : index
    %c0_131 = arith.constant 0 : index
    %316 = vector.load %arg25[%c0_130, %c0_131] : memref<32x128xbf16, #tpu.memory_space<vmem>>, vector<32x128xbf16>
    %317 = arith.truncf %315 : vector<64x32xf32> to vector<64x32xbf16>
    %cst_132 = arith.constant dense<0.000000e+00> : vector<64x128xf32>
    %318 = tpu.matmul %317, %316, %cst_132 {dimension_numbers = #tpu.dot_dimension_numbers<[1], [0], [0], [1], [0, 0, 1, 1], [], []>} : vector<64x32xbf16>, vector<32x128xbf16>, vector<64x128xf32> -> vector<64x128xf32>
    %c0_133 = arith.constant 0 : index
    %c0_134 = arith.constant 0 : index
    %319 = vector.load %arg26[%c0_133, %c0_134] : memref<1x128xf32, #tpu.memory_space<vmem>>, vector<1x128xf32>
    %320 = vector.broadcast %319 : vector<1x128xf32> to vector<64x128xf32>
    %321 = arith.addf %318, %320 : vector<64x128xf32>
    %cst_135 = arith.constant 5.000000e-01 : f32
    %322 = vector.broadcast %cst_135 : f32 to vector<64x128xf32>
    %323 = arith.mulf %322, %321 : vector<64x128xf32>
    %cst_136 = arith.constant 0.707106769 : f32
    %324 = vector.broadcast %cst_136 : f32 to vector<64x128xf32>
    %325 = arith.mulf %321, %324 : vector<64x128xf32>
    %326 = math.erf %325 : vector<64x128xf32>
    %cst_137 = arith.constant 1.000000e+00 : f32
    %327 = vector.broadcast %cst_137 : f32 to vector<64x128xf32>
    %328 = arith.addf %327, %326 : vector<64x128xf32>
    %329 = arith.mulf %323, %328 : vector<64x128xf32>
    %c0_138 = arith.constant 0 : index
    %c0_139 = arith.constant 0 : index
    %330 = vector.load %arg27[%c0_138, %c0_139] : memref<128x32xbf16, #tpu.memory_space<vmem>>, vector<128x32xbf16>
    %331 = arith.truncf %329 : vector<64x128xf32> to vector<64x128xbf16>
    %cst_140 = arith.constant dense<0.000000e+00> : vector<64x32xf32>
    %332 = tpu.matmul %331, %330, %cst_140 {dimension_numbers = #tpu.dot_dimension_numbers<[1], [0], [0], [1], [0, 0, 1, 1], [], []>} : vector<64x128xbf16>, vector<128x32xbf16>, vector<64x32xf32> -> vector<64x32xf32>
    %c0_141 = arith.constant 0 : index
    %c0_142 = arith.constant 0 : index
    %333 = vector.load %arg28[%c0_141, %c0_142] : memref<1x32xf32, #tpu.memory_space<vmem>>, vector<1x32xf32>
    %334 = vector.broadcast %333 : vector<1x32xf32> to vector<64x32xf32>
    %335 = arith.addf %332, %334 : vector<64x32xf32>
    %336 = arith.addf %335, %293 : vector<64x32xf32>
    %c0_143 = arith.constant 0 : index
    %c0_144 = arith.constant 0 : index
    %337 = vector.load %arg29[%c0_143, %c0_144] : memref<1x32xf32, #tpu.memory_space<vmem>>, vector<1x32xf32>
    %c0_145 = arith.constant 0 : index
    %c0_146 = arith.constant 0 : index
    %338 = vector.load %arg30[%c0_145, %c0_146] : memref<1x32xf32, #tpu.memory_space<vmem>>, vector<1x32xf32>
    %cst_147 = arith.constant dense<0.000000e+00> : vector<64xf32>
    %339 = vector.multi_reduction <add>, %336, %cst_147 [1] : vector<64x32xf32> to vector<64xf32>
    %340 = vector.shape_cast %339 : vector<64xf32> to vector<64x1xf32>
    %cst_148 = arith.constant 3.200000e+01 : f32
    %341 = vector.broadcast %cst_148 : f32 to vector<64x1xf32>
    %342 = arith.divf %340, %341 : vector<64x1xf32>
    %343 = vector.broadcast %342 : vector<64x1xf32> to vector<64x32xf32>
    %344 = arith.subf %336, %343 : vector<64x32xf32>
    %345 = arith.mulf %344, %344 : vector<64x32xf32>
    %cst_149 = arith.constant dense<0.000000e+00> : vector<64xf32>
    %346 = vector.multi_reduction <add>, %345, %cst_149 [1] : vector<64x32xf32> to vector<64xf32>
    %347 = vector.shape_cast %346 : vector<64xf32> to vector<64x1xf32>
    %cst_150 = arith.constant 3.200000e+01 : f32
    %348 = vector.broadcast %cst_150 : f32 to vector<64x1xf32>
    %349 = arith.divf %347, %348 : vector<64x1xf32>
    %cst_151 = arith.constant 9.99999974E-6 : f32
    %350 = vector.broadcast %cst_151 : f32 to vector<64x1xf32>
    %351 = arith.addf %349, %350 : vector<64x1xf32>
    %352 = math.rsqrt %351 : vector<64x1xf32>
    %353 = vector.broadcast %352 : vector<64x1xf32> to vector<64x32xf32>
    %354 = arith.mulf %344, %353 : vector<64x32xf32>
    %355 = vector.broadcast %337 : vector<1x32xf32> to vector<64x32xf32>
    %356 = arith.mulf %354, %355 : vector<64x32xf32>
    %357 = vector.broadcast %338 : vector<1x32xf32> to vector<64x32xf32>
    %358 = arith.addf %356, %357 : vector<64x32xf32>
    %c0_152 = arith.constant 0 : index
    %c0_153 = arith.constant 0 : index
    %359 = vector.load %arg31[%c0_152, %c0_153] : memref<32x128xbf16, #tpu.memory_space<vmem>>, vector<32x128xbf16>
    %360 = arith.truncf %358 : vector<64x32xf32> to vector<64x32xbf16>
    %cst_154 = arith.constant dense<0.000000e+00> : vector<64x128xf32>
    %361 = tpu.matmul %360, %359, %cst_154 {dimension_numbers = #tpu.dot_dimension_numbers<[1], [0], [0], [1], [0, 0, 1, 1], [], []>} : vector<64x32xbf16>, vector<32x128xbf16>, vector<64x128xf32> -> vector<64x128xf32>
    %c0_155 = arith.constant 0 : index
    %c0_156 = arith.constant 0 : index
    %362 = vector.load %arg32[%c0_155, %c0_156] : memref<1x128xf32, #tpu.memory_space<vmem>>, vector<1x128xf32>
    %363 = vector.broadcast %362 : vector<1x128xf32> to vector<64x128xf32>
    %364 = arith.addf %361, %363 : vector<64x128xf32>
    %c0_157 = arith.constant 0 : index
    %c0_158 = arith.constant 0 : index
    %c0_159 = arith.constant 0 : index
    %365 = vector.load %arg33[%c0_157, %c0_158, %c0_159] : memref<1x64x128xf32, #tpu.memory_space<vmem>>, vector<1x64x128xf32>
    %366 = vector.shape_cast %365 : vector<1x64x128xf32> to vector<64x128xf32>
    %367 = vector.shape_cast %364 : vector<64x128xf32> to vector<1x64x128xf32>
    tpu.vector_store %arg33[%c0_157, %c0_158, %c0_159], %367 {strides = array<i32>} : memref<1x64x128xf32, #tpu.memory_space<vmem>>, vector<1x64x128xf32>,
    return
  }
  func.func @transform_0(%arg0: i32) -> (i32, i32, i32) {
    %c0_i32 = arith.constant 0 : i32
    %c0_i32_0 = arith.constant 0 : i32
    %c0_i32_1 = arith.constant 0 : i32
    return %arg0, %c0_i32, %c0_i32_0 : i32, i32, i32
  }
  func.func @transform_1(%arg0: i32) -> (i32, i32) {
    %c0_i32 = arith.constant 0 : i32
    %c0_i32_0 = arith.constant 0 : i32
    %c0_i32_1 = arith.constant 0 : i32
    return %c0_i32, %c0_i32_0 : i32, i32
  }
  func.func @transform_2(%arg0: i32) -> (i32, i32) {
    %c0_i32 = arith.constant 0 : i32
    %c0_i32_0 = arith.constant 0 : i32
    %c0_i32_1 = arith.constant 0 : i32
    return %c0_i32, %c0_i32_0 : i32, i32
  }
  func.func @transform_3(%arg0: i32) -> (i32, i32) {
    %c0_i32 = arith.constant 0 : i32
    %c0_i32_0 = arith.constant 0 : i32
    %c0_i32_1 = arith.constant 0 : i32
    return %c0_i32, %c0_i32_0 : i32, i32
  }
  func.func @transform_4(%arg0: i32) -> (i32, i32) {
    %c0_i32 = arith.constant 0 : i32
    %c0_i32_0 = arith.constant 0 : i32
    %c0_i32_1 = arith.constant 0 : i32
    return %c0_i32, %c0_i32_0 : i32, i32
  }
  func.func @transform_5(%arg0: i32) -> (i32, i32) {
    %c0_i32 = arith.constant 0 : i32
    %c0_i32_0 = arith.constant 0 : i32
    %c0_i32_1 = arith.constant 0 : i32
    return %c0_i32, %c0_i32_0 : i32, i32
  }
  func.func @transform_6(%arg0: i32) -> (i32, i32) {
    %c0_i32 = arith.constant 0 : i32
    %c0_i32_0 = arith.constant 0 : i32
    %c0_i32_1 = arith.constant 0 : i32
    return %c0_i32, %c0_i32_0 : i32, i32
  }
  func.func @transform_7(%arg0: i32) -> (i32, i32) {
    %c0_i32 = arith.constant 0 : i32
    %c0_i32_0 = arith.constant 0 : i32
    %c0_i32_1 = arith.constant 0 : i32
    return %c0_i32, %c0_i32_0 : i32, i32
  }
  func.func @transform_8(%arg0: i32) -> (i32, i32) {
    %c0_i32 = arith.constant 0 : i32
    %c0_i32_0 = arith.constant 0 : i32
    %c0_i32_1 = arith.constant 0 : i32
    return %c0_i32, %c0_i32_0 : i32, i32
  }
  func.func @transform_9(%arg0: i32) -> (i32, i32) {
    %c0_i32 = arith.constant 0 : i32
    %c0_i32_0 = arith.constant 0 : i32
    %c0_i32_1 = arith.constant 0 : i32
    return %c0_i32, %c0_i32_0 : i32, i32
  }
  func.func @transform_10(%arg0: i32) -> (i32, i32) {
    %c0_i32 = arith.constant 0 : i32
    %c0_i32_0 = arith.constant 0 : i32
    %c0_i32_1 = arith.constant 0 : i32
    return %c0_i32, %c0_i32_0 : i32, i32
  }
  func.func @transform_11(%arg0: i32) -> (i32, i32) {
    %c0_i32 = arith.constant 0 : i32
    %c0_i32_0 = arith.constant 0 : i32
    %c0_i32_1 = arith.constant 0 : i32
    return %c0_i32, %c0_i32_0 : i32, i32
  }
  func.func @transform_12(%arg0: i32) -> (i32, i32) {
    %c0_i32 = arith.constant 0 : i32
    %c0_i32_0 = arith.constant 0 : i32
    %c0_i32_1 = arith.constant 0 : i32
    return %c0_i32, %c0_i32_0 : i32, i32
  }
  func.func @transform_13(%arg0: i32) -> (i32, i32) {
    %c0_i32 = arith.constant 0 : i32
    %c0_i32_0 = arith.constant 0 : i32
    %c0_i32_1 = arith.constant 0 : i32
    return %c0_i32, %c0_i32_0 : i32, i32
  }
  func.func @transform_14(%arg0: i32) -> (i32, i32) {
    %c0_i32 = arith.constant 0 : i32
    %c0_i32_0 = arith.constant 0 : i32
    %c0_i32_1 = arith.constant 0 : i32
    return %c0_i32, %c0_i32_0 : i32, i32
  }
  func.func @transform_15(%arg0: i32) -> (i32, i32) {
    %c0_i32 = arith.constant 0 : i32
    %c0_i32_0 = arith.constant 0 : i32
    %c0_i32_1 = arith.constant 0 : i32
    return %c0_i32, %c0_i32_0 : i32, i32
  }
  func.func @transform_16(%arg0: i32) -> (i32, i32) {
    %c0_i32 = arith.constant 0 : i32
    %c0_i32_0 = arith.constant 0 : i32
    %c0_i32_1 = arith.constant 0 : i32
    return %c0_i32, %c0_i32_0 : i32, i32
  }
  func.func @transform_17(%arg0: i32) -> (i32, i32) {
    %c0_i32 = arith.constant 0 : i32
    %c0_i32_0 = arith.constant 0 : i32
    %c0_i32_1 = arith.constant 0 : i32
    return %c0_i32, %c0_i32_0 : i32, i32
  }
  func.func @transform_18(%arg0: i32) -> (i32, i32) {
    %c0_i32 = arith.constant 0 : i32
    %c0_i32_0 = arith.constant 0 : i32
    %c0_i32_1 = arith.constant 0 : i32
    return %c0_i32, %c0_i32_0 : i32, i32
  }
  func.func @transform_19(%arg0: i32) -> (i32, i32) {
    %c0_i32 = arith.constant 0 : i32
    %c0_i32_0 = arith.constant 0 : i32
    %c0_i32_1 = arith.constant 0 : i32
    return %c0_i32, %c0_i32_0 : i32, i32
  }
  func.func @transform_20(%arg0: i32) -> (i32, i32) {
    %c0_i32 = arith.constant 0 : i32
    %c0_i32_0 = arith.constant 0 : i32
    %c0_i32_1 = arith.constant 0 : i32
    return %c0_i32, %c0_i32_0 : i32, i32
  }
  func.func @transform_21(%arg0: i32) -> (i32, i32) {
    %c0_i32 = arith.constant 0 : i32
    %c0_i32_0 = arith.constant 0 : i32
    %c0_i32_1 = arith.constant 0 : i32
    return %c0_i32, %c0_i32_0 : i32, i32
  }
  func.func @transform_22(%arg0: i32) -> (i32, i32) {
    %c0_i32 = arith.constant 0 : i32
    %c0_i32_0 = arith.constant 0 : i32
    %c0_i32_1 = arith.constant 0 : i32
    return %c0_i32, %c0_i32_0 : i32, i32
  }
  func.func @transform_23(%arg0: i32) -> (i32, i32) {
    %c0_i32 = arith.constant 0 : i32
    %c0_i32_0 = arith.constant 0 : i32
    %c0_i32_1 = arith.constant 0 : i32
    return %c0_i32, %c0_i32_0 : i32, i32
  }
  func.func @transform_24(%arg0: i32) -> (i32, i32) {
    %c0_i32 = arith.constant 0 : i32
    %c0_i32_0 = arith.constant 0 : i32
    %c0_i32_1 = arith.constant 0 : i32
    return %c0_i32, %c0_i32_0 : i32, i32
  }
  func.func @transform_25(%arg0: i32) -> (i32, i32) {
    %c0_i32 = arith.constant 0 : i32
    %c0_i32_0 = arith.constant 0 : i32
    %c0_i32_1 = arith.constant 0 : i32
    return %c0_i32, %c0_i32_0 : i32, i32
  }
  func.func @transform_26(%arg0: i32) -> (i32, i32) {
    %c0_i32 = arith.constant 0 : i32
    %c0_i32_0 = arith.constant 0 : i32
    %c0_i32_1 = arith.constant 0 : i32
    return %c0_i32, %c0_i32_0 : i32, i32
  }
  func.func @transform_27(%arg0: i32) -> (i32, i32) {
    %c0_i32 = arith.constant 0 : i32
    %c0_i32_0 = arith.constant 0 : i32
    %c0_i32_1 = arith.constant 0 : i32
    return %c0_i32, %c0_i32_0 : i32, i32
  }
  func.func @transform_28(%arg0: i32) -> (i32, i32) {
    %c0_i32 = arith.constant 0 : i32
    %c0_i32_0 = arith.constant 0 : i32
    %c0_i32_1 = arith.constant 0 : i32
    return %c0_i32, %c0_i32_0 : i32, i32
  }
  func.func @transform_29(%arg0: i32) -> (i32, i32) {
    %c0_i32 = arith.constant 0 : i32
    %c0_i32_0 = arith.constant 0 : i32
    %c0_i32_1 = arith.constant 0 : i32
    return %c0_i32, %c0_i32_0 : i32, i32
  }
  func.func @transform_30(%arg0: i32) -> (i32, i32) {
    %c0_i32 = arith.constant 0 : i32
    %c0_i32_0 = arith.constant 0 : i32
    %c0_i32_1 = arith.constant 0 : i32
    return %c0_i32, %c0_i32_0 : i32, i32
  }
  func.func @transform_31(%arg0: i32) -> (i32, i32) {
    %c0_i32 = arith.constant 0 : i32
    %c0_i32_0 = arith.constant 0 : i32
    %c0_i32_1 = arith.constant 0 : i32
    return %c0_i32, %c0_i32_0 : i32, i32
  }
  func.func @transform_32(%arg0: i32) -> (i32, i32, i32) {
    %c0_i32 = arith.constant 0 : i32
    %c0_i32_0 = arith.constant 0 : i32
    %c0_i32_1 = arith.constant 0 : i32
    return %arg0, %c0_i32, %c0_i32_0 : i32, i32, i32
  }
}

</mosaic_0001>

<llo_original>
// kernel: tpu_custom_call.1
$region0: #{tpu_custom_call.1}
  #allocation0 [shape = 'u32[]', space=smem, size = 0x4, offset = 0x4, fixed_abs, tag = 'smem constant byte address 0x4 - core index']
  #allocation1 [shape = 'u32[144,128]{1,0:T(1,128)}', space=vmem, size = 0x12000, scoped, tag = 'internal scratch']
  #allocation2 [shape = 'f32[64,32]{1,0:T(8,128)}', space=vmem, size = 0x8000, scoped, tag = 'scratch operand']
  %s0 = inlined_call_operand.smem [shape: u32[33], index: -1, kind: input, shape index: {}]
  %s1 = sld [smem:[%s0]]
  %s2 = scalar_lea.smem %s0, 1
  %s3 = sld [smem:[%s2]]
  %s4 = scalar_lea.smem %s0, 2
  %s5 = sld [smem:[%s4]]
  %s6 = scalar_lea.smem %s0, 3
  %s7 = sld [smem:[%s6]]
  %s8 = scalar_lea.smem %s0, 4
  %s9 = sld [smem:[%s8]]
  %s10 = scalar_lea.smem %s0, 5
  %s11 = sld [smem:[%s10]]
  %s12 = scalar_lea.smem %s0, 6
  %s13 = sld [smem:[%s12]]
  %s14 = scalar_lea.smem %s0, 7
  %s15 = sld [smem:[%s14]]
  %s16 = scalar_lea.smem %s0, 8
  %s17 = sld [smem:[%s16]]
  %s18 = scalar_lea.smem %s0, 9
  %s19 = sld [smem:[%s18]]
  %s20 = scalar_lea.smem %s0, 10
  %s21 = sld [smem:[%s20]]
  %s22 = scalar_lea.smem %s0, 11
  %s23 = sld [smem:[%s22]]
  %s24 = scalar_lea.smem %s0, 12
  %s25 = sld [smem:[%s24]]
  %s26 = scalar_lea.smem %s0, 13
  %s27 = sld [smem:[%s26]]
  %s28 = scalar_lea.smem %s0, 14
  %s29 = sld [smem:[%s28]]
  %s30 = scalar_lea.smem %s0, 15
  %s31 = sld [smem:[%s30]]
  %s32 = scalar_lea.smem %s0, 16
  %s33 = sld [smem:[%s32]]
  %s34 = scalar_lea.smem %s0, 17
  %s35 = sld [smem:[%s34]]
  %s36 = scalar_lea.smem %s0, 18
  %s37 = sld [smem:[%s36]]
  %s38 = scalar_lea.smem %s0, 19
  %s39 = sld [smem:[%s38]]
  %s40 = scalar_lea.smem %s0, 20
  %s41 = sld [smem:[%s40]]
  %s42 = scalar_lea.smem %s0, 21
  %s43 = sld [smem:[%s42]]
  %s44 = scalar_lea.smem %s0, 22
  %s45 = sld [smem:[%s44]]
  %s46 = scalar_lea.smem %s0, 23
  %s47 = sld [smem:[%s46]]
  %s48 = scalar_lea.smem %s0, 24
  %s49 = sld [smem:[%s48]]
  %s50 = scalar_lea.smem %s0, 25
  %s51 = sld [smem:[%s50]]
  %s52 = scalar_lea.smem %s0, 26
  %s53 = sld [smem:[%s52]]
  %s54 = scalar_lea.smem %s0, 27
  %s55 = sld [smem:[%s54]]
  %s56 = scalar_lea.smem %s0, 28
  %s57 = sld [smem:[%s56]]
  %s58 = scalar_lea.smem %s0, 29
  %s59 = sld [smem:[%s58]]
  %s60 = scalar_lea.smem %s0, 30
  %s61 = sld [smem:[%s60]]
  %s62 = scalar_lea.smem %s0, 31
  %s63 = sld [smem:[%s62]]
  %s64 = scalar_lea.smem %s0, 32
  %s65 = sld [smem:[%s64]]
  %s66 = sld [smem:[#allocation0]]
  $region161: #{tpu_custom_call.1} parent=0
    _
  %s68 = ssub.s32 1, %s66
  %s69 = scalar_select 0, %s68, %s66
  $region1: #{tpu_custom_call.1} parent=0
    #allocation3 [shape = 'u8[65536]{0}', space=vmem, size = 0x10000, scoped, tag = 'output window, operand 0']
    #allocation4 [shape = 's32[2]{0}', space=sflag, size = 0x8, scoped, tag = 'scoped memory for tpu_custom_call.1']
    %70 = vsyncpa [#allocation4], 0
    %s71 = scalar_lea.sflag [#allocation4], 1
    %72 = vsyncpa %s71, 0
    loop: start=0, step=1, limit=4
    $region2: #{tpu_custom_call.1} parent=1 // loop_pre_header
      _
    $region3: #{tpu_custom_call.1} parent=1 // loop_header
      %s74 = sphi 0, %s78
      %p75 = scmp.ge.s32.totalorder %s74, 4
      %s84 = sphi 0, %s86
      %s87 = sphi 0, %s84
      %s88 = sphi 0, %s87
      %s104 = sphi 0, %s88
      %s108 = sphi 0, %s108
      %s110 = sphi 0, %s108
      %s111 = sphi 0, %s110
      %s125 = sphi 0, %s111
      %s129 = sphi 0, %s129
      %s131 = sphi 0, %s129
      %s132 = sphi 0, %s131
      %s146 = sphi 0, %s132
      %s150 = sphi 0, %s150
      %s152 = sphi 0, %s150
      %s153 = sphi 0, %s152
      %s167 = sphi 0, %s153
      %s171 = sphi 0, %s171
      %s173 = sphi 0, %s171
      %s174 = sphi 0, %s173
      %s188 = sphi 0, %s174
      %s192 = sphi 0, %s192
      %s194 = sphi 0, %s192
      %s195 = sphi 0, %s194
      %s209 = sphi 0, %s195
      %s213 = sphi 0, %s213
      %s215 = sphi 0, %s213
      %s216 = sphi 0, %s215
      %s230 = sphi 0, %s216
      %s234 = sphi 0, %s234
      %s236 = sphi 0, %s234
      %s237 = sphi 0, %s236
      %s251 = sphi 0, %s237
      %s255 = sphi 0, %s255
      %s257 = sphi 0, %s255
      %s258 = sphi 0, %s257
      %s272 = sphi 0, %s258
      %s276 = sphi 0, %s276
      %s278 = sphi 0, %s276
      %s279 = sphi 0, %s278
      %s293 = sphi 0, %s279
      %s297 = sphi 0, %s297
      %s299 = sphi 0, %s297
      %s300 = sphi 0, %s299
      %s314 = sphi 0, %s300
      %s318 = sphi 0, %s318
      %s320 = sphi 0, %s318
      %s321 = sphi 0, %s320
      %s335 = sphi 0, %s321
      %s339 = sphi 0, %s339
      %s341 = sphi 0, %s339
      %s342 = sphi 0, %s341
      %s356 = sphi 0, %s342
      %s360 = sphi 0, %s360
      %s362 = sphi 0, %s360
      %s363 = sphi 0, %s362
      %s377 = sphi 0, %s363
      %s381 = sphi 0, %s381
      %s383 = sphi 0, %s381
      %s384 = sphi 0, %s383
      %s398 = sphi 0, %s384
      %s402 = sphi 0, %s402
      %s404 = sphi 0, %s402
      %s405 = sphi 0, %s404
      %s419 = sphi 0, %s405
      %s423 = sphi 0, %s423
      %s425 = sphi 0, %s423
      %s426 = sphi 0, %s425
      %s440 = sphi 0, %s426
      %s444 = sphi 0, %s444
      %s446 = sphi 0, %s444
      %s447 = sphi 0, %s446
      %s461 = sphi 0, %s447
      %s465 = sphi 0, %s465
      %s467 = sphi 0, %s465
      %s468 = sphi 0, %s467
      %s482 = sphi 0, %s468
      %s486 = sphi 0, %s486
      %s488 = sphi 0, %s486
      %s489 = sphi 0, %s488
      %s503 = sphi 0, %s489
      %s507 = sphi 0, %s507
      %s509 = sphi 0, %s507
      %s510 = sphi 0, %s509
      %s524 = sphi 0, %s510
      %s528 = sphi 0, %s528
      %s530 = sphi 0, %s528
      %s531 = sphi 0, %s530
      %s545 = sphi 0, %s531
      %s549 = sphi 0, %s549
      %s551 = sphi 0, %s549
      %s552 = sphi 0, %s551
      %s566 = sphi 0, %s552
      %s570 = sphi 0, %s570
      %s572 = sphi 0, %s570
      %s573 = sphi 0, %s572
      %s587 = sphi 0, %s573
      %s591 = sphi 0, %s591
      %s593 = sphi 0, %s591
      %s594 = sphi 0, %s593
      %s608 = sphi 0, %s594
      %s612 = sphi 0, %s612
      %s614 = sphi 0, %s612
      %s615 = sphi 0, %s614
      %s629 = sphi 0, %s615
      %s633 = sphi 0, %s633
      %s635 = sphi 0, %s633
      %s636 = sphi 0, %s635
      %s650 = sphi 0, %s636
      %s654 = sphi 0, %s654
      %s656 = sphi 0, %s654
      %s657 = sphi 0, %s656
      %s671 = sphi 0, %s657
      %s675 = sphi 0, %s675
      %s677 = sphi 0, %s675
      %s678 = sphi 0, %s677
      %s692 = sphi 0, %s678
      %s696 = sphi 0, %s696
      %s698 = sphi 0, %s696
      %s699 = sphi 0, %s698
      %s713 = sphi 0, %s699
      %s717 = sphi 0, %s717
      %s719 = sphi 0, %s717
      %s720 = sphi 0, %s719
      %s734 = sphi 0, %s720
      %s738 = sphi 0, %s738
      %s740 = sphi 0, %s738
      %s741 = sphi 0, %s740
      %s755 = sphi 0, %s741
      %s761 = sphi 0, %s763
      %s764 = sphi 0, %s761
      %s765 = sphi 0, %s764
      %s781 = sphi 0, %s765
    $region4: #{tpu_custom_call.1} parent=1 // loop_header_branch
      %77 = sbr.rel (%p75) target = $region8
    $region5: #{tpu_custom_call.1} parent=1 // loop_body
      %s79 = ssub.s32 %s74, 1
      %s80 = ssub.s32 %s74, 2
      %s81 = sadd.s32 %s74, 1
      %s82 = ssub.s32 %s74, %s81
      %p83 = scmp.eq.s32.totalorder %s82, 0
      %s85 = sadd.s32 %s84, 1
      %s86 = scalar_select %p83, %s84, %s85
      %p89 = pneg %p83
      %p90 = scmp.eq.s32.totalorder %s74, 1
      %p91 = por %p89, %p90
      %p92 = scmp.ne.s32.totalorder %s84, %s87
      %p93 = scmp.eq.s32.totalorder %s74, 0
      %p94 = por %p92, %p93
      %p95 = scmp.ne.s32.totalorder %s84, %s87
      %p96 = scmp.eq.s32.totalorder %s79, 1
      %p97 = por %p95, %p96
      %p98 = scmp.ne.s32.totalorder %s87, %s88
      %p99 = scmp.eq.s32.totalorder %s79, 0
      %p100 = por %p98, %p99
      %p101 = scmp.ne.s32.totalorder %s87, %s88
      %p102 = scmp.eq.s32.totalorder %s80, 1
      %p103 = por %p101, %p102
      %p105 = scmp.ne.s32.totalorder %s88, %s104
      %p106 = scmp.eq.s32.totalorder %s80, 0
      %p107 = por %p105, %p106
      %s109 = sadd.s32 %s108, 1
      %p112 = scmp.eq.s32.totalorder %s74, 1
      %p113 = scmp.ne.s32.totalorder %s108, %s110
      %p114 = scmp.eq.s32.totalorder %s74, 0
      %p115 = por %p113, %p114
      %p116 = scmp.ne.s32.totalorder %s108, %s110
      %p117 = scmp.eq.s32.totalorder %s79, 1
      %p118 = por %p116, %p117
      %p119 = scmp.ne.s32.totalorder %s110, %s111
      %p120 = scmp.eq.s32.totalorder %s79, 0
      %p121 = por %p119, %p120
      %p122 = scmp.ne.s32.totalorder %s110, %s111
      %p123 = scmp.eq.s32.totalorder %s80, 1
      %p124 = por %p122, %p123
      %p126 = scmp.ne.s32.totalorder %s111, %s125
      %p127 = scmp.eq.s32.totalorder %s80, 0
      %p128 = por %p126, %p127
      %s130 = sadd.s32 %s129, 1
      %p133 = scmp.eq.s32.totalorder %s74, 1
      %p134 = scmp.ne.s32.totalorder %s129, %s131
      %p135 = scmp.eq.s32.totalorder %s74, 0
      %p136 = por %p134, %p135
      %p137 = scmp.ne.s32.totalorder %s129, %s131
      %p138 = scmp.eq.s32.totalorder %s79, 1
      %p139 = por %p137, %p138
      %p140 = scmp.ne.s32.totalorder %s131, %s132
      %p141 = scmp.eq.s32.totalorder %s79, 0
      %p142 = por %p140, %p141
      %p143 = scmp.ne.s32.totalorder %s131, %s132
      %p144 = scmp.eq.s32.totalorder %s80, 1
      %p145 = por %p143, %p144
      %p147 = scmp.ne.s32.totalorder %s132, %s146
      %p148 = scmp.eq.s32.totalorder %s80, 0
      %p149 = por %p147, %p148
      %s151 = sadd.s32 %s150, 1
      %p154 = scmp.eq.s32.totalorder %s74, 1
      %p155 = scmp.ne.s32.totalorder %s150, %s152
      %p156 = scmp.eq.s32.totalorder %s74, 0
      %p157 = por %p155, %p156
      %p158 = scmp.ne.s32.totalorder %s150, %s152
      %p159 = scmp.eq.s32.totalorder %s79, 1
      %p160 = por %p158, %p159
      %p161 = scmp.ne.s32.totalorder %s152, %s153
      %p162 = scmp.eq.s32.totalorder %s79, 0
      %p163 = por %p161, %p162
      %p164 = scmp.ne.s32.totalorder %s152, %s153
      %p165 = scmp.eq.s32.totalorder %s80, 1
      %p166 = por %p164, %p165
      %p168 = scmp.ne.s32.totalorder %s153, %s167
      %p169 = scmp.eq.s32.totalorder %s80, 0
      %p170 = por %p168, %p169
      %s172 = sadd.s32 %s171, 1
      %p175 = scmp.eq.s32.totalorder %s74, 1
      %p176 = scmp.ne.s32.totalorder %s171, %s173
      %p177 = scmp.eq.s32.totalorder %s74, 0
      %p178 = por %p176, %p177
      %p179 = scmp.ne.s32.totalorder %s171, %s173
      %p180 = scmp.eq.s32.totalorder %s79, 1
      %p181 = por %p179, %p180
      %p182 = scmp.ne.s32.totalorder %s173, %s174
      %p183 = scmp.eq.s32.totalorder %s79, 0
      %p184 = por %p182, %p183
      %p185 = scmp.ne.s32.totalorder %s173, %s174
      %p186 = scmp.eq.s32.totalorder %s80, 1
      %p187 = por %p185, %p186
      %p189 = scmp.ne.s32.totalorder %s174, %s188
      %p190 = scmp.eq.s32.totalorder %s80, 0
      %p191 = por %p189, %p190
      %s193 = sadd.s32 %s192, 1
      %p196 = scmp.eq.s32.totalorder %s74, 1
      %p197 = scmp.ne.s32.totalorder %s192, %s194
      %p198 = scmp.eq.s32.totalorder %s74, 0
      %p199 = por %p197, %p198
      %p200 = scmp.ne.s32.totalorder %s192, %s194
      %p201 = scmp.eq.s32.totalorder %s79, 1
      %p202 = por %p200, %p201
      %p203 = scmp.ne.s32.totalorder %s194, %s195
      %p204 = scmp.eq.s32.totalorder %s79, 0
      %p205 = por %p203, %p204
      %p206 = scmp.ne.s32.totalorder %s194, %s195
      %p207 = scmp.eq.s32.totalorder %s80, 1
      %p208 = por %p206, %p207
      %p210 = scmp.ne.s32.totalorder %s195, %s209
      %p211 = scmp.eq.s32.totalorder %s80, 0
      %p212 = por %p210, %p211
      %s214 = sadd.s32 %s213, 1
      %p217 = scmp.eq.s32.totalorder %s74, 1
      %p218 = scmp.ne.s32.totalorder %s213, %s215
      %p219 = scmp.eq.s32.totalorder %s74, 0
      %p220 = por %p218, %p219
      %p221 = scmp.ne.s32.totalorder %s213, %s215
      %p222 = scmp.eq.s32.totalorder %s79, 1
      %p223 = por %p221, %p222
      %p224 = scmp.ne.s32.totalorder %s215, %s216
      %p225 = scmp.eq.s32.totalorder %s79, 0
      %p226 = por %p224, %p225
      %p227 = scmp.ne.s32.totalorder %s215, %s216
      %p228 = scmp.eq.s32.totalorder %s80, 1
      %p229 = por %p227, %p228
      %p231 = scmp.ne.s32.totalorder %s216, %s230
      %p232 = scmp.eq.s32.totalorder %s80, 0
      %p233 = por %p231, %p232
      %s235 = sadd.s32 %s234, 1
      %p238 = scmp.eq.s32.totalorder %s74, 1
      %p239 = scmp.ne.s32.totalorder %s234, %s236
      %p240 = scmp.eq.s32.totalorder %s74, 0
      %p241 = por %p239, %p240
      %p242 = scmp.ne.s32.totalorder %s234, %s236
      %p243 = scmp.eq.s32.totalorder %s79, 1
      %p244 = por %p242, %p243
      %p245 = scmp.ne.s32.totalorder %s236, %s237
      %p246 = scmp.eq.s32.totalorder %s79, 0
      %p247 = por %p245, %p246
      %p248 = scmp.ne.s32.totalorder %s236, %s237
      %p249 = scmp.eq.s32.totalorder %s80, 1
      %p250 = por %p248, %p249
      %p252 = scmp.ne.s32.totalorder %s237, %s251
      %p253 = scmp.eq.s32.totalorder %s80, 0
      %p254 = por %p252, %p253
      %s256 = sadd.s32 %s255, 1
      %p259 = scmp.eq.s32.totalorder %s74, 1
      %p260 = scmp.ne.s32.totalorder %s255, %s257
      %p261 = scmp.eq.s32.totalorder %s74, 0
      %p262 = por %p260, %p261
      %p263 = scmp.ne.s32.totalorder %s255, %s257
      %p264 = scmp.eq.s32.totalorder %s79, 1
      %p265 = por %p263, %p264
      %p266 = scmp.ne.s32.totalorder %s257, %s258
      %p267 = scmp.eq.s32.totalorder %s79, 0
      %p268 = por %p266, %p267
      %p269 = scmp.ne.s32.totalorder %s257, %s258
      %p270 = scmp.eq.s32.totalorder %s80, 1
      %p271 = por %p269, %p270
      %p273 = scmp.ne.s32.totalorder %s258, %s272
      %p274 = scmp.eq.s32.totalorder %s80, 0
      %p275 = por %p273, %p274
      %s277 = sadd.s32 %s276, 1
      %p280 = scmp.eq.s32.totalorder %s74, 1
      %p281 = scmp.ne.s32.totalorder %s276, %s278
      %p282 = scmp.eq.s32.totalorder %s74, 0
      %p283 = por %p281, %p282
      %p284 = scmp.ne.s32.totalorder %s276, %s278
      %p285 = scmp.eq.s32.totalorder %s79, 1
      %p286 = por %p284, %p285
      %p287 = scmp.ne.s32.totalorder %s278, %s279
      %p288 = scmp.eq.s32.totalorder %s79, 0
      %p289 = por %p287, %p288
      %p290 = scmp.ne.s32.totalorder %s278, %s279
      %p291 = scmp.eq.s32.totalorder %s80, 1
      %p292 = por %p290, %p291
      %p294 = scmp.ne.s32.totalorder %s279, %s293
      %p295 = scmp.eq.s32.totalorder %s80, 0
      %p296 = por %p294, %p295
      %s298 = sadd.s32 %s297, 1
      %p301 = scmp.eq.s32.totalorder %s74, 1
      %p302 = scmp.ne.s32.totalorder %s297, %s299
      %p303 = scmp.eq.s32.totalorder %s74, 0
      %p304 = por %p302, %p303
      %p305 = scmp.ne.s32.totalorder %s297, %s299
      %p306 = scmp.eq.s32.totalorder %s79, 1
      %p307 = por %p305, %p306
      %p308 = scmp.ne.s32.totalorder %s299, %s300
      %p309 = scmp.eq.s32.totalorder %s79, 0
      %p310 = por %p308, %p309
      %p311 = scmp.ne.s32.totalorder %s299, %s300
      %p312 = scmp.eq.s32.totalorder %s80, 1
      %p313 = por %p311, %p312
      %p315 = scmp.ne.s32.totalorder %s300, %s314
      %p316 = scmp.eq.s32.totalorder %s80, 0
      %p317 = por %p315, %p316
      %s319 = sadd.s32 %s318, 1
      %p322 = scmp.eq.s32.totalorder %s74, 1
      %p323 = scmp.ne.s32.totalorder %s318, %s320
      %p324 = scmp.eq.s32.totalorder %s74, 0
      %p325 = por %p323, %p324
      %p326 = scmp.ne.s32.totalorder %s318, %s320
      %p327 = scmp.eq.s32.totalorder %s79, 1
      %p328 = por %p326, %p327
      %p329 = scmp.ne.s32.totalorder %s320, %s321
      %p330 = scmp.eq.s32.totalorder %s79, 0
      %p331 = por %p329, %p330
      %p332 = scmp.ne.s32.totalorder %s320, %s321
      %p333 = scmp.eq.s32.totalorder %s80, 1
      %p334 = por %p332, %p333
      %p336 = scmp.ne.s32.totalorder %s321, %s335
      %p337 = scmp.eq.s32.totalorder %s80, 0
      %p338 = por %p336, %p337
      %s340 = sadd.s32 %s339, 1
      %p343 = scmp.eq.s32.totalorder %s74, 1
      %p344 = scmp.ne.s32.totalorder %s339, %s341
      %p345 = scmp.eq.s32.totalorder %s74, 0
      %p346 = por %p344, %p345
      %p347 = scmp.ne.s32.totalorder %s339, %s341
      %p348 = scmp.eq.s32.totalorder %s79, 1
      %p349 = por %p347, %p348
      %p350 = scmp.ne.s32.totalorder %s341, %s342
      %p351 = scmp.eq.s32.totalorder %s79, 0
      %p352 = por %p350, %p351
      %p353 = scmp.ne.s32.totalorder %s341, %s342
      %p354 = scmp.eq.s32.totalorder %s80, 1
      %p355 = por %p353, %p354
      %p357 = scmp.ne.s32.totalorder %s342, %s356
      %p358 = scmp.eq.s32.totalorder %s80, 0
      %p359 = por %p357, %p358
      %s361 = sadd.s32 %s360, 1
      %p364 = scmp.eq.s32.totalorder %s74, 1
      %p365 = scmp.ne.s32.totalorder %s360, %s362
      %p366 = scmp.eq.s32.totalorder %s74, 0
      %p367 = por %p365, %p366
      %p368 = scmp.ne.s32.totalorder %s360, %s362
      %p369 = scmp.eq.s32.totalorder %s79, 1
      %p370 = por %p368, %p369
      %p371 = scmp.ne.s32.totalorder %s362, %s363
      %p372 = scmp.eq.s32.totalorder %s79, 0
      %p373 = por %p371, %p372
      %p374 = scmp.ne.s32.totalorder %s362, %s363
      %p375 = scmp.eq.s32.totalorder %s80, 1
      %p376 = por %p374, %p375
      %p378 = scmp.ne.s32.totalorder %s363, %s377
      %p379 = scmp.eq.s32.totalorder %s80, 0
      %p380 = por %p378, %p379
      %s382 = sadd.s32 %s381, 1
      %p385 = scmp.eq.s32.totalorder %s74, 1
      %p386 = scmp.ne.s32.totalorder %s381, %s383
      %p387 = scmp.eq.s32.totalorder %s74, 0
      %p388 = por %p386, %p387
      %p389 = scmp.ne.s32.totalorder %s381, %s383
      %p390 = scmp.eq.s32.totalorder %s79, 1
      %p391 = por %p389, %p390
      %p392 = scmp.ne.s32.totalorder %s383, %s384
      %p393 = scmp.eq.s32.totalorder %s79, 0
      %p394 = por %p392, %p393
      %p395 = scmp.ne.s32.totalorder %s383, %s384
      %p396 = scmp.eq.s32.totalorder %s80, 1
      %p397 = por %p395, %p396
      %p399 = scmp.ne.s32.totalorder %s384, %s398
      %p400 = scmp.eq.s32.totalorder %s80, 0
      %p401 = por %p399, %p400
      %s403 = sadd.s32 %s402, 1
      %p406 = scmp.eq.s32.totalorder %s74, 1
      %p407 = scmp.ne.s32.totalorder %s402, %s404
      %p408 = scmp.eq.s32.totalorder %s74, 0
      %p409 = por %p407, %p408
      %p410 = scmp.ne.s32.totalorder %s402, %s404
      %p411 = scmp.eq.s32.totalorder %s79, 1
      %p412 = por %p410, %p411
      %p413 = scmp.ne.s32.totalorder %s404, %s405
      %p414 = scmp.eq.s32.totalorder %s79, 0
      %p415 = por %p413, %p414
      %p416 = scmp.ne.s32.totalorder %s404, %s405
      %p417 = scmp.eq.s32.totalorder %s80, 1
      %p418 = por %p416, %p417
      %p420 = scmp.ne.s32.totalorder %s405, %s419
      %p421 = scmp.eq.s32.totalorder %s80, 0
      %p422 = por %p420, %p421
      %s424 = sadd.s32 %s423, 1
      %p427 = scmp.eq.s32.totalorder %s74, 1
      %p428 = scmp.ne.s32.totalorder %s423, %s425
      %p429 = scmp.eq.s32.totalorder %s74, 0
      %p430 = por %p428, %p429
      %p431 = scmp.ne.s32.totalorder %s423, %s425
      %p432 = scmp.eq.s32.totalorder %s79, 1
      %p433 = por %p431, %p432
      %p434 = scmp.ne.s32.totalorder %s425, %s426
      %p435 = scmp.eq.s32.totalorder %s79, 0
      %p436 = por %p434, %p435
      %p437 = scmp.ne.s32.totalorder %s425, %s426
      %p438 = scmp.eq.s32.totalorder %s80, 1
      %p439 = por %p437, %p438
      %p441 = scmp.ne.s32.totalorder %s426, %s440
      %p442 = scmp.eq.s32.totalorder %s80, 0
      %p443 = por %p441, %p442
      %s445 = sadd.s32 %s444, 1
      %p448 = scmp.eq.s32.totalorder %s74, 1
      %p449 = scmp.ne.s32.totalorder %s444, %s446
      %p450 = scmp.eq.s32.totalorder %s74, 0
      %p451 = por %p449, %p450
      %p452 = scmp.ne.s32.totalorder %s444, %s446
      %p453 = scmp.eq.s32.totalorder %s79, 1
      %p454 = por %p452, %p453
      %p455 = scmp.ne.s32.totalorder %s446, %s447
      %p456 = scmp.eq.s32.totalorder %s79, 0
      %p457 = por %p455, %p456
      %p458 = scmp.ne.s32.totalorder %s446, %s447
      %p459 = scmp.eq.s32.totalorder %s80, 1
      %p460 = por %p458, %p459
      %p462 = scmp.ne.s32.totalorder %s447, %s461
      %p463 = scmp.eq.s32.totalorder %s80, 0
      %p464 = por %p462, %p463
      %s466 = sadd.s32 %s465, 1
      %p469 = scmp.eq.s32.totalorder %s74, 1
      %p470 = scmp.ne.s32.totalorder %s465, %s467
      %p471 = scmp.eq.s32.totalorder %s74, 0
      %p472 = por %p470, %p471
      %p473 = scmp.ne.s32.totalorder %s465, %s467
      %p474 = scmp.eq.s32.totalorder %s79, 1
      %p475 = por %p473, %p474
      %p476 = scmp.ne.s32.totalorder %s467, %s468
      %p477 = scmp.eq.s32.totalorder %s79, 0
      %p478 = por %p476, %p477
      %p479 = scmp.ne.s32.totalorder %s467, %s468
      %p480 = scmp.eq.s32.totalorder %s80, 1
      %p481 = por %p479, %p480
      %p483 = scmp.ne.s32.totalorder %s468, %s482
      %p484 = scmp.eq.s32.totalorder %s80, 0
      %p485 = por %p483, %p484
      %s487 = sadd.s32 %s486, 1
      %p490 = scmp.eq.s32.totalorder %s74, 1
      %p491 = scmp.ne.s32.totalorder %s486, %s488
      %p492 = scmp.eq.s32.totalorder %s74, 0
      %p493 = por %p491, %p492
      %p494 = scmp.ne.s32.totalorder %s486, %s488
      %p495 = scmp.eq.s32.totalorder %s79, 1
      %p496 = por %p494, %p495
      %p497 = scmp.ne.s32.totalorder %s488, %s489
      %p498 = scmp.eq.s32.totalorder %s79, 0
      %p499 = por %p497, %p498
      %p500 = scmp.ne.s32.totalorder %s488, %s489
      %p501 = scmp.eq.s32.totalorder %s80, 1
      %p502 = por %p500, %p501
      %p504 = scmp.ne.s32.totalorder %s489, %s503
      %p505 = scmp.eq.s32.totalorder %s80, 0
      %p506 = por %p504, %p505
      %s508 = sadd.s32 %s507, 1
      %p511 = scmp.eq.s32.totalorder %s74, 1
      %p512 = scmp.ne.s32.totalorder %s507, %s509
      %p513 = scmp.eq.s32.totalorder %s74, 0
      %p514 = por %p512, %p513
      %p515 = scmp.ne.s32.totalorder %s507, %s509
      %p516 = scmp.eq.s32.totalorder %s79, 1
      %p517 = por %p515, %p516
      %p518 = scmp.ne.s32.totalorder %s509, %s510
      %p519 = scmp.eq.s32.totalorder %s79, 0
      %p520 = por %p518, %p519
      %p521 = scmp.ne.s32.totalorder %s509, %s510
      %p522 = scmp.eq.s32.totalorder %s80, 1
      %p523 = por %p521, %p522
      %p525 = scmp.ne.s32.totalorder %s510, %s524
      %p526 = scmp.eq.s32.totalorder %s80, 0
      %p527 = por %p525, %p526
      %s529 = sadd.s32 %s528, 1
      %p532 = scmp.eq.s32.totalorder %s74, 1
      %p533 = scmp.ne.s32.totalorder %s528, %s530
      %p534 = scmp.eq.s32.totalorder %s74, 0
      %p535 = por %p533, %p534
      %p536 = scmp.ne.s32.totalorder %s528, %s530
      %p537 = scmp.eq.s32.totalorder %s79, 1
      %p538 = por %p536, %p537
      %p539 = scmp.ne.s32.totalorder %s530, %s531
      %p540 = scmp.eq.s32.totalorder %s79, 0
      %p541 = por %p539, %p540
      %p542 = scmp.ne.s32.totalorder %s530, %s531
      %p543 = scmp.eq.s32.totalorder %s80, 1
      %p544 = por %p542, %p543
      %p546 = scmp.ne.s32.totalorder %s531, %s545
      %p547 = scmp.eq.s32.totalorder %s80, 0
      %p548 = por %p546, %p547
      %s550 = sadd.s32 %s549, 1
      %p553 = scmp.eq.s32.totalorder %s74, 1
      %p554 = scmp.ne.s32.totalorder %s549, %s551
      %p555 = scmp.eq.s32.totalorder %s74, 0
      %p556 = por %p554, %p555
      %p557 = scmp.ne.s32.totalorder %s549, %s551
      %p558 = scmp.eq.s32.totalorder %s79, 1
      %p559 = por %p557, %p558
      %p560 = scmp.ne.s32.totalorder %s551, %s552
      %p561 = scmp.eq.s32.totalorder %s79, 0
      %p562 = por %p560, %p561
      %p563 = scmp.ne.s32.totalorder %s551, %s552
      %p564 = scmp.eq.s32.totalorder %s80, 1
      %p565 = por %p563, %p564
      %p567 = scmp.ne.s32.totalorder %s552, %s566
      %p568 = scmp.eq.s32.totalorder %s80, 0
      %p569 = por %p567, %p568
      %s571 = sadd.s32 %s570, 1
      %p574 = scmp.eq.s32.totalorder %s74, 1
      %p575 = scmp.ne.s32.totalorder %s570, %s572
      %p576 = scmp.eq.s32.totalorder %s74, 0
      %p577 = por %p575, %p576
      %p578 = scmp.ne.s32.totalorder %s570, %s572
      %p579 = scmp.eq.s32.totalorder %s79, 1
      %p580 = por %p578, %p579
      %p581 = scmp.ne.s32.totalorder %s572, %s573
      %p582 = scmp.eq.s32.totalorder %s79, 0
      %p583 = por %p581, %p582
      %p584 = scmp.ne.s32.totalorder %s572, %s573
      %p585 = scmp.eq.s32.totalorder %s80, 1
      %p586 = por %p584, %p585
      %p588 = scmp.ne.s32.totalorder %s573, %s587
      %p589 = scmp.eq.s32.totalorder %s80, 0
      %p590 = por %p588, %p589
      %s592 = sadd.s32 %s591, 1
      %p595 = scmp.eq.s32.totalorder %s74, 1
      %p596 = scmp.ne.s32.totalorder %s591, %s593
      %p597 = scmp.eq.s32.totalorder %s74, 0
      %p598 = por %p596, %p597
      %p599 = scmp.ne.s32.totalorder %s591, %s593
      %p600 = scmp.eq.s32.totalorder %s79, 1
      %p601 = por %p599, %p600
      %p602 = scmp.ne.s32.totalorder %s593, %s594
      %p603 = scmp.eq.s32.totalorder %s79, 0
      %p604 = por %p602, %p603
      %p605 = scmp.ne.s32.totalorder %s593, %s594
      %p606 = scmp.eq.s32.totalorder %s80, 1
      %p607 = por %p605, %p606
      %p609 = scmp.ne.s32.totalorder %s594, %s608
      %p610 = scmp.eq.s32.totalorder %s80, 0
      %p611 = por %p609, %p610
      %s613 = sadd.s32 %s612, 1
      %p616 = scmp.eq.s32.totalorder %s74, 1
      %p617 = scmp.ne.s32.totalorder %s612, %s614
      %p618 = scmp.eq.s32.totalorder %s74, 0
      %p619 = por %p617, %p618
      %p620 = scmp.ne.s32.totalorder %s612, %s614
      %p621 = scmp.eq.s32.totalorder %s79, 1
      %p622 = por %p620, %p621
      %p623 = scmp.ne.s32.totalorder %s614, %s615
      %p624 = scmp.eq.s32.totalorder %s79, 0
      %p625 = por %p623, %p624
      %p626 = scmp.ne.s32.totalorder %s614, %s615
      %p627 = scmp.eq.s32.totalorder %s80, 1
      %p628 = por %p626, %p627
      %p630 = scmp.ne.s32.totalorder %s615, %s629
      %p631 = scmp.eq.s32.totalorder %s80, 0
      %p632 = por %p630, %p631
      %s634 = sadd.s32 %s633, 1
      %p637 = scmp.eq.s32.totalorder %s74, 1
      %p638 = scmp.ne.s32.totalorder %s633, %s635
      %p639 = scmp.eq.s32.totalorder %s74, 0
      %p640 = por %p638, %p639
      %p641 = scmp.ne.s32.totalorder %s633, %s635
      %p642 = scmp.eq.s32.totalorder %s79, 1
      %p643 = por %p641, %p642
      %p644 = scmp.ne.s32.totalorder %s635, %s636
      %p645 = scmp.eq.s32.totalorder %s79, 0
      %p646 = por %p644, %p645
      %p647 = scmp.ne.s32.totalorder %s635, %s636
      %p648 = scmp.eq.s32.totalorder %s80, 1
      %p649 = por %p647, %p648
      %p651 = scmp.ne.s32.totalorder %s636, %s650
      %p652 = scmp.eq.s32.totalorder %s80, 0
      %p653 = por %p651, %p652
      %s655 = sadd.s32 %s654, 1
      %p658 = scmp.eq.s32.totalorder %s74, 1
      %p659 = scmp.ne.s32.totalorder %s654, %s656
      %p660 = scmp.eq.s32.totalorder %s74, 0
      %p661 = por %p659, %p660
      %p662 = scmp.ne.s32.totalorder %s654, %s656
      %p663 = scmp.eq.s32.totalorder %s79, 1
      %p664 = por %p662, %p663
      %p665 = scmp.ne.s32.totalorder %s656, %s657
      %p666 = scmp.eq.s32.totalorder %s79, 0
      %p667 = por %p665, %p666
      %p668 = scmp.ne.s32.totalorder %s656, %s657
      %p669 = scmp.eq.s32.totalorder %s80, 1
      %p670 = por %p668, %p669
      %p672 = scmp.ne.s32.totalorder %s657, %s671
      %p673 = scmp.eq.s32.totalorder %s80, 0
      %p674 = por %p672, %p673
      %s676 = sadd.s32 %s675, 1
      %p679 = scmp.eq.s32.totalorder %s74, 1
      %p680 = scmp.ne.s32.totalorder %s675, %s677
      %p681 = scmp.eq.s32.totalorder %s74, 0
      %p682 = por %p680, %p681
      %p683 = scmp.ne.s32.totalorder %s675, %s677
      %p684 = scmp.eq.s32.totalorder %s79, 1
      %p685 = por %p683, %p684
      %p686 = scmp.ne.s32.totalorder %s677, %s678
      %p687 = scmp.eq.s32.totalorder %s79, 0
      %p688 = por %p686, %p687
      %p689 = scmp.ne.s32.totalorder %s677, %s678
      %p690 = scmp.eq.s32.totalorder %s80, 1
      %p691 = por %p689, %p690
      %p693 = scmp.ne.s32.totalorder %s678, %s692
      %p694 = scmp.eq.s32.totalorder %s80, 0
      %p695 = por %p693, %p694
      %s697 = sadd.s32 %s696, 1
      %p700 = scmp.eq.s32.totalorder %s74, 1
      %p701 = scmp.ne.s32.totalorder %s696, %s698
      %p702 = scmp.eq.s32.totalorder %s74, 0
      %p703 = por %p701, %p702
      %p704 = scmp.ne.s32.totalorder %s696, %s698
      %p705 = scmp.eq.s32.totalorder %s79, 1
      %p706 = por %p704, %p705
      %p707 = scmp.ne.s32.totalorder %s698, %s699
      %p708 = scmp.eq.s32.totalorder %s79, 0
      %p709 = por %p707, %p708
      %p710 = scmp.ne.s32.totalorder %s698, %s699
      %p711 = scmp.eq.s32.totalorder %s80, 1
      %p712 = por %p710, %p711
      %p714 = scmp.ne.s32.totalorder %s699, %s713
      %p715 = scmp.eq.s32.totalorder %s80, 0
      %p716 = por %p714, %p715
      %s718 = sadd.s32 %s717, 1
      %p721 = scmp.eq.s32.totalorder %s74, 1
      %p722 = scmp.ne.s32.totalorder %s717, %s719
      %p723 = scmp.eq.s32.totalorder %s74, 0
      %p724 = por %p722, %p723
      %p725 = scmp.ne.s32.totalorder %s717, %s719
      %p726 = scmp.eq.s32.totalorder %s79, 1
      %p727 = por %p725, %p726
      %p728 = scmp.ne.s32.totalorder %s719, %s720
      %p729 = scmp.eq.s32.totalorder %s79, 0
      %p730 = por %p728, %p729
      %p731 = scmp.ne.s32.totalorder %s719, %s720
      %p732 = scmp.eq.s32.totalorder %s80, 1
      %p733 = por %p731, %p732
      %p735 = scmp.ne.s32.totalorder %s720, %s734
      %p736 = scmp.eq.s32.totalorder %s80, 0
      %p737 = por %p735, %p736
      %s739 = sadd.s32 %s738, 1
      %p742 = scmp.eq.s32.totalorder %s74, 1
      %p743 = scmp.ne.s32.totalorder %s738, %s740
      %p744 = scmp.eq.s32.totalorder %s74, 0
      %p745 = por %p743, %p744
      %p746 = scmp.ne.s32.totalorder %s738, %s740
      %p747 = scmp.eq.s32.totalorder %s79, 1
      %p748 = por %p746, %p747
      %p749 = scmp.ne.s32.totalorder %s740, %s741
      %p750 = scmp.eq.s32.totalorder %s79, 0
      %p751 = por %p749, %p750
      %p752 = scmp.ne.s32.totalorder %s740, %s741
      %p753 = scmp.eq.s32.totalorder %s80, 1
      %p754 = por %p752, %p753
      %p756 = scmp.ne.s32.totalorder %s741, %s755
      %p757 = scmp.eq.s32.totalorder %s80, 0
      %p758 = por %p756, %p757
      %s759 = ssub.s32 %s74, %s81
      %p760 = scmp.eq.s32.totalorder %s759, 0
      %s762 = sadd.s32 %s761, 1
      %s763 = scalar_select %p760, %s761, %s762
      %p766 = pneg %p760
      %p767 = scmp.eq.s32.totalorder %s74, 1
      %p768 = por %p766, %p767
      %p769 = scmp.ne.s32.totalorder %s761, %s764
      %p770 = scmp.eq.s32.totalorder %s74, 0
      %p771 = por %p769, %p770
      %p772 = scmp.ne.s32.totalorder %s761, %s764
      %p773 = scmp.eq.s32.totalorder %s79, 1
      %p774 = por %p772, %p773
      %p775 = scmp.ne.s32.totalorder %s764, %s765
      %p776 = scmp.eq.s32.totalorder %s79, 0
      %p777 = por %p775, %p776
      %p778 = scmp.ne.s32.totalorder %s764, %s765
      %p779 = scmp.eq.s32.totalorder %s80, 1
      %p780 = por %p778, %p779
      %p782 = scmp.ne.s32.totalorder %s765, %s781
      %p783 = scmp.eq.s32.totalorder %s80, 0
      %p784 = por %p782, %p783
      %p785 = scmp.le.s32.totalorder 1, %s74
      %p786 = scmp.lt.s32.totalorder %s74, 3
      %p787 = pnand %p785, %p786
      %p788 = pneg %p787
      // Predicated region
      $region9: #{tpu_custom_call.1} parent=5 // pred_check
        _
      $region10: #{tpu_custom_call.1} parent=5 // pred_check_branch
        %790 = sbr.rel (%p787) target = $region12
      $region11: #{tpu_custom_call.1} parent=5 // pred_region
        %s791 = ssub.s32 %s74, 1
        // Predicated region
        $region13: #{tpu_custom_call.1} parent=11 // pred_check
          %p792 = pneg %p121
        $region14: #{tpu_custom_call.1} parent=11 // pred_check_branch
          %794 = sbr.rel (%p792) target = $region16
        $region15: #{tpu_custom_call.1} parent=11 // pred_region
          _
        $region16: #{tpu_custom_call.1} parent=11 // pred_fallthru
          _
        // Predicated region
        $region17: #{tpu_custom_call.1} parent=11 // pred_check
          %p795 = pneg %p142
        $region18: #{tpu_custom_call.1} parent=11 // pred_check_branch
          %797 = sbr.rel (%p795) target = $region20
        $region19: #{tpu_custom_call.1} parent=11 // pred_region
          _
        $region20: #{tpu_custom_call.1} parent=11 // pred_fallthru
          _
        // Predicated region
        $region21: #{tpu_custom_call.1} parent=11 // pred_check
          %p798 = pneg %p163
        $region22: #{tpu_custom_call.1} parent=11 // pred_check_branch
          %800 = sbr.rel (%p798) target = $region24
        $region23: #{tpu_custom_call.1} parent=11 // pred_region
          _
        $region24: #{tpu_custom_call.1} parent=11 // pred_fallthru
          _
        // Predicated region
        $region25: #{tpu_custom_call.1} parent=11 // pred_check
          %p801 = pneg %p184
        $region26: #{tpu_custom_call.1} parent=11 // pred_check_branch
          %803 = sbr.rel (%p801) target = $region28
        $region27: #{tpu_custom_call.1} parent=11 // pred_region
          _
        $region28: #{tpu_custom_call.1} parent=11 // pred_fallthru
          _
        // Predicated region
        $region29: #{tpu_custom_call.1} parent=11 // pred_check
          %p804 = pneg %p205
        $region30: #{tpu_custom_call.1} parent=11 // pred_check_branch
          %806 = sbr.rel (%p804) target = $region32
        $region31: #{tpu_custom_call.1} parent=11 // pred_region
          _
        $region32: #{tpu_custom_call.1} parent=11 // pred_fallthru
          _
        // Predicated region
        $region33: #{tpu_custom_call.1} parent=11 // pred_check
          %p807 = pneg %p226
        $region34: #{tpu_custom_call.1} parent=11 // pred_check_branch
          %809 = sbr.rel (%p807) target = $region36
        $region35: #{tpu_custom_call.1} parent=11 // pred_region
          _
        $region36: #{tpu_custom_call.1} parent=11 // pred_fallthru
          _
        // Predicated region
        $region37: #{tpu_custom_call.1} parent=11 // pred_check
          %p810 = pneg %p247
        $region38: #{tpu_custom_call.1} parent=11 // pred_check_branch
          %812 = sbr.rel (%p810) target = $region40
        $region39: #{tpu_custom_call.1} parent=11 // pred_region
          _
        $region40: #{tpu_custom_call.1} parent=11 // pred_fallthru
          _
        // Predicated region
        $region41: #{tpu_custom_call.1} parent=11 // pred_check
          %p813 = pneg %p268
        $region42: #{tpu_custom_call.1} parent=11 // pred_check_branch
          %815 = sbr.rel (%p813) target = $region44
        $region43: #{tpu_custom_call.1} parent=11 // pred_region
          _
        $region44: #{tpu_custom_call.1} parent=11 // pred_fallthru
          _
        // Predicated region
        $region45: #{tpu_custom_call.1} parent=11 // pred_check
          %p816 = pneg %p289
        $region46: #{tpu_custom_call.1} parent=11 // pred_check_branch
          %818 = sbr.rel (%p816) target = $region48
        $region47: #{tpu_custom_call.1} parent=11 // pred_region
          _
        $region48: #{tpu_custom_call.1} parent=11 // pred_fallthru
          _
        // Predicated region
        $region49: #{tpu_custom_call.1} parent=11 // pred_check
          %p819 = pneg %p310
        $region50: #{tpu_custom_call.1} parent=11 // pred_check_branch
          %821 = sbr.rel (%p819) target = $region52
        $region51: #{tpu_custom_call.1} parent=11 // pred_region
          _
        $region52: #{tpu_custom_call.1} parent=11 // pred_fallthru
          _
        // Predicated region
        $region53: #{tpu_custom_call.1} parent=11 // pred_check
          %p822 = pneg %p331
        $region54: #{tpu_custom_call.1} parent=11 // pred_check_branch
          %824 = sbr.rel (%p822) target = $region56
        $region55: #{tpu_custom_call.1} parent=11 // pred_region
          _
        $region56: #{tpu_custom_call.1} parent=11 // pred_fallthru
          _
        // Predicated region
        $region57: #{tpu_custom_call.1} parent=11 // pred_check
          %p825 = pneg %p352
        $region58: #{tpu_custom_call.1} parent=11 // pred_check_branch
          %827 = sbr.rel (%p825) target = $region60
        $region59: #{tpu_custom_call.1} parent=11 // pred_region
          _
        $region60: #{tpu_custom_call.1} parent=11 // pred_fallthru
          _
        // Predicated region
        $region61: #{tpu_custom_call.1} parent=11 // pred_check
          %p828 = pneg %p373
        $region62: #{tpu_custom_call.1} parent=11 // pred_check_branch
          %830 = sbr.rel (%p828) target = $region64
        $region63: #{tpu_custom_call.1} parent=11 // pred_region
          _
        $region64: #{tpu_custom_call.1} parent=11 // pred_fallthru
          _
        // Predicated region
        $region65: #{tpu_custom_call.1} parent=11 // pred_check
          %p831 = pneg %p394
        $region66: #{tpu_custom_call.1} parent=11 // pred_check_branch
          %833 = sbr.rel (%p831) target = $region68
        $region67: #{tpu_custom_call.1} parent=11 // pred_region
          _
        $region68: #{tpu_custom_call.1} parent=11 // pred_fallthru
          _
        // Predicated region
        $region69: #{tpu_custom_call.1} parent=11 // pred_check
          %p834 = pneg %p415
        $region70: #{tpu_custom_call.1} parent=11 // pred_check_branch
          %836 = sbr.rel (%p834) target = $region72
        $region71: #{tpu_custom_call.1} parent=11 // pred_region
          _
        $region72: #{tpu_custom_call.1} parent=11 // pred_fallthru
          _
        // Predicated region
        $region73: #{tpu_custom_call.1} parent=11 // pred_check
          %p837 = pneg %p436
        $region74: #{tpu_custom_call.1} parent=11 // pred_check_branch
          %839 = sbr.rel (%p837) target = $region76
        $region75: #{tpu_custom_call.1} parent=11 // pred_region
          _
        $region76: #{tpu_custom_call.1} parent=11 // pred_fallthru
          _
        // Predicated region
        $region77: #{tpu_custom_call.1} parent=11 // pred_check
          %p840 = pneg %p457
        $region78: #{tpu_custom_call.1} parent=11 // pred_check_branch
          %842 = sbr.rel (%p840) target = $region80
        $region79: #{tpu_custom_call.1} parent=11 // pred_region
          _
        $region80: #{tpu_custom_call.1} parent=11 // pred_fallthru
          _
        // Predicated region
        $region81: #{tpu_custom_call.1} parent=11 // pred_check
          %p843 = pneg %p478
        $region82: #{tpu_custom_call.1} parent=11 // pred_check_branch
          %845 = sbr.rel (%p843) target = $region84
        $region83: #{tpu_custom_call.1} parent=11 // pred_region
          _
        $region84: #{tpu_custom_call.1} parent=11 // pred_fallthru
          _
        // Predicated region
        $region85: #{tpu_custom_call.1} parent=11 // pred_check
          %p846 = pneg %p499
        $region86: #{tpu_custom_call.1} parent=11 // pred_check_branch
          %848 = sbr.rel (%p846) target = $region88
        $region87: #{tpu_custom_call.1} parent=11 // pred_region
          _
        $region88: #{tpu_custom_call.1} parent=11 // pred_fallthru
          _
        // Predicated region
        $region89: #{tpu_custom_call.1} parent=11 // pred_check
          %p849 = pneg %p520
        $region90: #{tpu_custom_call.1} parent=11 // pred_check_branch
          %851 = sbr.rel (%p849) target = $region92
        $region91: #{tpu_custom_call.1} parent=11 // pred_region
          _
        $region92: #{tpu_custom_call.1} parent=11 // pred_fallthru
          _
        // Predicated region
        $region93: #{tpu_custom_call.1} parent=11 // pred_check
          %p852 = pneg %p541
        $region94: #{tpu_custom_call.1} parent=11 // pred_check_branch
          %854 = sbr.rel (%p852) target = $region96
        $region95: #{tpu_custom_call.1} parent=11 // pred_region
          _
        $region96: #{tpu_custom_call.1} parent=11 // pred_fallthru
          _
        // Predicated region
        $region97: #{tpu_custom_call.1} parent=11 // pred_check
          %p855 = pneg %p562
        $region98: #{tpu_custom_call.1} parent=11 // pred_check_branch
          %857 = sbr.rel (%p855) target = $region100
        $region99: #{tpu_custom_call.1} parent=11 // pred_region
          _
        $region100: #{tpu_custom_call.1} parent=11 // pred_fallthru
          _
        // Predicated region
        $region101: #{tpu_custom_call.1} parent=11 // pred_check
          %p858 = pneg %p583
        $region102: #{tpu_custom_call.1} parent=11 // pred_check_branch
          %860 = sbr.rel (%p858) target = $region104
        $region103: #{tpu_custom_call.1} parent=11 // pred_region
          _
        $region104: #{tpu_custom_call.1} parent=11 // pred_fallthru
          _
        // Predicated region
        $region105: #{tpu_custom_call.1} parent=11 // pred_check
          %p861 = pneg %p604
        $region106: #{tpu_custom_call.1} parent=11 // pred_check_branch
          %863 = sbr.rel (%p861) target = $region108
        $region107: #{tpu_custom_call.1} parent=11 // pred_region
          _
        $region108: #{tpu_custom_call.1} parent=11 // pred_fallthru
          _
        // Predicated region
        $region109: #{tpu_custom_call.1} parent=11 // pred_check
          %p864 = pneg %p625
        $region110: #{tpu_custom_call.1} parent=11 // pred_check_branch
          %866 = sbr.rel (%p864) target = $region112
        $region111: #{tpu_custom_call.1} parent=11 // pred_region
          _
        $region112: #{tpu_custom_call.1} parent=11 // pred_fallthru
          _
        // Predicated region
        $region113: #{tpu_custom_call.1} parent=11 // pred_check
          %p867 = pneg %p646
        $region114: #{tpu_custom_call.1} parent=11 // pred_check_branch
          %869 = sbr.rel (%p867) target = $region116
        $region115: #{tpu_custom_call.1} parent=11 // pred_region
          _
        $region116: #{tpu_custom_call.1} parent=11 // pred_fallthru
          _
        // Predicated region
        $region117: #{tpu_custom_call.1} parent=11 // pred_check
          %p870 = pneg %p667
        $region118: #{tpu_custom_call.1} parent=11 // pred_check_branch
          %872 = sbr.rel (%p870) target = $region120
        $region119: #{tpu_custom_call.1} parent=11 // pred_region
          _
        $region120: #{tpu_custom_call.1} parent=11 // pred_fallthru
          _
        // Predicated region
        $region121: #{tpu_custom_call.1} parent=11 // pred_check
          %p873 = pneg %p688
        $region122: #{tpu_custom_call.1} parent=11 // pred_check_branch
          %875 = sbr.rel (%p873) target = $region124
        $region123: #{tpu_custom_call.1} parent=11 // pred_region
          _
        $region124: #{tpu_custom_call.1} parent=11 // pred_fallthru
          _
        // Predicated region
        $region125: #{tpu_custom_call.1} parent=11 // pred_check
          %p876 = pneg %p709
        $region126: #{tpu_custom_call.1} parent=11 // pred_check_branch
          %878 = sbr.rel (%p876) target = $region128
        $region127: #{tpu_custom_call.1} parent=11 // pred_region
          _
        $region128: #{tpu_custom_call.1} parent=11 // pred_fallthru
          _
        // Predicated region
        $region129: #{tpu_custom_call.1} parent=11 // pred_check
          %p879 = pneg %p730
        $region130: #{tpu_custom_call.1} parent=11 // pred_check_branch
          %881 = sbr.rel (%p879) target = $region132
        $region131: #{tpu_custom_call.1} parent=11 // pred_region
          _
        $region132: #{tpu_custom_call.1} parent=11 // pred_fallthru
          _
        // Predicated region
        $region133: #{tpu_custom_call.1} parent=11 // pred_check
          %p882 = pneg %p751
        $region134: #{tpu_custom_call.1} parent=11 // pred_check_branch
          %884 = sbr.rel (%p882) target = $region136
        $region135: #{tpu_custom_call.1} parent=11 // pred_region
          _
        $region136: #{tpu_custom_call.1} parent=11 // pred_fallthru
          _
      $region12: #{tpu_custom_call.1} parent=5 // pred_fallthru
        _
      %p885 = scmp.lt.s32.totalorder %s74, 2
      // Predicated region
      $region137: #{tpu_custom_call.1} parent=5 // pred_check
        %p886 = pneg %p885
      $region138: #{tpu_custom_call.1} parent=5 // pred_check_branch
        %888 = sbr.rel (%p886) target = $region140
      $region139: #{tpu_custom_call.1} parent=5 // pred_region
        // Predicated region
        $region141: #{tpu_custom_call.1} parent=139 // pred_check
          %p889 = pneg %p94
        $region142: #{tpu_custom_call.1} parent=139 // pred_check_branch
          %891 = sbr.rel (%p889) target = $region144
        $region143: #{tpu_custom_call.1} parent=139 // pred_region
          %p892 = scmp.lt.s32.totalorder %s74, 1
          %s893 = scalar_select %p892, %s74, 1
          %s894 = smul.addr %s893, 8
          %s895 = smul.addr %s894, 8
          %s896 = scalar_lea.vmem %s1, %s895
        $region144: #{tpu_custom_call.1} parent=139 // pred_fallthru
          _
      $region140: #{tpu_custom_call.1} parent=5 // pred_fallthru
        _
      %p897 = scmp.le.s32.totalorder 1, %s74
      %p898 = scmp.lt.s32.totalorder %s74, 3
      %p899 = pnand %p897, %p898
      %p900 = pneg %p899
      // Predicated region
      $region145: #{tpu_custom_call.1} parent=5 // pred_check
        _
      $region146: #{tpu_custom_call.1} parent=5 // pred_check_branch
        %902 = sbr.rel (%p899) target = $region148
      $region147: #{tpu_custom_call.1} parent=5 // pred_region
        %s903 = ssub.s32 %s74, 1
        %p904 = scmp.lt.s32.totalorder %s79, 1
        %s905 = scalar_select %p904, %s79, 1
        %s906 = smul.addr %s905, 8
        %s907 = smul.addr %s906, 8
        %s908 = scalar_lea.vmem %s1, %s907
        %p909 = pneg %p100
        %p910 = pneg %p97
        %p911 = pneg %p121
        %p912 = pneg %p118
        %p913 = pneg %p142
        %p914 = pneg %p139
        %p915 = pneg %p163
        %p916 = pneg %p160
        %p917 = pneg %p184
        %p918 = pneg %p181
        %p919 = pneg %p205
        %p920 = pneg %p202
        %p921 = pneg %p226
        %p922 = pneg %p223
        %p923 = pneg %p247
        %p924 = pneg %p244
        %p925 = pneg %p268
        %p926 = pneg %p265
        %p927 = pneg %p289
        %p928 = pneg %p286
        %p929 = pneg %p310
        %p930 = pneg %p307
        %p931 = pneg %p331
        %p932 = pneg %p328
        %p933 = pneg %p352
        %p934 = pneg %p349
        %p935 = pneg %p373
        %p936 = pneg %p370
        %p937 = pneg %p394
        %p938 = pneg %p391
        %p939 = pneg %p415
        %p940 = pneg %p412
        %p941 = pneg %p436
        %p942 = pneg %p433
        %p943 = pneg %p457
        %p944 = pneg %p454
        %p945 = pneg %p478
        %p946 = pneg %p475
        %p947 = pneg %p499
        %p948 = pneg %p496
        %p949 = pneg %p520
        %p950 = pneg %p517
        %p951 = pneg %p541
        %p952 = pneg %p538
        %p953 = pneg %p562
        %p954 = pneg %p559
        %p955 = pneg %p583
        %p956 = pneg %p580
        %p957 = pneg %p604
        %p958 = pneg %p601
        %p959 = pneg %p625
        %p960 = pneg %p622
        %p961 = pneg %p646
        %p962 = pneg %p643
        %p963 = pneg %p667
        %p964 = pneg %p664
        %p965 = pneg %p688
        %p966 = pneg %p685
        %p967 = pneg %p709
        %p968 = pneg %p706
        %p969 = pneg %p730
        %p970 = pneg %p727
        %p971 = pneg %p751
        %p972 = pneg %p748
        %p973 = pneg %p777
        %p974 = pneg %p774
        %s975 = sand.u32 %s764, 1
        %s976 = scalar_lea.sflag [#allocation4], %s975
        %s977 = sand.u32 %s764, 1
        %s978 = smul.addr %s977, 64
        %s979 = scalar_lea.vmem [#allocation3], %s978
        %p980 = scmp.lt.s32.totalorder %s79, 1
        %s981 = scalar_select %p980, %s79, 1
        %s982 = smul.addr %s981, 8
        %s983 = smul.addr %s982, 8
        %s984 = scalar_lea.vmem %s1, %s983
        %v986 = vld [vmem:[%s984] sm:$0xff]
        %v987 = vld [vmem:[%s984 + $0x8] sm:$0xff]
        %v988 = vld [vmem:[%s984 + $0x10] sm:$0xff]
        %v989 = vld [vmem:[%s984 + $0x18] sm:$0xff]
        %v990 = vld [vmem:[%s984 + $0x20] sm:$0xff]
        %v991 = vld [vmem:[%s984 + $0x28] sm:$0xff]
        %v992 = vld [vmem:[%s984 + $0x30] sm:$0xff]
        %v993 = vld [vmem:[%s984 + $0x38] sm:$0xff]
        %v994 = vld [vmem:[%s3] sm:$0x7]
        %v995 = vpack.c.bf16 %v987, %v986
        %v996 = vpack.c.bf16 %v989, %v988
        %v997 = vpack.c.bf16 %v991, %v990
        %v998 = vpack.c.bf16 %v993, %v992
        %v999 = vld [vmem:[%s5] sm:$0x1]
        %v1001 = vlaneseq
        %v1002 = vshrl.u32 %v1001, 7
        %v1003 = vsub.s32 0, %v1002
        %v1004 = vrot.slane %v999, %v1003
        %vm1006 = vcmask 39936
        %v1008 = vsel %vm1006, %v995, 0
        %v1011 = vsel %vm1006, %v996, 0
        %v1014 = vsel %vm1006, %v997, 0
        %v1017 = vsel %vm1006, %v998, 0
        %vm1019 = vcmask 1041408
        %vm1020 = vcmask 1042432
        %v1021 = vsel %vm1019, 4294967295, 65535
        %v1022 = vsel %vm1020, %v1021, 0
        %v1024 = vand.u32 %v994, %v1022
        %1026 = vmatprep.subr.bf16.mxu0 0
        %1027 = vmatpush1.bf16.msra.mxu0 %v1024
        %1028 = vmatprep.subr.bf16.mxu0 0
        %1029 = vmatpush1.bf16.msra.mxu0 0
        %1030 = vmatprep.subr.bf16.mxu0 0
        %1031 = vmatpush1.bf16.msra.mxu0 0
        %1032 = vmatprep.subr.bf16.mxu0 0
        %1033 = vmatpush1.bf16.msra.mxu0 0
        %1034 = vmatprep.subr.bf16.mxu0 0
        %1035 = vmatpush1.bf16.msra.mxu0 0
        %1036 = vmatprep.subr.bf16.mxu0 0
        %1037 = vmatpush1.bf16.msra.mxu0 0
        %1038 = vmatprep.subr.bf16.mxu0 0
        %1039 = vmatpush1.bf16.msra.mxu0 0
        %1040 = vmatprep.subr.bf16.mxu0 0
        %1041 = vmatpush1.bf16.msra.mxu0 0
        %1042 = vmatprep.subr.bf16.mxu0 0
        %1043 = vmatpush1.bf16.msra.mxu0 0
        %1044 = vmatprep.subr.bf16.mxu0 0
        %1045 = vmatpush1.bf16.msra.mxu0 0
        %1046 = vmatprep.subr.bf16.mxu0 0
        %1047 = vmatpush1.bf16.msra.mxu0 0
        %1048 = vmatprep.subr.bf16.mxu0 0
        %1049 = vmatpush1.bf16.msra.mxu0 0
        %1050 = vmatprep.subr.bf16.mxu0 0
        %1051 = vmatpush1.bf16.msra.mxu0 0
        %1052 = vmatprep.subr.bf16.mxu0 0
        %1053 = vmatpush1.bf16.msra.mxu0 0
        %1054 = vmatprep.subr.bf16.mxu0 0
        %1055 = vmatpush1.bf16.msra.mxu0 0
        %1056 = vmatprep.subr.bf16.mxu0 0
        %1057 = vmatpush1.bf16.msra.mxu0 0
        %1058 = vmatprep.mubr.bf16.mxu0 0
        %1059 = vmatmul.mubr.bf16.gmra.mrb[0].mxu0 %v1008
        %v1060 = vpop.f32.mrb[0].mxu0
        %v1061 = vadd.f32 %v1004, %v1060
        %v1062 = vpop.f32.mrb[0].mxu0
        %v1063 = vpop.f32.mrb[0].mxu0
        %v1064 = vadd.f32 %v1004, %v1063
        %v1065 = vpop.f32.mrb[0].mxu0
        %1066 = vmatprep.mubr.bf16.mxu0 0
        %1067 = vmatmul.mubr.bf16.gmra.mrb[0].mxu0 %v1011
        %v1068 = vpop.f32.mrb[0].mxu0
        %v1069 = vadd.f32 %v1004, %v1068
        %v1070 = vpop.f32.mrb[0].mxu0
        %v1071 = vpop.f32.mrb[0].mxu0
        %v1072 = vadd.f32 %v1004, %v1071
        %v1073 = vpop.f32.mrb[0].mxu0
        %1074 = vmatprep.mubr.bf16.mxu0 0
        %1075 = vmatmul.mubr.bf16.gmra.mrb[0].mxu0 %v1014
        %v1076 = vpop.f32.mrb[0].mxu0
        %v1077 = vadd.f32 %v1004, %v1076
        %v1078 = vpop.f32.mrb[0].mxu0
        %v1079 = vpop.f32.mrb[0].mxu0
        %v1080 = vadd.f32 %v1004, %v1079
        %v1081 = vpop.f32.mrb[0].mxu0
        %1082 = vmatprep.mubr.bf16.mxu0 0
        %1083 = vmatmul.mubr.bf16.gmra.mrb[0].mxu0 %v1017
        %v1084 = vpop.f32.mrb[0].mxu0
        %v1085 = vadd.f32 %v1004, %v1084
        %v1086 = vpop.f32.mrb[0].mxu0
        %v1087 = vpop.f32.mrb[0].mxu0
        %v1088 = vadd.f32 %v1004, %v1087
        %v1089 = vpop.f32.mrb[0].mxu0
        %1090 = vdwg.mxu0
        %v1091 = vmul.f32 %v1061, 0.5
        %v1092 = vmul.f32 %v1064, 0.5
        %v1093 = vmul.f32 %v1069, 0.5
        %v1094 = vmul.f32 %v1072, 0.5
        %v1095 = vmul.f32 %v1077, 0.5
        %v1096 = vmul.f32 %v1080, 0.5
        %v1097 = vmul.f32 %v1085, 0.5
        %v1098 = vmul.f32 %v1088, 0.5
        %v1099 = vmul.f32 %v1061, 0.70710677
        %v1100 = vmul.f32 %v1064, 0.70710677
        %v1101 = vmul.f32 %v1069, 0.70710677
        %v1102 = vmul.f32 %v1072, 0.70710677
        %v1103 = vmul.f32 %v1077, 0.70710677
        %v1104 = vmul.f32 %v1080, 0.70710677
        %v1105 = vmul.f32 %v1085, 0.70710677
        %v1106 = vmul.f32 %v1088, 0.70710677
        %v1107 = verf.f32.pop %v1099
        %v1108 = verf.f32.pop %v1100
        %v1109 = verf.f32.pop %v1101
        %v1110 = verf.f32.pop %v1102
        %v1111 = verf.f32.pop %v1103
        %v1112 = verf.f32.pop %v1104
        %v1113 = verf.f32.pop %v1105
        %v1114 = verf.f32.pop %v1106
        %v1115 = vadd.f32 %v1107, 1.0
        %v1116 = vadd.f32 %v1108, 1.0
        %v1117 = vadd.f32 %v1109, 1.0
        %v1118 = vadd.f32 %v1110, 1.0
        %v1119 = vadd.f32 %v1111, 1.0
        %v1120 = vadd.f32 %v1112, 1.0
        %v1121 = vadd.f32 %v1113, 1.0
        %v1122 = vadd.f32 %v1114, 1.0
        %v1123 = vmul.f32 %v1091, %v1115
        %v1124 = vmul.f32 %v1092, %v1116
        %v1125 = vmul.f32 %v1093, %v1117
        %v1126 = vmul.f32 %v1094, %v1118
        %v1127 = vmul.f32 %v1095, %v1119
        %v1128 = vmul.f32 %v1096, %v1120
        %v1129 = vmul.f32 %v1097, %v1121
        %v1130 = vmul.f32 %v1098, %v1122
        %v1131 = vld [vmem:[%s7] sm:$0xf]
        %v1132 = vld [vmem:[%s7 + $0x4] sm:$0xf]
        %v1133 = vld [vmem:[%s7 + $0x8] sm:$0xf]
        %v1134 = vld [vmem:[%s7 + $0xc] sm:$0xf]
        %v1135 = vld [vmem:[%s7 + $0x10] sm:$0xf]
        %v1136 = vld [vmem:[%s7 + $0x14] sm:$0xf]
        %v1137 = vld [vmem:[%s7 + $0x18] sm:$0xf]
        %v1138 = vld [vmem:[%s7 + $0x1c] sm:$0xf]
        %v1139 = vpack.c.bf16 %v1124, %v1123
        %v1140 = vpack.c.bf16 %v1126, %v1125
        %v1141 = vpack.c.bf16 %v1128, %v1127
        %v1142 = vpack.c.bf16 %v1130, %v1129
        %v1143 = vld [vmem:[%s9] sm:$0x1]
        %v1145 = vlaneseq
        %v1146 = vshrl.u32 %v1145, 7
        %v1147 = vsub.s32 0, %v1146
        %v1148 = vrot.slane %v1143, %v1147
        %v1158 = vunpack.c.l.b16 %v1131
        %v1159 = vunpack.c.l.b16 %v1132
        %v1160 = vunpack.c.l.b16 %v1133
        %v1161 = vunpack.c.l.b16 %v1134
        %v1162 = vunpack.c.l.b16 %v1135
        %v1163 = vunpack.c.l.b16 %v1136
        %v1164 = vunpack.c.l.b16 %v1137
        %v1165 = vunpack.c.l.b16 %v1138
        %v1166 = vpack.c.b16 %v1159, %v1158
        %v1167 = vpack.c.b16 %v1161, %v1160
        %v1168 = vpack.c.b16 %v1163, %v1162
        %v1169 = vpack.c.b16 %v1165, %v1164
        %vm1174 = vcmask 523264
        %v1176 = vsel %vm1174, %v1139, 0
        %v1179 = vsel %vm1174, %v1140, 0
        %v1182 = vsel %vm1174, %v1141, 0
        %v1185 = vsel %vm1174, %v1142, 0
        %1187 = vmatprep.subr.bf16.mxu0 0
        %1188 = vmatpush1.bf16.msra.mxu0 %v1166
        %1189 = vmatprep.subr.bf16.mxu0 0
        %1190 = vmatpush1.bf16.msra.mxu0 %v1167
        %1191 = vmatprep.subr.bf16.mxu0 0
        %1192 = vmatpush1.bf16.msra.mxu0 %v1168
        %1193 = vmatprep.subr.bf16.mxu0 0
        %1194 = vmatpush1.bf16.msra.mxu0 %v1169
        %1195 = vmatprep.subr.bf16.mxu0 0
        %1196 = vmatpush1.bf16.msra.mxu0 0
        %1197 = vmatprep.subr.bf16.mxu0 0
        %1198 = vmatpush1.bf16.msra.mxu0 0
        %1199 = vmatprep.subr.bf16.mxu0 0
        %1200 = vmatpush1.bf16.msra.mxu0 0
        %1201 = vmatprep.subr.bf16.mxu0 0
        %1202 = vmatpush1.bf16.msra.mxu0 0
        %1203 = vmatprep.subr.bf16.mxu0 0
        %1204 = vmatpush1.bf16.msra.mxu0 0
        %1205 = vmatprep.subr.bf16.mxu0 0
        %1206 = vmatpush1.bf16.msra.mxu0 0
        %1207 = vmatprep.subr.bf16.mxu0 0
        %1208 = vmatpush1.bf16.msra.mxu0 0
        %1209 = vmatprep.subr.bf16.mxu0 0
        %1210 = vmatpush1.bf16.msra.mxu0 0
        %1211 = vmatprep.subr.bf16.mxu0 0
        %1212 = vmatpush1.bf16.msra.mxu0 0
        %1213 = vmatprep.subr.bf16.mxu0 0
        %1214 = vmatpush1.bf16.msra.mxu0 0
        %1215 = vmatprep.subr.bf16.mxu0 0
        %1216 = vmatpush1.bf16.msra.mxu0 0
        %1217 = vmatprep.subr.bf16.mxu0 0
        %1218 = vmatpush1.bf16.msra.mxu0 0
        %1219 = vmatprep.mubr.bf16.mxu0 0
        %1220 = vmatmul.mubr.bf16.gmra.mrb[0].mxu0 %v1176
        %v1221 = vpop.f32.mrb[0].mxu0
        %v1222 = vadd.f32 %v1148, %v1221
        %v1223 = vpop.f32.mrb[0].mxu0
        %v1224 = vpop.f32.mrb[0].mxu0
        %v1225 = vadd.f32 %v1148, %v1224
        %v1226 = vpop.f32.mrb[0].mxu0
        %1227 = vmatprep.mubr.bf16.mxu0 0
        %1228 = vmatmul.mubr.bf16.gmra.mrb[0].mxu0 %v1179
        %v1229 = vpop.f32.mrb[0].mxu0
        %v1230 = vadd.f32 %v1148, %v1229
        %v1231 = vpop.f32.mrb[0].mxu0
        %v1232 = vpop.f32.mrb[0].mxu0
        %v1233 = vadd.f32 %v1148, %v1232
        %v1234 = vpop.f32.mrb[0].mxu0
        %1235 = vmatprep.mubr.bf16.mxu0 0
        %1236 = vmatmul.mubr.bf16.gmra.mrb[0].mxu0 %v1182
        %v1237 = vpop.f32.mrb[0].mxu0
        %v1238 = vadd.f32 %v1148, %v1237
        %v1239 = vpop.f32.mrb[0].mxu0
        %v1240 = vpop.f32.mrb[0].mxu0
        %v1241 = vadd.f32 %v1148, %v1240
        %v1242 = vpop.f32.mrb[0].mxu0
        %1243 = vmatprep.mubr.bf16.mxu0 0
        %1244 = vmatmul.mubr.bf16.gmra.mrb[0].mxu0 %v1185
        %v1245 = vpop.f32.mrb[0].mxu0
        %v1246 = vadd.f32 %v1148, %v1245
        %v1247 = vpop.f32.mrb[0].mxu0
        %v1248 = vpop.f32.mrb[0].mxu0
        %v1249 = vadd.f32 %v1148, %v1248
        %v1250 = vpop.f32.mrb[0].mxu0
        %1251 = vdwg.mxu0
        %v1252 = vld [vmem:[%s11] sm:$0x1]
        %v1254 = vlaneseq
        %v1255 = vshrl.u32 %v1254, 7
        %v1256 = vsub.s32 0, %v1255
        %v1257 = vrot.slane %v1252, %v1256
        %v1259 = vadd.f32 %v1222, %v1257
        %v1260 = vadd.f32 %v1225, %v1257
        %v1261 = vadd.f32 %v1230, %v1257
        %v1262 = vadd.f32 %v1233, %v1257
        %v1263 = vadd.f32 %v1238, %v1257
        %v1264 = vadd.f32 %v1241, %v1257
        %v1265 = vadd.f32 %v1246, %v1257
        %v1266 = vadd.f32 %v1249, %v1257
        %v1267 = vld [vmem:[%s13] sm:$0x1]
        %v1268 = vld [vmem:[%s15] sm:$0x1]
        %vm1269 = vcmask 261120
        %v1270 = vsel %vm1269, %v1259, 0.0
        %1271 = vadd.xlane.f32.xlu0 %v1270
        %v1272 = vpop.xlane.xlu0 %1271
        %v1273 = vsel %vm1269, %v1260, 0.0
        %1274 = vadd.xlane.f32.xlu0 %v1273
        %v1275 = vpop.xlane.xlu0 %1274
        %v1276 = vsel %vm1269, %v1261, 0.0
        %1277 = vadd.xlane.f32.xlu0 %v1276
        %v1278 = vpop.xlane.xlu0 %1277
        %v1279 = vsel %vm1269, %v1262, 0.0
        %1280 = vadd.xlane.f32.xlu0 %v1279
        %v1281 = vpop.xlane.xlu0 %1280
        %v1282 = vsel %vm1269, %v1263, 0.0
        %1283 = vadd.xlane.f32.xlu0 %v1282
        %v1284 = vpop.xlane.xlu0 %1283
        %v1285 = vsel %vm1269, %v1264, 0.0
        %1286 = vadd.xlane.f32.xlu0 %v1285
        %v1287 = vpop.xlane.xlu0 %1286
        %v1288 = vsel %vm1269, %v1265, 0.0
        %1289 = vadd.xlane.f32.xlu0 %v1288
        %v1290 = vpop.xlane.xlu0 %1289
        %v1291 = vsel %vm1269, %v1266, 0.0
        %1292 = vadd.xlane.f32.xlu0 %v1291
        %v1293 = vpop.xlane.xlu0 %1292
        %v1294 = vrcp.pop 32.0
        %v1295 = vmul.f32 %v1272, %v1294
        %v1296 = vmul.f32 %v1275, %v1294
        %v1297 = vmul.f32 %v1278, %v1294
        %v1298 = vmul.f32 %v1281, %v1294
        %v1299 = vmul.f32 %v1284, %v1294
        %v1300 = vmul.f32 %v1287, %v1294
        %v1301 = vmul.f32 %v1290, %v1294
        %v1302 = vmul.f32 %v1293, %v1294
        %v1303 = vsub.f32 %v1259, %v1295
        %v1304 = vsub.f32 %v1260, %v1296
        %v1305 = vsub.f32 %v1261, %v1297
        %v1306 = vsub.f32 %v1262, %v1298
        %v1307 = vsub.f32 %v1263, %v1299
        %v1308 = vsub.f32 %v1264, %v1300
        %v1309 = vsub.f32 %v1265, %v1301
        %v1310 = vsub.f32 %v1266, %v1302
        %v1311 = vmul.f32 %v1303, %v1303
        %v1312 = vmul.f32 %v1304, %v1304
        %v1313 = vmul.f32 %v1305, %v1305
        %v1314 = vmul.f32 %v1306, %v1306
        %v1315 = vmul.f32 %v1307, %v1307
        %v1316 = vmul.f32 %v1308, %v1308
        %v1317 = vmul.f32 %v1309, %v1309
        %v1318 = vmul.f32 %v1310, %v1310
        %v1319 = vsel %vm1269, %v1311, 0.0
        %1320 = vadd.xlane.f32.xlu0 %v1319
        %v1321 = vpop.xlane.xlu0 %1320
        %v1322 = vsel %vm1269, %v1312, 0.0
        %1323 = vadd.xlane.f32.xlu0 %v1322
        %v1324 = vpop.xlane.xlu0 %1323
        %v1325 = vsel %vm1269, %v1313, 0.0
        %1326 = vadd.xlane.f32.xlu0 %v1325
        %v1327 = vpop.xlane.xlu0 %1326
        %v1328 = vsel %vm1269, %v1314, 0.0
        %1329 = vadd.xlane.f32.xlu0 %v1328
        %v1330 = vpop.xlane.xlu0 %1329
        %v1331 = vsel %vm1269, %v1315, 0.0
        %1332 = vadd.xlane.f32.xlu0 %v1331
        %v1333 = vpop.xlane.xlu0 %1332
        %v1334 = vsel %vm1269, %v1316, 0.0
        %1335 = vadd.xlane.f32.xlu0 %v1334
        %v1336 = vpop.xlane.xlu0 %1335
        %v1337 = vsel %vm1269, %v1317, 0.0
        %1338 = vadd.xlane.f32.xlu0 %v1337
        %v1339 = vpop.xlane.xlu0 %1338
        %v1340 = vsel %vm1269, %v1318, 0.0
        %1341 = vadd.xlane.f32.xlu0 %v1340
        %v1342 = vpop.xlane.xlu0 %1341
        %v1343 = vmul.f32 %v1321, %v1294
        %v1344 = vmul.f32 %v1324, %v1294
        %v1345 = vmul.f32 %v1327, %v1294
        %v1346 = vmul.f32 %v1330, %v1294
        %v1347 = vmul.f32 %v1333, %v1294
        %v1348 = vmul.f32 %v1336, %v1294
        %v1349 = vmul.f32 %v1339, %v1294
        %v1350 = vmul.f32 %v1342, %v1294
        %v1351 = vadd.f32 %v1343, 1e-05
        %v1352 = vadd.f32 %v1344, 1e-05
        %v1353 = vadd.f32 %v1345, 1e-05
        %v1354 = vadd.f32 %v1346, 1e-05
        %v1355 = vadd.f32 %v1347, 1e-05
        %v1356 = vadd.f32 %v1348, 1e-05
        %v1357 = vadd.f32 %v1349, 1e-05
        %v1358 = vadd.f32 %v1350, 1e-05
        %v1359 = vrsqrt.pop %v1351
        %v1360 = vrsqrt.pop %v1352
        %v1361 = vrsqrt.pop %v1353
        %v1362 = vrsqrt.pop %v1354
        %v1363 = vrsqrt.pop %v1355
        %v1364 = vrsqrt.pop %v1356
        %v1365 = vrsqrt.pop %v1357
        %v1366 = vrsqrt.pop %v1358
        %v1367 = vmul.f32 %v1303, %v1359
        %v1368 = vmul.f32 %v1304, %v1360
        %v1369 = vmul.f32 %v1305, %v1361
        %v1370 = vmul.f32 %v1306, %v1362
        %v1371 = vmul.f32 %v1307, %v1363
        %v1372 = vmul.f32 %v1308, %v1364
        %v1373 = vmul.f32 %v1309, %v1365
        %v1374 = vmul.f32 %v1310, %v1366
        %v1376 = vlaneseq
        %v1377 = vshrl.u32 %v1376, 7
        %v1378 = vsub.s32 0, %v1377
        %v1379 = vrot.slane %v1267, %v1378
        %v1381 = vmul.f32 %v1367, %v1379
        %v1382 = vmul.f32 %v1368, %v1379
        %v1383 = vmul.f32 %v1369, %v1379
        %v1384 = vmul.f32 %v1370, %v1379
        %v1385 = vmul.f32 %v1371, %v1379
        %v1386 = vmul.f32 %v1372, %v1379
        %v1387 = vmul.f32 %v1373, %v1379
        %v1388 = vmul.f32 %v1374, %v1379
        %v1390 = vlaneseq
        %v1391 = vshrl.u32 %v1390, 7
        %v1392 = vsub.s32 0, %v1391
        %v1393 = vrot.slane %v1268, %v1392
        %v1395 = vadd.f32 %v1381, %v1393
        %v1396 = vadd.f32 %v1382, %v1393
        %v1397 = vadd.f32 %v1383, %v1393
        %v1398 = vadd.f32 %v1384, %v1393
        %v1399 = vadd.f32 %v1385, %v1393
        %v1400 = vadd.f32 %v1386, %v1393
        %v1401 = vadd.f32 %v1387, %v1393
        %v1402 = vadd.f32 %v1388, %v1393
        %v1403 = vld [vmem:[%s17] sm:$0xf]
        %v1404 = vld [vmem:[%s17 + $0x4] sm:$0xf]
        %v1405 = vld [vmem:[%s17 + $0x8] sm:$0xf]
        %v1406 = vld [vmem:[%s17 + $0xc] sm:$0xf]
        %v1407 = vpack.c.bf16 %v1396, %v1395
        %v1408 = vpack.c.bf16 %v1398, %v1397
        %v1409 = vpack.c.bf16 %v1400, %v1399
        %v1410 = vpack.c.bf16 %v1402, %v1401
        %v1415 = vunpack.c.l.b16 %v1403
        %v1416 = vunpack.c.l.b16 %v1404
        %v1417 = vunpack.c.l.b16 %v1405
        %v1418 = vunpack.c.l.b16 %v1406
        %v1419 = vpack.c.b16 %v1416, %v1415
        %v1420 = vpack.c.b16 %v1418, %v1417
        %v1424 = vsel %vm1269, %v1407, 0
        %v1427 = vsel %vm1269, %v1408, 0
        %v1430 = vsel %vm1269, %v1409, 0
        %v1433 = vsel %vm1269, %v1410, 0
        %1435 = vmatprep.subr.bf16.mxu0 0
        %1436 = vmatpush1.bf16.msra.mxu0 %v1419
        %1437 = vmatprep.subr.bf16.mxu0 0
        %1438 = vmatpush1.bf16.msra.mxu0 %v1420
        %1439 = vmatprep.subr.bf16.mxu0 0
        %1440 = vmatpush1.bf16.msra.mxu0 0
        %1441 = vmatprep.subr.bf16.mxu0 0
        %1442 = vmatpush1.bf16.msra.mxu0 0
        %1443 = vmatprep.subr.bf16.mxu0 0
        %1444 = vmatpush1.bf16.msra.mxu0 0
        %1445 = vmatprep.subr.bf16.mxu0 0
        %1446 = vmatpush1.bf16.msra.mxu0 0
        %1447 = vmatprep.subr.bf16.mxu0 0
        %1448 = vmatpush1.bf16.msra.mxu0 0
        %1449 = vmatprep.subr.bf16.mxu0 0
        %1450 = vmatpush1.bf16.msra.mxu0 0
        %1451 = vmatprep.subr.bf16.mxu0 0
        %1452 = vmatpush1.bf16.msra.mxu0 0
        %1453 = vmatprep.subr.bf16.mxu0 0
        %1454 = vmatpush1.bf16.msra.mxu0 0
        %1455 = vmatprep.subr.bf16.mxu0 0
        %1456 = vmatpush1.bf16.msra.mxu0 0
        %1457 = vmatprep.subr.bf16.mxu0 0
        %1458 = vmatpush1.bf16.msra.mxu0 0
        %1459 = vmatprep.subr.bf16.mxu0 0
        %1460 = vmatpush1.bf16.msra.mxu0 0
        %1461 = vmatprep.subr.bf16.mxu0 0
        %1462 = vmatpush1.bf16.msra.mxu0 0
        %1463 = vmatprep.subr.bf16.mxu0 0
        %1464 = vmatpush1.bf16.msra.mxu0 0
        %1465 = vmatprep.subr.bf16.mxu0 0
        %1466 = vmatpush1.bf16.msra.mxu0 0
        %1467 = vmatprep.mubr.bf16.mxu0 0
        %1468 = vmatmul.mubr.bf16.gmra.mrb[0].mxu0 %v1424
        %v1469 = vpop.f32.mrb[0].mxu0
        %v1470 = vadd.f32 0.0, %v1469
        %v1471 = vpop.f32.mrb[0].mxu0
        %v1472 = vpop.f32.mrb[0].mxu0
        %v1473 = vadd.f32 0.0, %v1472
        %v1474 = vpop.f32.mrb[0].mxu0
        %1475 = vmatprep.mubr.bf16.mxu0 0
        %1476 = vmatmul.mubr.bf16.gmra.mrb[0].mxu0 %v1427
        %v1477 = vpop.f32.mrb[0].mxu0
        %v1478 = vadd.f32 0.0, %v1477
        %v1479 = vpop.f32.mrb[0].mxu0
        %v1480 = vpop.f32.mrb[0].mxu0
        %v1481 = vadd.f32 0.0, %v1480
        %v1482 = vpop.f32.mrb[0].mxu0
        %1483 = vmatprep.mubr.bf16.mxu0 0
        %1484 = vmatmul.mubr.bf16.gmra.mrb[0].mxu0 %v1430
        %v1485 = vpop.f32.mrb[0].mxu0
        %v1486 = vadd.f32 0.0, %v1485
        %v1487 = vpop.f32.mrb[0].mxu0
        %v1488 = vpop.f32.mrb[0].mxu0
        %v1489 = vadd.f32 0.0, %v1488
        %v1490 = vpop.f32.mrb[0].mxu0
        %1491 = vmatprep.mubr.bf16.mxu0 0
        %1492 = vmatmul.mubr.bf16.gmra.mrb[0].mxu0 %v1433
        %v1493 = vpop.f32.mrb[0].mxu0
        %v1494 = vadd.f32 0.0, %v1493
        %v1495 = vpop.f32.mrb[0].mxu0
        %v1496 = vpop.f32.mrb[0].mxu0
        %v1497 = vadd.f32 0.0, %v1496
        %v1498 = vpop.f32.mrb[0].mxu0
        %1499 = vdwg.mxu0
        %v1500 = vpack.c.bf16 %v1473, %v1470
        %v1501 = vpack.c.bf16 %v1481, %v1478
        %v1502 = vpack.c.bf16 %v1489, %v1486
        %v1503 = vpack.c.bf16 %v1497, %v1494
        %1508 = vrot.lane.b32.xlu0 %v1500, 96
        %v1509 = vpop.permute.xlu0 %1508
        %1510 = vrot.lane.b32.xlu0 %v1501, 96
        %v1511 = vpop.permute.xlu0 %1510
        %1512 = vrot.lane.b32.xlu0 %v1502, 96
        %v1513 = vpop.permute.xlu0 %1512
        %1514 = vrot.lane.b32.xlu0 %v1503, 96
        %v1515 = vpop.permute.xlu0 %1514
        %vm1516 = vcmask 64512
        %v1518 = vsel %vm1516, %v1500, 0
        %v1521 = vsel %vm1516, %v1501, 0
        %v1524 = vsel %vm1516, %v1502, 0
        %v1527 = vsel %vm1516, %v1503, 0
        %v1530 = vsel %vm1516, %v1509, 0
        %v1533 = vsel %vm1516, %v1511, 0
        %v1536 = vsel %vm1516, %v1513, 0
        %v1539 = vsel %vm1516, %v1515, 0
        %1541 = vmatprep.subr.bf16.mxu0 0
        %1542 = vmatpush1.bf16.xpose.msra.mxu0 %v1530
        %1543 = vmatprep.subr.bf16.mxu0 0
        %1544 = vmatpush1.bf16.xpose.msra.mxu0 %v1533
        %1545 = vmatprep.subr.bf16.mxu0 0
        %1546 = vmatpush1.bf16.xpose.msra.mxu0 %v1536
        %1547 = vmatprep.subr.bf16.mxu0 0
        %1548 = vmatpush1.bf16.xpose.msra.mxu0 %v1539
        %1549 = vmatprep.subr.bf16.mxu0 0
        %1550 = vmatpush1.bf16.xpose.msra.mxu0 0
        %1551 = vmatprep.subr.bf16.mxu0 0
        %1552 = vmatpush1.bf16.xpose.msra.mxu0 0
        %1553 = vmatprep.subr.bf16.mxu0 0
        %1554 = vmatpush1.bf16.xpose.msra.mxu0 0
        %1555 = vmatprep.subr.bf16.mxu0 0
        %1556 = vmatpush1.bf16.xpose.msra.mxu0 0
        %1557 = vmatprep.subr.bf16.mxu0 0
        %1558 = vmatpush1.bf16.xpose.msra.mxu0 0
        %1559 = vmatprep.subr.bf16.mxu0 0
        %1560 = vmatpush1.bf16.xpose.msra.mxu0 0
        %1561 = vmatprep.subr.bf16.mxu0 0
        %1562 = vmatpush1.bf16.xpose.msra.mxu0 0
        %1563 = vmatprep.subr.bf16.mxu0 0
        %1564 = vmatpush1.bf16.xpose.msra.mxu0 0
        %1565 = vmatprep.subr.bf16.mxu0 0
        %1566 = vmatpush1.bf16.xpose.msra.mxu0 0
        %1567 = vmatprep.subr.bf16.mxu0 0
        %1568 = vmatpush1.bf16.xpose.msra.mxu0 0
        %1569 = vmatprep.subr.bf16.mxu0 0
        %1570 = vmatpush1.bf16.xpose.msra.mxu0 0
        %1571 = vmatprep.subr.bf16.mxu0 0
        %1572 = vmatpush1.bf16.xpose.msra.mxu0 0
        %1573 = vmatprep.mubr.bf16.mxu0 0
        %1574 = vmatmul.mubr.bf16.gmra.mrb[0].mxu0 %v1518
        %v1575 = vpop.f32.mrb[0].mxu0
        %v1576 = vadd.f32 0.0, %v1575
        %v1577 = vpop.f32.mrb[0].mxu0
        %v1578 = vpop.f32.mrb[0].mxu0
        %v1579 = vadd.f32 0.0, %v1578
        %v1580 = vpop.f32.mrb[0].mxu0
        %1581 = vmatprep.mubr.bf16.mxu0 0
        %1582 = vmatmul.mubr.bf16.gmra.mrb[0].mxu0 %v1521
        %v1583 = vpop.f32.mrb[0].mxu0
        %v1584 = vadd.f32 0.0, %v1583
        %v1585 = vpop.f32.mrb[0].mxu0
        %v1586 = vpop.f32.mrb[0].mxu0
        %v1587 = vadd.f32 0.0, %v1586
        %v1588 = vpop.f32.mrb[0].mxu0
        %1589 = vmatprep.mubr.bf16.mxu0 0
        %1590 = vmatmul.mubr.bf16.gmra.mrb[0].mxu0 %v1524
        %v1591 = vpop.f32.mrb[0].mxu0
        %v1592 = vadd.f32 0.0, %v1591
        %v1593 = vpop.f32.mrb[0].mxu0
        %v1594 = vpop.f32.mrb[0].mxu0
        %v1595 = vadd.f32 0.0, %v1594
        %v1596 = vpop.f32.mrb[0].mxu0
        %1597 = vmatprep.mubr.bf16.mxu0 0
        %1598 = vmatmul.mubr.bf16.gmra.mrb[0].mxu0 %v1527
        %v1599 = vpop.f32.mrb[0].mxu0
        %v1600 = vadd.f32 0.0, %v1599
        %v1601 = vpop.f32.mrb[0].mxu0
        %v1602 = vpop.f32.mrb[0].mxu0
        %v1603 = vadd.f32 0.0, %v1602
        %v1604 = vpop.f32.mrb[0].mxu0
        %1605 = vdwg.mxu0
        %v1606 = vsel %vm1174, %v1576, -inf
        %1607 = vmax.xlane.f32.xlu0 %v1606
        %v1608 = vpop.xlane.xlu0 %1607
        %v1609 = vsel %vm1174, %v1579, -inf
        %1610 = vmax.xlane.f32.xlu0 %v1609
        %v1611 = vpop.xlane.xlu0 %1610
        %v1612 = vsel %vm1174, %v1584, -inf
        %1613 = vmax.xlane.f32.xlu0 %v1612
        %v1614 = vpop.xlane.xlu0 %1613
        %v1615 = vsel %vm1174, %v1587, -inf
        %1616 = vmax.xlane.f32.xlu0 %v1615
        %v1617 = vpop.xlane.xlu0 %1616
        %v1618 = vsel %vm1174, %v1592, -inf
        %1619 = vmax.xlane.f32.xlu0 %v1618
        %v1620 = vpop.xlane.xlu0 %1619
        %v1621 = vsel %vm1174, %v1595, -inf
        %1622 = vmax.xlane.f32.xlu0 %v1621
        %v1623 = vpop.xlane.xlu0 %1622
        %v1624 = vsel %vm1174, %v1600, -inf
        %1625 = vmax.xlane.f32.xlu0 %v1624
        %v1626 = vpop.xlane.xlu0 %1625
        %v1627 = vsel %vm1174, %v1603, -inf
        %1628 = vmax.xlane.f32.xlu0 %v1627
        %v1629 = vpop.xlane.xlu0 %1628
        %v1630 = vsub.f32 %v1576, %v1608
        %v1631 = vsub.f32 %v1579, %v1611
        %v1632 = vsub.f32 %v1584, %v1614
        %v1633 = vsub.f32 %v1587, %v1617
        %v1634 = vsub.f32 %v1592, %v1620
        %v1635 = vsub.f32 %v1595, %v1623
        %v1636 = vsub.f32 %v1600, %v1626
        %v1637 = vsub.f32 %v1603, %v1629
        %v1638 = vmul.f32 %v1630, 1.442695
        %v1639 = vpow.pop %v1638
        %v1640 = vmul.f32 %v1631, 1.442695
        %v1641 = vpow.pop %v1640
        %v1642 = vmul.f32 %v1632, 1.442695
        %v1643 = vpow.pop %v1642
        %v1644 = vmul.f32 %v1633, 1.442695
        %v1645 = vpow.pop %v1644
        %v1646 = vmul.f32 %v1634, 1.442695
        %v1647 = vpow.pop %v1646
        %v1648 = vmul.f32 %v1635, 1.442695
        %v1649 = vpow.pop %v1648
        %v1650 = vmul.f32 %v1636, 1.442695
        %v1651 = vpow.pop %v1650
        %v1652 = vmul.f32 %v1637, 1.442695
        %v1653 = vpow.pop %v1652
        %v1654 = vsel %vm1174, %v1639, 0.0
        %1655 = vadd.xlane.f32.xlu0 %v1654
        %v1656 = vpop.xlane.xlu0 %1655
        %v1657 = vsel %vm1174, %v1641, 0.0
        %1658 = vadd.xlane.f32.xlu0 %v1657
        %v1659 = vpop.xlane.xlu0 %1658
        %v1660 = vsel %vm1174, %v1643, 0.0
        %1661 = vadd.xlane.f32.xlu0 %v1660
        %v1662 = vpop.xlane.xlu0 %1661
        %v1663 = vsel %vm1174, %v1645, 0.0
        %1664 = vadd.xlane.f32.xlu0 %v1663
        %v1665 = vpop.xlane.xlu0 %1664
        %v1666 = vsel %vm1174, %v1647, 0.0
        %1667 = vadd.xlane.f32.xlu0 %v1666
        %v1668 = vpop.xlane.xlu0 %1667
        %v1669 = vsel %vm1174, %v1649, 0.0
        %1670 = vadd.xlane.f32.xlu0 %v1669
        %v1671 = vpop.xlane.xlu0 %1670
        %v1672 = vsel %vm1174, %v1651, 0.0
        %1673 = vadd.xlane.f32.xlu0 %v1672
        %v1674 = vpop.xlane.xlu0 %1673
        %v1675 = vsel %vm1174, %v1653, 0.0
        %1676 = vadd.xlane.f32.xlu0 %v1675
        %v1677 = vpop.xlane.xlu0 %1676
        %v1678 = vpack.c.bf16 %v1641, %v1639
        %v1679 = vpack.c.bf16 %v1645, %v1643
        %v1680 = vpack.c.bf16 %v1649, %v1647
        %v1681 = vpack.c.bf16 %v1653, %v1651
        %1682 = vrot.lane.b32.xlu0 %v1500, 64
        %v1683 = vpop.permute.xlu0 %1682
        %1684 = vrot.lane.b32.xlu0 %v1501, 64
        %v1685 = vpop.permute.xlu0 %1684
        %1686 = vrot.lane.b32.xlu0 %v1502, 64
        %v1687 = vpop.permute.xlu0 %1686
        %1688 = vrot.lane.b32.xlu0 %v1503, 64
        %v1689 = vpop.permute.xlu0 %1688
        %v1695 = vsel %vm1174, %v1678, 0
        %v1698 = vsel %vm1174, %v1679, 0
        %v1701 = vsel %vm1174, %v1680, 0
        %v1704 = vsel %vm1174, %v1681, 0
        %1706 = vmatprep.subr.bf16.mxu0 0
        %1707 = vmatpush1.bf16.msra.mxu0 %v1683
        %1708 = vmatprep.subr.bf16.mxu0 0
        %1709 = vmatpush1.bf16.msra.mxu0 %v1685
        %1710 = vmatprep.subr.bf16.mxu0 0
        %1711 = vmatpush1.bf16.msra.mxu0 %v1687
        %1712 = vmatprep.subr.bf16.mxu0 0
        %1713 = vmatpush1.bf16.msra.mxu0 %v1689
        %1714 = vmatprep.subr.bf16.mxu0 0
        %1715 = vmatpush1.bf16.msra.mxu0 0
        %1716 = vmatprep.subr.bf16.mxu0 0
        %1717 = vmatpush1.bf16.msra.mxu0 0
        %1718 = vmatprep.subr.bf16.mxu0 0
        %1719 = vmatpush1.bf16.msra.mxu0 0
        %1720 = vmatprep.subr.bf16.mxu0 0
        %1721 = vmatpush1.bf16.msra.mxu0 0
        %1722 = vmatprep.subr.bf16.mxu0 0
        %1723 = vmatpush1.bf16.msra.mxu0 0
        %1724 = vmatprep.subr.bf16.mxu0 0
        %1725 = vmatpush1.bf16.msra.mxu0 0
        %1726 = vmatprep.subr.bf16.mxu0 0
        %1727 = vmatpush1.bf16.msra.mxu0 0
        %1728 = vmatprep.subr.bf16.mxu0 0
        %1729 = vmatpush1.bf16.msra.mxu0 0
        %1730 = vmatprep.subr.bf16.mxu0 0
        %1731 = vmatpush1.bf16.msra.mxu0 0
        %1732 = vmatprep.subr.bf16.mxu0 0
        %1733 = vmatpush1.bf16.msra.mxu0 0
        %1734 = vmatprep.subr.bf16.mxu0 0
        %1735 = vmatpush1.bf16.msra.mxu0 0
        %1736 = vmatprep.subr.bf16.mxu0 0
        %1737 = vmatpush1.bf16.msra.mxu0 0
        %1738 = vmatprep.mubr.bf16.mxu0 0
        %1739 = vmatmul.mubr.bf16.gmra.mrb[0].mxu0 %v1695
        %v1740 = vpop.f32.mrb[0].mxu0
        %v1741 = vadd.f32 0.0, %v1740
        %v1742 = vpop.f32.mrb[0].mxu0
        %v1743 = vpop.f32.mrb[0].mxu0
        %v1744 = vadd.f32 0.0, %v1743
        %v1745 = vpop.f32.mrb[0].mxu0
        %1746 = vmatprep.mubr.bf16.mxu0 0
        %1747 = vmatmul.mubr.bf16.gmra.mrb[0].mxu0 %v1698
        %v1748 = vpop.f32.mrb[0].mxu0
        %v1749 = vadd.f32 0.0, %v1748
        %v1750 = vpop.f32.mrb[0].mxu0
        %v1751 = vpop.f32.mrb[0].mxu0
        %v1752 = vadd.f32 0.0, %v1751
        %v1753 = vpop.f32.mrb[0].mxu0
        %1754 = vmatprep.mubr.bf16.mxu0 0
        %1755 = vmatmul.mubr.bf16.gmra.mrb[0].mxu0 %v1701
        %v1756 = vpop.f32.mrb[0].mxu0
        %v1757 = vadd.f32 0.0, %v1756
        %v1758 = vpop.f32.mrb[0].mxu0
        %v1759 = vpop.f32.mrb[0].mxu0
        %v1760 = vadd.f32 0.0, %v1759
        %v1761 = vpop.f32.mrb[0].mxu0
        %1762 = vmatprep.mubr.bf16.mxu0 0
        %1763 = vmatmul.mubr.bf16.gmra.mrb[0].mxu0 %v1704
        %v1764 = vpop.f32.mrb[0].mxu0
        %v1765 = vadd.f32 0.0, %v1764
        %v1766 = vpop.f32.mrb[0].mxu0
        %v1767 = vpop.f32.mrb[0].mxu0
        %v1768 = vadd.f32 0.0, %v1767
        %v1769 = vpop.f32.mrb[0].mxu0
        %1770 = vdwg.mxu0
        %v1771 = vrcp.pop %v1656
        %v1772 = vrcp.pop %v1659
        %v1773 = vrcp.pop %v1662
        %v1774 = vrcp.pop %v1665
        %v1775 = vrcp.pop %v1668
        %v1776 = vrcp.pop %v1671
        %v1777 = vrcp.pop %v1674
        %v1778 = vrcp.pop %v1677
        %v1779 = vmul.f32 %v1741, %v1771
        %v1780 = vmul.f32 %v1744, %v1772
        %v1781 = vmul.f32 %v1749, %v1773
        %v1782 = vmul.f32 %v1752, %v1774
        %v1783 = vmul.f32 %v1757, %v1775
        %v1784 = vmul.f32 %v1760, %v1776
        %v1785 = vmul.f32 %v1765, %v1777
        %v1786 = vmul.f32 %v1768, %v1778
        %1787 = vst.msk [vmem:[#allocation2] sm:$0xff] %vm1516, %v1779
        %1788 = vst.msk [vmem:[#allocation2 + $0x8] sm:$0xff] %vm1516, %v1780
        %1789 = vst.msk [vmem:[#allocation2 + $0x10] sm:$0xff] %vm1516, %v1781
        %1790 = vst.msk [vmem:[#allocation2 + $0x18] sm:$0xff] %vm1516, %v1782
        %1791 = vst.msk [vmem:[#allocation2 + $0x20] sm:$0xff] %vm1516, %v1783
        %1792 = vst.msk [vmem:[#allocation2 + $0x28] sm:$0xff] %vm1516, %v1784
        %1793 = vst.msk [vmem:[#allocation2 + $0x30] sm:$0xff] %vm1516, %v1785
        %1794 = vst.msk [vmem:[#allocation2 + $0x38] sm:$0xff] %vm1516, %v1786
        %1795 = vrot.lane.b32.xlu0 %v1500, 120
        %v1796 = vpop.permute.xlu0 %1795
        %1797 = vrot.lane.b32.xlu0 %v1501, 120
        %v1798 = vpop.permute.xlu0 %1797
        %1799 = vrot.lane.b32.xlu0 %v1502, 120
        %v1800 = vpop.permute.xlu0 %1799
        %1801 = vrot.lane.b32.xlu0 %v1503, 120
        %v1802 = vpop.permute.xlu0 %1801
        %1803 = vrot.lane.b32.xlu0 %v1500, 88
        %v1804 = vpop.permute.xlu0 %1803
        %1805 = vrot.lane.b32.xlu0 %v1501, 88
        %v1806 = vpop.permute.xlu0 %1805
        %1807 = vrot.lane.b32.xlu0 %v1502, 88
        %v1808 = vpop.permute.xlu0 %1807
        %1809 = vrot.lane.b32.xlu0 %v1503, 88
        %v1810 = vpop.permute.xlu0 %1809
        %v1812 = vsel %vm1516, %v1796, 0
        %v1815 = vsel %vm1516, %v1798, 0
        %v1818 = vsel %vm1516, %v1800, 0
        %v1821 = vsel %vm1516, %v1802, 0
        %v1824 = vsel %vm1516, %v1804, 0
        %v1827 = vsel %vm1516, %v1806, 0
        %v1830 = vsel %vm1516, %v1808, 0
        %v1833 = vsel %vm1516, %v1810, 0
        %1835 = vmatprep.subr.bf16.mxu0 0
        %1836 = vmatpush1.bf16.xpose.msra.mxu0 %v1824
        %1837 = vmatprep.subr.bf16.mxu0 0
        %1838 = vmatpush1.bf16.xpose.msra.mxu0 %v1827
        %1839 = vmatprep.subr.bf16.mxu0 0
        %1840 = vmatpush1.bf16.xpose.msra.mxu0 %v1830
        %1841 = vmatprep.subr.bf16.mxu0 0
        %1842 = vmatpush1.bf16.xpose.msra.mxu0 %v1833
        %1843 = vmatprep.subr.bf16.mxu0 0
        %1844 = vmatpush1.bf16.xpose.msra.mxu0 0
        %1845 = vmatprep.subr.bf16.mxu0 0
        %1846 = vmatpush1.bf16.xpose.msra.mxu0 0
        %1847 = vmatprep.subr.bf16.mxu0 0
        %1848 = vmatpush1.bf16.xpose.msra.mxu0 0
        %1849 = vmatprep.subr.bf16.mxu0 0
        %1850 = vmatpush1.bf16.xpose.msra.mxu0 0
        %1851 = vmatprep.subr.bf16.mxu0 0
        %1852 = vmatpush1.bf16.xpose.msra.mxu0 0
        %1853 = vmatprep.subr.bf16.mxu0 0
        %1854 = vmatpush1.bf16.xpose.msra.mxu0 0
        %1855 = vmatprep.subr.bf16.mxu0 0
        %1856 = vmatpush1.bf16.xpose.msra.mxu0 0
        %1857 = vmatprep.subr.bf16.mxu0 0
        %1858 = vmatpush1.bf16.xpose.msra.mxu0 0
        %1859 = vmatprep.subr.bf16.mxu0 0
        %1860 = vmatpush1.bf16.xpose.msra.mxu0 0
        %1861 = vmatprep.subr.bf16.mxu0 0
        %1862 = vmatpush1.bf16.xpose.msra.mxu0 0
        %1863 = vmatprep.subr.bf16.mxu0 0
        %1864 = vmatpush1.bf16.xpose.msra.mxu0 0
        %1865 = vmatprep.subr.bf16.mxu0 0
        %1866 = vmatpush1.bf16.xpose.msra.mxu0 0
        %1867 = vmatprep.mubr.bf16.mxu0 0
        %1868 = vmatmul.mubr.bf16.gmra.mrb[0].mxu0 %v1812
        %v1869 = vpop.f32.mrb[0].mxu0
        %v1870 = vadd.f32 0.0, %v1869
        %v1871 = vpop.f32.mrb[0].mxu0
        %v1872 = vpop.f32.mrb[0].mxu0
        %v1873 = vadd.f32 0.0, %v1872
        %v1874 = vpop.f32.mrb[0].mxu0
        %1875 = vmatprep.mubr.bf16.mxu0 0
        %1876 = vmatmul.mubr.bf16.gmra.mrb[0].mxu0 %v1815
        %v1877 = vpop.f32.mrb[0].mxu0
        %v1878 = vadd.f32 0.0, %v1877
        %v1879 = vpop.f32.mrb[0].mxu0
        %v1880 = vpop.f32.mrb[0].mxu0
        %v1881 = vadd.f32 0.0, %v1880
        %v1882 = vpop.f32.mrb[0].mxu0
        %1883 = vmatprep.mubr.bf16.mxu0 0
        %1884 = vmatmul.mubr.bf16.gmra.mrb[0].mxu0 %v1818
        %v1885 = vpop.f32.mrb[0].mxu0
        %v1886 = vadd.f32 0.0, %v1885
        %v1887 = vpop.f32.mrb[0].mxu0
        %v1888 = vpop.f32.mrb[0].mxu0
        %v1889 = vadd.f32 0.0, %v1888
        %v1890 = vpop.f32.mrb[0].mxu0
        %1891 = vmatprep.mubr.bf16.mxu0 0
        %1892 = vmatmul.mubr.bf16.gmra.mrb[0].mxu0 %v1821
        %v1893 = vpop.f32.mrb[0].mxu0
        %v1894 = vadd.f32 0.0, %v1893
        %v1895 = vpop.f32.mrb[0].mxu0
        %v1896 = vpop.f32.mrb[0].mxu0
        %v1897 = vadd.f32 0.0, %v1896
        %v1898 = vpop.f32.mrb[0].mxu0
        %1899 = vdwg.mxu0
        %v1900 = vsel %vm1174, %v1870, -inf
        %1901 = vmax.xlane.f32.xlu0 %v1900
        %v1902 = vpop.xlane.xlu0 %1901
        %v1903 = vsel %vm1174, %v1873, -inf
        %1904 = vmax.xlane.f32.xlu0 %v1903
        %v1905 = vpop.xlane.xlu0 %1904
        %v1906 = vsel %vm1174, %v1878, -inf
        %1907 = vmax.xlane.f32.xlu0 %v1906
        %v1908 = vpop.xlane.xlu0 %1907
        %v1909 = vsel %vm1174, %v1881, -inf
        %1910 = vmax.xlane.f32.xlu0 %v1909
        %v1911 = vpop.xlane.xlu0 %1910
        %v1912 = vsel %vm1174, %v1886, -inf
        %1913 = vmax.xlane.f32.xlu0 %v1912
        %v1914 = vpop.xlane.xlu0 %1913
        %v1915 = vsel %vm1174, %v1889, -inf
        %1916 = vmax.xlane.f32.xlu0 %v1915
        %v1917 = vpop.xlane.xlu0 %1916
        %v1918 = vsel %vm1174, %v1894, -inf
        %1919 = vmax.xlane.f32.xlu0 %v1918
        %v1920 = vpop.xlane.xlu0 %1919
        %v1921 = vsel %vm1174, %v1897, -inf
        %1922 = vmax.xlane.f32.xlu0 %v1921
        %v1923 = vpop.xlane.xlu0 %1922
        %v1924 = vsub.f32 %v1870, %v1902
        %v1925 = vsub.f32 %v1873, %v1905
        %v1926 = vsub.f32 %v1878, %v1908
        %v1927 = vsub.f32 %v1881, %v1911
        %v1928 = vsub.f32 %v1886, %v1914
        %v1929 = vsub.f32 %v1889, %v1917
        %v1930 = vsub.f32 %v1894, %v1920
        %v1931 = vsub.f32 %v1897, %v1923
        %v1932 = vmul.f32 %v1924, 1.442695
        %v1933 = vpow.pop %v1932
        %v1934 = vmul.f32 %v1925, 1.442695
        %v1935 = vpow.pop %v1934
        %v1936 = vmul.f32 %v1926, 1.442695
        %v1937 = vpow.pop %v1936
        %v1938 = vmul.f32 %v1927, 1.442695
        %v1939 = vpow.pop %v1938
        %v1940 = vmul.f32 %v1928, 1.442695
        %v1941 = vpow.pop %v1940
        %v1942 = vmul.f32 %v1929, 1.442695
        %v1943 = vpow.pop %v1942
        %v1944 = vmul.f32 %v1930, 1.442695
        %v1945 = vpow.pop %v1944
        %v1946 = vmul.f32 %v1931, 1.442695
        %v1947 = vpow.pop %v1946
        %v1948 = vsel %vm1174, %v1933, 0.0
        %1949 = vadd.xlane.f32.xlu0 %v1948
        %v1950 = vpop.xlane.xlu0 %1949
        %v1951 = vsel %vm1174, %v1935, 0.0
        %1952 = vadd.xlane.f32.xlu0 %v1951
        %v1953 = vpop.xlane.xlu0 %1952
        %v1954 = vsel %vm1174, %v1937, 0.0
        %1955 = vadd.xlane.f32.xlu0 %v1954
        %v1956 = vpop.xlane.xlu0 %1955
        %v1957 = vsel %vm1174, %v1939, 0.0
        %1958 = vadd.xlane.f32.xlu0 %v1957
        %v1959 = vpop.xlane.xlu0 %1958
        %v1960 = vsel %vm1174, %v1941, 0.0
        %1961 = vadd.xlane.f32.xlu0 %v1960
        %v1962 = vpop.xlane.xlu0 %1961
        %v1963 = vsel %vm1174, %v1943, 0.0
        %1964 = vadd.xlane.f32.xlu0 %v1963
        %v1965 = vpop.xlane.xlu0 %1964
        %v1966 = vsel %vm1174, %v1945, 0.0
        %1967 = vadd.xlane.f32.xlu0 %v1966
        %v1968 = vpop.xlane.xlu0 %1967
        %v1969 = vsel %vm1174, %v1947, 0.0
        %1970 = vadd.xlane.f32.xlu0 %v1969
        %v1971 = vpop.xlane.xlu0 %1970
        %v1972 = vpack.c.bf16 %v1935, %v1933
        %v1973 = vpack.c.bf16 %v1939, %v1937
        %v1974 = vpack.c.bf16 %v1943, %v1941
        %v1975 = vpack.c.bf16 %v1947, %v1945
        %1976 = vrot.lane.b32.xlu0 %v1500, 56
        %v1977 = vpop.permute.xlu0 %1976
        %1978 = vrot.lane.b32.xlu0 %v1501, 56
        %v1979 = vpop.permute.xlu0 %1978
        %1980 = vrot.lane.b32.xlu0 %v1502, 56
        %v1981 = vpop.permute.xlu0 %1980
        %1982 = vrot.lane.b32.xlu0 %v1503, 56
        %v1983 = vpop.permute.xlu0 %1982
        %v1989 = vsel %vm1174, %v1972, 0
        %v1992 = vsel %vm1174, %v1973, 0
        %v1995 = vsel %vm1174, %v1974, 0
        %v1998 = vsel %vm1174, %v1975, 0
        %2000 = vmatprep.subr.bf16.mxu0 0
        %2001 = vmatpush1.bf16.msra.mxu0 %v1977
        %2002 = vmatprep.subr.bf16.mxu0 0
        %2003 = vmatpush1.bf16.msra.mxu0 %v1979
        %2004 = vmatprep.subr.bf16.mxu0 0
        %2005 = vmatpush1.bf16.msra.mxu0 %v1981
        %2006 = vmatprep.subr.bf16.mxu0 0
        %2007 = vmatpush1.bf16.msra.mxu0 %v1983
        %2008 = vmatprep.subr.bf16.mxu0 0
        %2009 = vmatpush1.bf16.msra.mxu0 0
        %2010 = vmatprep.subr.bf16.mxu0 0
        %2011 = vmatpush1.bf16.msra.mxu0 0
        %2012 = vmatprep.subr.bf16.mxu0 0
        %2013 = vmatpush1.bf16.msra.mxu0 0
        %2014 = vmatprep.subr.bf16.mxu0 0
        %2015 = vmatpush1.bf16.msra.mxu0 0
        %2016 = vmatprep.subr.bf16.mxu0 0
        %2017 = vmatpush1.bf16.msra.mxu0 0
        %2018 = vmatprep.subr.bf16.mxu0 0
        %2019 = vmatpush1.bf16.msra.mxu0 0
        %2020 = vmatprep.subr.bf16.mxu0 0
        %2021 = vmatpush1.bf16.msra.mxu0 0
        %2022 = vmatprep.subr.bf16.mxu0 0
        %2023 = vmatpush1.bf16.msra.mxu0 0
        %2024 = vmatprep.subr.bf16.mxu0 0
        %2025 = vmatpush1.bf16.msra.mxu0 0
        %2026 = vmatprep.subr.bf16.mxu0 0
        %2027 = vmatpush1.bf16.msra.mxu0 0
        %2028 = vmatprep.subr.bf16.mxu0 0
        %2029 = vmatpush1.bf16.msra.mxu0 0
        %2030 = vmatprep.subr.bf16.mxu0 0
        %2031 = vmatpush1.bf16.msra.mxu0 0
        %2032 = vmatprep.mubr.bf16.mxu0 0
        %2033 = vmatmul.mubr.bf16.gmra.mrb[0].mxu0 %v1989
        %v2034 = vpop.f32.mrb[0].mxu0
        %v2035 = vadd.f32 0.0, %v2034
        %v2036 = vpop.f32.mrb[0].mxu0
        %v2037 = vpop.f32.mrb[0].mxu0
        %v2038 = vadd.f32 0.0, %v2037
        %v2039 = vpop.f32.mrb[0].mxu0
        %2040 = vmatprep.mubr.bf16.mxu0 0
        %2041 = vmatmul.mubr.bf16.gmra.mrb[0].mxu0 %v1992
        %v2042 = vpop.f32.mrb[0].mxu0
        %v2043 = vadd.f32 0.0, %v2042
        %v2044 = vpop.f32.mrb[0].mxu0
        %v2045 = vpop.f32.mrb[0].mxu0
        %v2046 = vadd.f32 0.0, %v2045
        %v2047 = vpop.f32.mrb[0].mxu0
        %2048 = vmatprep.mubr.bf16.mxu0 0
        %2049 = vmatmul.mubr.bf16.gmra.mrb[0].mxu0 %v1995
        %v2050 = vpop.f32.mrb[0].mxu0
        %v2051 = vadd.f32 0.0, %v2050
        %v2052 = vpop.f32.mrb[0].mxu0
        %v2053 = vpop.f32.mrb[0].mxu0
        %v2054 = vadd.f32 0.0, %v2053
        %v2055 = vpop.f32.mrb[0].mxu0
        %2056 = vmatprep.mubr.bf16.mxu0 0
        %2057 = vmatmul.mubr.bf16.gmra.mrb[0].mxu0 %v1998
        %v2058 = vpop.f32.mrb[0].mxu0
        %v2059 = vadd.f32 0.0, %v2058
        %v2060 = vpop.f32.mrb[0].mxu0
        %v2061 = vpop.f32.mrb[0].mxu0
        %v2062 = vadd.f32 0.0, %v2061
        %v2063 = vpop.f32.mrb[0].mxu0
        %2064 = vdwg.mxu0
        %v2065 = vrcp.pop %v1950
        %v2066 = vrcp.pop %v1953
        %v2067 = vrcp.pop %v1956
        %v2068 = vrcp.pop %v1959
        %v2069 = vrcp.pop %v1962
        %v2070 = vrcp.pop %v1965
        %v2071 = vrcp.pop %v1968
        %v2072 = vrcp.pop %v1971
        %v2073 = vmul.f32 %v2035, %v2065
        %v2074 = vmul.f32 %v2038, %v2066
        %v2075 = vmul.f32 %v2043, %v2067
        %v2076 = vmul.f32 %v2046, %v2068
        %v2077 = vmul.f32 %v2051, %v2069
        %v2078 = vmul.f32 %v2054, %v2070
        %v2079 = vmul.f32 %v2059, %v2071
        %v2080 = vmul.f32 %v2062, %v2072
        %2089 = vrot.lane.b32.xlu0 %v2073, 8
        %v2090 = vpop.permute.xlu0 %2089
        %2091 = vrot.lane.b32.xlu0 %v2074, 8
        %v2092 = vpop.permute.xlu0 %2091
        %2093 = vrot.lane.b32.xlu0 %v2075, 8
        %v2094 = vpop.permute.xlu0 %2093
        %2095 = vrot.lane.b32.xlu0 %v2076, 8
        %v2096 = vpop.permute.xlu0 %2095
        %2097 = vrot.lane.b32.xlu0 %v2077, 8
        %v2098 = vpop.permute.xlu0 %2097
        %2099 = vrot.lane.b32.xlu0 %v2078, 8
        %v2100 = vpop.permute.xlu0 %2099
        %2101 = vrot.lane.b32.xlu0 %v2079, 8
        %v2102 = vpop.permute.xlu0 %2101
        %2103 = vrot.lane.b32.xlu0 %v2080, 8
        %v2104 = vpop.permute.xlu0 %2103
        %vm2113 = vcmask 130112
        %2114 = vst.msk [vmem:[#allocation2] sm:$0xff] %vm2113, %v2090
        %2115 = vst.msk [vmem:[#allocation2 + $0x8] sm:$0xff] %vm2113, %v2092
        %2116 = vst.msk [vmem:[#allocation2 + $0x10] sm:$0xff] %vm2113, %v2094
        %2117 = vst.msk [vmem:[#allocation2 + $0x18] sm:$0xff] %vm2113, %v2096
        %2118 = vst.msk [vmem:[#allocation2 + $0x20] sm:$0xff] %vm2113, %v2098
        %2119 = vst.msk [vmem:[#allocation2 + $0x28] sm:$0xff] %vm2113, %v2100
        %2120 = vst.msk [vmem:[#allocation2 + $0x30] sm:$0xff] %vm2113, %v2102
        %2121 = vst.msk [vmem:[#allocation2 + $0x38] sm:$0xff] %vm2113, %v2104
        %2122 = vrot.lane.b32.xlu0 %v1500, 112
        %v2123 = vpop.permute.xlu0 %2122
        %2124 = vrot.lane.b32.xlu0 %v1501, 112
        %v2125 = vpop.permute.xlu0 %2124
        %2126 = vrot.lane.b32.xlu0 %v1502, 112
        %v2127 = vpop.permute.xlu0 %2126
        %2128 = vrot.lane.b32.xlu0 %v1503, 112
        %v2129 = vpop.permute.xlu0 %2128
        %2130 = vrot.lane.b32.xlu0 %v1500, 80
        %v2131 = vpop.permute.xlu0 %2130
        %2132 = vrot.lane.b32.xlu0 %v1501, 80
        %v2133 = vpop.permute.xlu0 %2132
        %2134 = vrot.lane.b32.xlu0 %v1502, 80
        %v2135 = vpop.permute.xlu0 %2134
        %2136 = vrot.lane.b32.xlu0 %v1503, 80
        %v2137 = vpop.permute.xlu0 %2136
        %v2139 = vsel %vm1516, %v2123, 0
        %v2142 = vsel %vm1516, %v2125, 0
        %v2145 = vsel %vm1516, %v2127, 0
        %v2148 = vsel %vm1516, %v2129, 0
        %v2151 = vsel %vm1516, %v2131, 0
        %v2154 = vsel %vm1516, %v2133, 0
        %v2157 = vsel %vm1516, %v2135, 0
        %v2160 = vsel %vm1516, %v2137, 0
        %2162 = vmatprep.subr.bf16.mxu0 0
        %2163 = vmatpush1.bf16.xpose.msra.mxu0 %v2151
        %2164 = vmatprep.subr.bf16.mxu0 0
        %2165 = vmatpush1.bf16.xpose.msra.mxu0 %v2154
        %2166 = vmatprep.subr.bf16.mxu0 0
        %2167 = vmatpush1.bf16.xpose.msra.mxu0 %v2157
        %2168 = vmatprep.subr.bf16.mxu0 0
        %2169 = vmatpush1.bf16.xpose.msra.mxu0 %v2160
        %2170 = vmatprep.subr.bf16.mxu0 0
        %2171 = vmatpush1.bf16.xpose.msra.mxu0 0
        %2172 = vmatprep.subr.bf16.mxu0 0
        %2173 = vmatpush1.bf16.xpose.msra.mxu0 0
        %2174 = vmatprep.subr.bf16.mxu0 0
        %2175 = vmatpush1.bf16.xpose.msra.mxu0 0
        %2176 = vmatprep.subr.bf16.mxu0 0
        %2177 = vmatpush1.bf16.xpose.msra.mxu0 0
        %2178 = vmatprep.subr.bf16.mxu0 0
        %2179 = vmatpush1.bf16.xpose.msra.mxu0 0
        %2180 = vmatprep.subr.bf16.mxu0 0
        %2181 = vmatpush1.bf16.xpose.msra.mxu0 0
        %2182 = vmatprep.subr.bf16.mxu0 0
        %2183 = vmatpush1.bf16.xpose.msra.mxu0 0
        %2184 = vmatprep.subr.bf16.mxu0 0
        %2185 = vmatpush1.bf16.xpose.msra.mxu0 0
        %2186 = vmatprep.subr.bf16.mxu0 0
        %2187 = vmatpush1.bf16.xpose.msra.mxu0 0
        %2188 = vmatprep.subr.bf16.mxu0 0
        %2189 = vmatpush1.bf16.xpose.msra.mxu0 0
        %2190 = vmatprep.subr.bf16.mxu0 0
        %2191 = vmatpush1.bf16.xpose.msra.mxu0 0
        %2192 = vmatprep.subr.bf16.mxu0 0
        %2193 = vmatpush1.bf16.xpose.msra.mxu0 0
        %2194 = vmatprep.mubr.bf16.mxu0 0
        %2195 = vmatmul.mubr.bf16.gmra.mrb[0].mxu0 %v2139
        %v2196 = vpop.f32.mrb[0].mxu0
        %v2197 = vadd.f32 0.0, %v2196
        %v2198 = vpop.f32.mrb[0].mxu0
        %v2199 = vpop.f32.mrb[0].mxu0
        %v2200 = vadd.f32 0.0, %v2199
        %v2201 = vpop.f32.mrb[0].mxu0
        %2202 = vmatprep.mubr.bf16.mxu0 0
        %2203 = vmatmul.mubr.bf16.gmra.mrb[0].mxu0 %v2142
        %v2204 = vpop.f32.mrb[0].mxu0
        %v2205 = vadd.f32 0.0, %v2204
        %v2206 = vpop.f32.mrb[0].mxu0
        %v2207 = vpop.f32.mrb[0].mxu0
        %v2208 = vadd.f32 0.0, %v2207
        %v2209 = vpop.f32.mrb[0].mxu0
        %2210 = vmatprep.mubr.bf16.mxu0 0
        %2211 = vmatmul.mubr.bf16.gmra.mrb[0].mxu0 %v2145
        %v2212 = vpop.f32.mrb[0].mxu0
        %v2213 = vadd.f32 0.0, %v2212
        %v2214 = vpop.f32.mrb[0].mxu0
        %v2215 = vpop.f32.mrb[0].mxu0
        %v2216 = vadd.f32 0.0, %v2215
        %v2217 = vpop.f32.mrb[0].mxu0
        %2218 = vmatprep.mubr.bf16.mxu0 0
        %2219 = vmatmul.mubr.bf16.gmra.mrb[0].mxu0 %v2148
        %v2220 = vpop.f32.mrb[0].mxu0
        %v2221 = vadd.f32 0.0, %v2220
        %v2222 = vpop.f32.mrb[0].mxu0
        %v2223 = vpop.f32.mrb[0].mxu0
        %v2224 = vadd.f32 0.0, %v2223
        %v2225 = vpop.f32.mrb[0].mxu0
        %2226 = vdwg.mxu0
        %v2227 = vsel %vm1174, %v2197, -inf
        %2228 = vmax.xlane.f32.xlu0 %v2227
        %v2229 = vpop.xlane.xlu0 %2228
        %v2230 = vsel %vm1174, %v2200, -inf
        %2231 = vmax.xlane.f32.xlu0 %v2230
        %v2232 = vpop.xlane.xlu0 %2231
        %v2233 = vsel %vm1174, %v2205, -inf
        %2234 = vmax.xlane.f32.xlu0 %v2233
        %v2235 = vpop.xlane.xlu0 %2234
        %v2236 = vsel %vm1174, %v2208, -inf
        %2237 = vmax.xlane.f32.xlu0 %v2236
        %v2238 = vpop.xlane.xlu0 %2237
        %v2239 = vsel %vm1174, %v2213, -inf
        %2240 = vmax.xlane.f32.xlu0 %v2239
        %v2241 = vpop.xlane.xlu0 %2240
        %v2242 = vsel %vm1174, %v2216, -inf
        %2243 = vmax.xlane.f32.xlu0 %v2242
        %v2244 = vpop.xlane.xlu0 %2243
        %v2245 = vsel %vm1174, %v2221, -inf
        %2246 = vmax.xlane.f32.xlu0 %v2245
        %v2247 = vpop.xlane.xlu0 %2246
        %v2248 = vsel %vm1174, %v2224, -inf
        %2249 = vmax.xlane.f32.xlu0 %v2248
        %v2250 = vpop.xlane.xlu0 %2249
        %v2251 = vsub.f32 %v2197, %v2229
        %v2252 = vsub.f32 %v2200, %v2232
        %v2253 = vsub.f32 %v2205, %v2235
        %v2254 = vsub.f32 %v2208, %v2238
        %v2255 = vsub.f32 %v2213, %v2241
        %v2256 = vsub.f32 %v2216, %v2244
        %v2257 = vsub.f32 %v2221, %v2247
        %v2258 = vsub.f32 %v2224, %v2250
        %v2259 = vmul.f32 %v2251, 1.442695
        %v2260 = vpow.pop %v2259
        %v2261 = vmul.f32 %v2252, 1.442695
        %v2262 = vpow.pop %v2261
        %v2263 = vmul.f32 %v2253, 1.442695
        %v2264 = vpow.pop %v2263
        %v2265 = vmul.f32 %v2254, 1.442695
        %v2266 = vpow.pop %v2265
        %v2267 = vmul.f32 %v2255, 1.442695
        %v2268 = vpow.pop %v2267
        %v2269 = vmul.f32 %v2256, 1.442695
        %v2270 = vpow.pop %v2269
        %v2271 = vmul.f32 %v2257, 1.442695
        %v2272 = vpow.pop %v2271
        %v2273 = vmul.f32 %v2258, 1.442695
        %v2274 = vpow.pop %v2273
        %v2275 = vsel %vm1174, %v2260, 0.0
        %2276 = vadd.xlane.f32.xlu0 %v2275
        %v2277 = vpop.xlane.xlu0 %2276
        %v2278 = vsel %vm1174, %v2262, 0.0
        %2279 = vadd.xlane.f32.xlu0 %v2278
        %v2280 = vpop.xlane.xlu0 %2279
        %v2281 = vsel %vm1174, %v2264, 0.0
        %2282 = vadd.xlane.f32.xlu0 %v2281
        %v2283 = vpop.xlane.xlu0 %2282
        %v2284 = vsel %vm1174, %v2266, 0.0
        %2285 = vadd.xlane.f32.xlu0 %v2284
        %v2286 = vpop.xlane.xlu0 %2285
        %v2287 = vsel %vm1174, %v2268, 0.0
        %2288 = vadd.xlane.f32.xlu0 %v2287
        %v2289 = vpop.xlane.xlu0 %2288
        %v2290 = vsel %vm1174, %v2270, 0.0
        %2291 = vadd.xlane.f32.xlu0 %v2290
        %v2292 = vpop.xlane.xlu0 %2291
        %v2293 = vsel %vm1174, %v2272, 0.0
        %2294 = vadd.xlane.f32.xlu0 %v2293
        %v2295 = vpop.xlane.xlu0 %2294
        %v2296 = vsel %vm1174, %v2274, 0.0
        %2297 = vadd.xlane.f32.xlu0 %v2296
        %v2298 = vpop.xlane.xlu0 %2297
        %v2299 = vpack.c.bf16 %v2262, %v2260
        %v2300 = vpack.c.bf16 %v2266, %v2264
        %v2301 = vpack.c.bf16 %v2270, %v2268
        %v2302 = vpack.c.bf16 %v2274, %v2272
        %2303 = vrot.lane.b32.xlu0 %v1500, 48
        %v2304 = vpop.permute.xlu0 %2303
        %2305 = vrot.lane.b32.xlu0 %v1501, 48
        %v2306 = vpop.permute.xlu0 %2305
        %2307 = vrot.lane.b32.xlu0 %v1502, 48
        %v2308 = vpop.permute.xlu0 %2307
        %2309 = vrot.lane.b32.xlu0 %v1503, 48
        %v2310 = vpop.permute.xlu0 %2309
        %v2316 = vsel %vm1174, %v2299, 0
        %v2319 = vsel %vm1174, %v2300, 0
        %v2322 = vsel %vm1174, %v2301, 0
        %v2325 = vsel %vm1174, %v2302, 0
        %2327 = vmatprep.subr.bf16.mxu0 0
        %2328 = vmatpush1.bf16.msra.mxu0 %v2304
        %2329 = vmatprep.subr.bf16.mxu0 0
        %2330 = vmatpush1.bf16.msra.mxu0 %v2306
        %2331 = vmatprep.subr.bf16.mxu0 0
        %2332 = vmatpush1.bf16.msra.mxu0 %v2308
        %2333 = vmatprep.subr.bf16.mxu0 0
        %2334 = vmatpush1.bf16.msra.mxu0 %v2310
        %2335 = vmatprep.subr.bf16.mxu0 0
        %2336 = vmatpush1.bf16.msra.mxu0 0
        %2337 = vmatprep.subr.bf16.mxu0 0
        %2338 = vmatpush1.bf16.msra.mxu0 0
        %2339 = vmatprep.subr.bf16.mxu0 0
        %2340 = vmatpush1.bf16.msra.mxu0 0
        %2341 = vmatprep.subr.bf16.mxu0 0
        %2342 = vmatpush1.bf16.msra.mxu0 0
        %2343 = vmatprep.subr.bf16.mxu0 0
        %2344 = vmatpush1.bf16.msra.mxu0 0
        %2345 = vmatprep.subr.bf16.mxu0 0
        %2346 = vmatpush1.bf16.msra.mxu0 0
        %2347 = vmatprep.subr.bf16.mxu0 0
        %2348 = vmatpush1.bf16.msra.mxu0 0
        %2349 = vmatprep.subr.bf16.mxu0 0
        %2350 = vmatpush1.bf16.msra.mxu0 0
        %2351 = vmatprep.subr.bf16.mxu0 0
        %2352 = vmatpush1.bf16.msra.mxu0 0
        %2353 = vmatprep.subr.bf16.mxu0 0
        %2354 = vmatpush1.bf16.msra.mxu0 0
        %2355 = vmatprep.subr.bf16.mxu0 0
        %2356 = vmatpush1.bf16.msra.mxu0 0
        %2357 = vmatprep.subr.bf16.mxu0 0
        %2358 = vmatpush1.bf16.msra.mxu0 0
        %2359 = vmatprep.mubr.bf16.mxu0 0
        %2360 = vmatmul.mubr.bf16.gmra.mrb[0].mxu0 %v2316
        %v2361 = vpop.f32.mrb[0].mxu0
        %v2362 = vadd.f32 0.0, %v2361
        %v2363 = vpop.f32.mrb[0].mxu0
        %v2364 = vpop.f32.mrb[0].mxu0
        %v2365 = vadd.f32 0.0, %v2364
        %v2366 = vpop.f32.mrb[0].mxu0
        %2367 = vmatprep.mubr.bf16.mxu0 0
        %2368 = vmatmul.mubr.bf16.gmra.mrb[0].mxu0 %v2319
        %v2369 = vpop.f32.mrb[0].mxu0
        %v2370 = vadd.f32 0.0, %v2369
        %v2371 = vpop.f32.mrb[0].mxu0
        %v2372 = vpop.f32.mrb[0].mxu0
        %v2373 = vadd.f32 0.0, %v2372
        %v2374 = vpop.f32.mrb[0].mxu0
        %2375 = vmatprep.mubr.bf16.mxu0 0
        %2376 = vmatmul.mubr.bf16.gmra.mrb[0].mxu0 %v2322
        %v2377 = vpop.f32.mrb[0].mxu0
        %v2378 = vadd.f32 0.0, %v2377
        %v2379 = vpop.f32.mrb[0].mxu0
        %v2380 = vpop.f32.mrb[0].mxu0
        %v2381 = vadd.f32 0.0, %v2380
        %v2382 = vpop.f32.mrb[0].mxu0
        %2383 = vmatprep.mubr.bf16.mxu0 0
        %2384 = vmatmul.mubr.bf16.gmra.mrb[0].mxu0 %v2325
        %v2385 = vpop.f32.mrb[0].mxu0
        %v2386 = vadd.f32 0.0, %v2385
        %v2387 = vpop.f32.mrb[0].mxu0
        %v2388 = vpop.f32.mrb[0].mxu0
        %v2389 = vadd.f32 0.0, %v2388
        %v2390 = vpop.f32.mrb[0].mxu0
        %2391 = vdwg.mxu0
        %v2392 = vrcp.pop %v2277
        %v2393 = vrcp.pop %v2280
        %v2394 = vrcp.pop %v2283
        %v2395 = vrcp.pop %v2286
        %v2396 = vrcp.pop %v2289
        %v2397 = vrcp.pop %v2292
        %v2398 = vrcp.pop %v2295
        %v2399 = vrcp.pop %v2298
        %v2400 = vmul.f32 %v2362, %v2392
        %v2401 = vmul.f32 %v2365, %v2393
        %v2402 = vmul.f32 %v2370, %v2394
        %v2403 = vmul.f32 %v2373, %v2395
        %v2404 = vmul.f32 %v2378, %v2396
        %v2405 = vmul.f32 %v2381, %v2397
        %v2406 = vmul.f32 %v2386, %v2398
        %v2407 = vmul.f32 %v2389, %v2399
        %2416 = vrot.lane.b32.xlu0 %v2400, 16
        %v2417 = vpop.permute.xlu0 %2416
        %2418 = vrot.lane.b32.xlu0 %v2401, 16
        %v2419 = vpop.permute.xlu0 %2418
        %2420 = vrot.lane.b32.xlu0 %v2402, 16
        %v2421 = vpop.permute.xlu0 %2420
        %2422 = vrot.lane.b32.xlu0 %v2403, 16
        %v2423 = vpop.permute.xlu0 %2422
        %2424 = vrot.lane.b32.xlu0 %v2404, 16
        %v2425 = vpop.permute.xlu0 %2424
        %2426 = vrot.lane.b32.xlu0 %v2405, 16
        %v2427 = vpop.permute.xlu0 %2426
        %2428 = vrot.lane.b32.xlu0 %v2406, 16
        %v2429 = vpop.permute.xlu0 %2428
        %2430 = vrot.lane.b32.xlu0 %v2407, 16
        %v2431 = vpop.permute.xlu0 %2430
        %vm2440 = vcmask 195712
        %2441 = vst.msk [vmem:[#allocation2] sm:$0xff] %vm2440, %v2417
        %2442 = vst.msk [vmem:[#allocation2 + $0x8] sm:$0xff] %vm2440, %v2419
        %2443 = vst.msk [vmem:[#allocation2 + $0x10] sm:$0xff] %vm2440, %v2421
        %2444 = vst.msk [vmem:[#allocation2 + $0x18] sm:$0xff] %vm2440, %v2423
        %2445 = vst.msk [vmem:[#allocation2 + $0x20] sm:$0xff] %vm2440, %v2425
        %2446 = vst.msk [vmem:[#allocation2 + $0x28] sm:$0xff] %vm2440, %v2427
        %2447 = vst.msk [vmem:[#allocation2 + $0x30] sm:$0xff] %vm2440, %v2429
        %2448 = vst.msk [vmem:[#allocation2 + $0x38] sm:$0xff] %vm2440, %v2431
        %2449 = vrot.lane.b32.xlu0 %v1500, 104
        %v2450 = vpop.permute.xlu0 %2449
        %2451 = vrot.lane.b32.xlu0 %v1501, 104
        %v2452 = vpop.permute.xlu0 %2451
        %2453 = vrot.lane.b32.xlu0 %v1502, 104
        %v2454 = vpop.permute.xlu0 %2453
        %2455 = vrot.lane.b32.xlu0 %v1503, 104
        %v2456 = vpop.permute.xlu0 %2455
        %2457 = vrot.lane.b32.xlu0 %v1500, 72
        %v2458 = vpop.permute.xlu0 %2457
        %2459 = vrot.lane.b32.xlu0 %v1501, 72
        %v2460 = vpop.permute.xlu0 %2459
        %2461 = vrot.lane.b32.xlu0 %v1502, 72
        %v2462 = vpop.permute.xlu0 %2461
        %2463 = vrot.lane.b32.xlu0 %v1503, 72
        %v2464 = vpop.permute.xlu0 %2463
        %v2466 = vsel %vm1516, %v2450, 0
        %v2469 = vsel %vm1516, %v2452, 0
        %v2472 = vsel %vm1516, %v2454, 0
        %v2475 = vsel %vm1516, %v2456, 0
        %v2478 = vsel %vm1516, %v2458, 0
        %v2481 = vsel %vm1516, %v2460, 0
        %v2484 = vsel %vm1516, %v2462, 0
        %v2487 = vsel %vm1516, %v2464, 0
        %2489 = vmatprep.subr.bf16.mxu0 0
        %2490 = vmatpush1.bf16.xpose.msra.mxu0 %v2478
        %2491 = vmatprep.subr.bf16.mxu0 0
        %2492 = vmatpush1.bf16.xpose.msra.mxu0 %v2481
        %2493 = vmatprep.subr.bf16.mxu0 0
        %2494 = vmatpush1.bf16.xpose.msra.mxu0 %v2484
        %2495 = vmatprep.subr.bf16.mxu0 0
        %2496 = vmatpush1.bf16.xpose.msra.mxu0 %v2487
        %2497 = vmatprep.subr.bf16.mxu0 0
        %2498 = vmatpush1.bf16.xpose.msra.mxu0 0
        %2499 = vmatprep.subr.bf16.mxu0 0
        %2500 = vmatpush1.bf16.xpose.msra.mxu0 0
        %2501 = vmatprep.subr.bf16.mxu0 0
        %2502 = vmatpush1.bf16.xpose.msra.mxu0 0
        %2503 = vmatprep.subr.bf16.mxu0 0
        %2504 = vmatpush1.bf16.xpose.msra.mxu0 0
        %2505 = vmatprep.subr.bf16.mxu0 0
        %2506 = vmatpush1.bf16.xpose.msra.mxu0 0
        %2507 = vmatprep.subr.bf16.mxu0 0
        %2508 = vmatpush1.bf16.xpose.msra.mxu0 0
        %2509 = vmatprep.subr.bf16.mxu0 0
        %2510 = vmatpush1.bf16.xpose.msra.mxu0 0
        %2511 = vmatprep.subr.bf16.mxu0 0
        %2512 = vmatpush1.bf16.xpose.msra.mxu0 0
        %2513 = vmatprep.subr.bf16.mxu0 0
        %2514 = vmatpush1.bf16.xpose.msra.mxu0 0
        %2515 = vmatprep.subr.bf16.mxu0 0
        %2516 = vmatpush1.bf16.xpose.msra.mxu0 0
        %2517 = vmatprep.subr.bf16.mxu0 0
        %2518 = vmatpush1.bf16.xpose.msra.mxu0 0
        %2519 = vmatprep.subr.bf16.mxu0 0
        %2520 = vmatpush1.bf16.xpose.msra.mxu0 0
        %2521 = vmatprep.mubr.bf16.mxu0 0
        %2522 = vmatmul.mubr.bf16.gmra.mrb[0].mxu0 %v2466
        %v2523 = vpop.f32.mrb[0].mxu0
        %v2524 = vadd.f32 0.0, %v2523
        %v2525 = vpop.f32.mrb[0].mxu0
        %v2526 = vpop.f32.mrb[0].mxu0
        %v2527 = vadd.f32 0.0, %v2526
        %v2528 = vpop.f32.mrb[0].mxu0
        %2529 = vmatprep.mubr.bf16.mxu0 0
        %2530 = vmatmul.mubr.bf16.gmra.mrb[0].mxu0 %v2469
        %v2531 = vpop.f32.mrb[0].mxu0
        %v2532 = vadd.f32 0.0, %v2531
        %v2533 = vpop.f32.mrb[0].mxu0
        %v2534 = vpop.f32.mrb[0].mxu0
        %v2535 = vadd.f32 0.0, %v2534
        %v2536 = vpop.f32.mrb[0].mxu0
        %2537 = vmatprep.mubr.bf16.mxu0 0
        %2538 = vmatmul.mubr.bf16.gmra.mrb[0].mxu0 %v2472
        %v2539 = vpop.f32.mrb[0].mxu0
        %v2540 = vadd.f32 0.0, %v2539
        %v2541 = vpop.f32.mrb[0].mxu0
        %v2542 = vpop.f32.mrb[0].mxu0
        %v2543 = vadd.f32 0.0, %v2542
        %v2544 = vpop.f32.mrb[0].mxu0
        %2545 = vmatprep.mubr.bf16.mxu0 0
        %2546 = vmatmul.mubr.bf16.gmra.mrb[0].mxu0 %v2475
        %v2547 = vpop.f32.mrb[0].mxu0
        %v2548 = vadd.f32 0.0, %v2547
        %v2549 = vpop.f32.mrb[0].mxu0
        %v2550 = vpop.f32.mrb[0].mxu0
        %v2551 = vadd.f32 0.0, %v2550
        %v2552 = vpop.f32.mrb[0].mxu0
        %2553 = vdwg.mxu0
        %v2554 = vsel %vm1174, %v2524, -inf
        %2555 = vmax.xlane.f32.xlu0 %v2554
        %v2556 = vpop.xlane.xlu0 %2555
        %v2557 = vsel %vm1174, %v2527, -inf
        %2558 = vmax.xlane.f32.xlu0 %v2557
        %v2559 = vpop.xlane.xlu0 %2558
        %v2560 = vsel %vm1174, %v2532, -inf
        %2561 = vmax.xlane.f32.xlu0 %v2560
        %v2562 = vpop.xlane.xlu0 %2561
        %v2563 = vsel %vm1174, %v2535, -inf
        %2564 = vmax.xlane.f32.xlu0 %v2563
        %v2565 = vpop.xlane.xlu0 %2564
        %v2566 = vsel %vm1174, %v2540, -inf
        %2567 = vmax.xlane.f32.xlu0 %v2566
        %v2568 = vpop.xlane.xlu0 %2567
        %v2569 = vsel %vm1174, %v2543, -inf
        %2570 = vmax.xlane.f32.xlu0 %v2569
        %v2571 = vpop.xlane.xlu0 %2570
        %v2572 = vsel %vm1174, %v2548, -inf
        %2573 = vmax.xlane.f32.xlu0 %v2572
        %v2574 = vpop.xlane.xlu0 %2573
        %v2575 = vsel %vm1174, %v2551, -inf
        %2576 = vmax.xlane.f32.xlu0 %v2575
        %v2577 = vpop.xlane.xlu0 %2576
        %v2578 = vsub.f32 %v2524, %v2556
        %v2579 = vsub.f32 %v2527, %v2559
        %v2580 = vsub.f32 %v2532, %v2562
        %v2581 = vsub.f32 %v2535, %v2565
        %v2582 = vsub.f32 %v2540, %v2568
        %v2583 = vsub.f32 %v2543, %v2571
        %v2584 = vsub.f32 %v2548, %v2574
        %v2585 = vsub.f32 %v2551, %v2577
        %v2586 = vmul.f32 %v2578, 1.442695
        %v2587 = vpow.pop %v2586
        %v2588 = vmul.f32 %v2579, 1.442695
        %v2589 = vpow.pop %v2588
        %v2590 = vmul.f32 %v2580, 1.442695
        %v2591 = vpow.pop %v2590
        %v2592 = vmul.f32 %v2581, 1.442695
        %v2593 = vpow.pop %v2592
        %v2594 = vmul.f32 %v2582, 1.442695
        %v2595 = vpow.pop %v2594
        %v2596 = vmul.f32 %v2583, 1.442695
        %v2597 = vpow.pop %v2596
        %v2598 = vmul.f32 %v2584, 1.442695
        %v2599 = vpow.pop %v2598
        %v2600 = vmul.f32 %v2585, 1.442695
        %v2601 = vpow.pop %v2600
        %v2602 = vsel %vm1174, %v2587, 0.0
        %2603 = vadd.xlane.f32.xlu0 %v2602
        %v2604 = vpop.xlane.xlu0 %2603
        %v2605 = vsel %vm1174, %v2589, 0.0
        %2606 = vadd.xlane.f32.xlu0 %v2605
        %v2607 = vpop.xlane.xlu0 %2606
        %v2608 = vsel %vm1174, %v2591, 0.0
        %2609 = vadd.xlane.f32.xlu0 %v2608
        %v2610 = vpop.xlane.xlu0 %2609
        %v2611 = vsel %vm1174, %v2593, 0.0
        %2612 = vadd.xlane.f32.xlu0 %v2611
        %v2613 = vpop.xlane.xlu0 %2612
        %v2614 = vsel %vm1174, %v2595, 0.0
        %2615 = vadd.xlane.f32.xlu0 %v2614
        %v2616 = vpop.xlane.xlu0 %2615
        %v2617 = vsel %vm1174, %v2597, 0.0
        %2618 = vadd.xlane.f32.xlu0 %v2617
        %v2619 = vpop.xlane.xlu0 %2618
        %v2620 = vsel %vm1174, %v2599, 0.0
        %2621 = vadd.xlane.f32.xlu0 %v2620
        %v2622 = vpop.xlane.xlu0 %2621
        %v2623 = vsel %vm1174, %v2601, 0.0
        %2624 = vadd.xlane.f32.xlu0 %v2623
        %v2625 = vpop.xlane.xlu0 %2624
        %v2626 = vpack.c.bf16 %v2589, %v2587
        %v2627 = vpack.c.bf16 %v2593, %v2591
        %v2628 = vpack.c.bf16 %v2597, %v2595
        %v2629 = vpack.c.bf16 %v2601, %v2599
        %2630 = vrot.lane.b32.xlu0 %v1500, 40
        %v2631 = vpop.permute.xlu0 %2630
        %2632 = vrot.lane.b32.xlu0 %v1501, 40
        %v2633 = vpop.permute.xlu0 %2632
        %2634 = vrot.lane.b32.xlu0 %v1502, 40
        %v2635 = vpop.permute.xlu0 %2634
        %2636 = vrot.lane.b32.xlu0 %v1503, 40
        %v2637 = vpop.permute.xlu0 %2636
        %v2643 = vsel %vm1174, %v2626, 0
        %v2646 = vsel %vm1174, %v2627, 0
        %v2649 = vsel %vm1174, %v2628, 0
        %v2652 = vsel %vm1174, %v2629, 0
        %2654 = vmatprep.subr.bf16.mxu0 0
        %2655 = vmatpush1.bf16.msra.mxu0 %v2631
        %2656 = vmatprep.subr.bf16.mxu0 0
        %2657 = vmatpush1.bf16.msra.mxu0 %v2633
        %2658 = vmatprep.subr.bf16.mxu0 0
        %2659 = vmatpush1.bf16.msra.mxu0 %v2635
        %2660 = vmatprep.subr.bf16.mxu0 0
        %2661 = vmatpush1.bf16.msra.mxu0 %v2637
        %2662 = vmatprep.subr.bf16.mxu0 0
        %2663 = vmatpush1.bf16.msra.mxu0 0
        %2664 = vmatprep.subr.bf16.mxu0 0
        %2665 = vmatpush1.bf16.msra.mxu0 0
        %2666 = vmatprep.subr.bf16.mxu0 0
        %2667 = vmatpush1.bf16.msra.mxu0 0
        %2668 = vmatprep.subr.bf16.mxu0 0
        %2669 = vmatpush1.bf16.msra.mxu0 0
        %2670 = vmatprep.subr.bf16.mxu0 0
        %2671 = vmatpush1.bf16.msra.mxu0 0
        %2672 = vmatprep.subr.bf16.mxu0 0
        %2673 = vmatpush1.bf16.msra.mxu0 0
        %2674 = vmatprep.subr.bf16.mxu0 0
        %2675 = vmatpush1.bf16.msra.mxu0 0
        %2676 = vmatprep.subr.bf16.mxu0 0
        %2677 = vmatpush1.bf16.msra.mxu0 0
        %2678 = vmatprep.subr.bf16.mxu0 0
        %2679 = vmatpush1.bf16.msra.mxu0 0
        %2680 = vmatprep.subr.bf16.mxu0 0
        %2681 = vmatpush1.bf16.msra.mxu0 0
        %2682 = vmatprep.subr.bf16.mxu0 0
        %2683 = vmatpush1.bf16.msra.mxu0 0
        %2684 = vmatprep.subr.bf16.mxu0 0
        %2685 = vmatpush1.bf16.msra.mxu0 0
        %2686 = vmatprep.mubr.bf16.mxu0 0
        %2687 = vmatmul.mubr.bf16.gmra.mrb[0].mxu0 %v2643
        %v2688 = vpop.f32.mrb[0].mxu0
        %v2689 = vadd.f32 0.0, %v2688
        %v2690 = vpop.f32.mrb[0].mxu0
        %v2691 = vpop.f32.mrb[0].mxu0
        %v2692 = vadd.f32 0.0, %v2691
        %v2693 = vpop.f32.mrb[0].mxu0
        %2694 = vmatprep.mubr.bf16.mxu0 0
        %2695 = vmatmul.mubr.bf16.gmra.mrb[0].mxu0 %v2646
        %v2696 = vpop.f32.mrb[0].mxu0
        %v2697 = vadd.f32 0.0, %v2696
        %v2698 = vpop.f32.mrb[0].mxu0
        %v2699 = vpop.f32.mrb[0].mxu0
        %v2700 = vadd.f32 0.0, %v2699
        %v2701 = vpop.f32.mrb[0].mxu0
        %2702 = vmatprep.mubr.bf16.mxu0 0
        %2703 = vmatmul.mubr.bf16.gmra.mrb[0].mxu0 %v2649
        %v2704 = vpop.f32.mrb[0].mxu0
        %v2705 = vadd.f32 0.0, %v2704
        %v2706 = vpop.f32.mrb[0].mxu0
        %v2707 = vpop.f32.mrb[0].mxu0
        %v2708 = vadd.f32 0.0, %v2707
        %v2709 = vpop.f32.mrb[0].mxu0
        %2710 = vmatprep.mubr.bf16.mxu0 0
        %2711 = vmatmul.mubr.bf16.gmra.mrb[0].mxu0 %v2652
        %v2712 = vpop.f32.mrb[0].mxu0
        %v2713 = vadd.f32 0.0, %v2712
        %v2714 = vpop.f32.mrb[0].mxu0
        %v2715 = vpop.f32.mrb[0].mxu0
        %v2716 = vadd.f32 0.0, %v2715
        %v2717 = vpop.f32.mrb[0].mxu0
        %2718 = vdwg.mxu0
        %v2719 = vrcp.pop %v2604
        %v2720 = vrcp.pop %v2607
        %v2721 = vrcp.pop %v2610
        %v2722 = vrcp.pop %v2613
        %v2723 = vrcp.pop %v2616
        %v2724 = vrcp.pop %v2619
        %v2725 = vrcp.pop %v2622
        %v2726 = vrcp.pop %v2625
        %v2727 = vmul.f32 %v2689, %v2719
        %v2728 = vmul.f32 %v2692, %v2720
        %v2729 = vmul.f32 %v2697, %v2721
        %v2730 = vmul.f32 %v2700, %v2722
        %v2731 = vmul.f32 %v2705, %v2723
        %v2732 = vmul.f32 %v2708, %v2724
        %v2733 = vmul.f32 %v2713, %v2725
        %v2734 = vmul.f32 %v2716, %v2726
        %2743 = vrot.lane.b32.xlu0 %v2727, 24
        %v2744 = vpop.permute.xlu0 %2743
        %2745 = vrot.lane.b32.xlu0 %v2728, 24
        %v2746 = vpop.permute.xlu0 %2745
        %2747 = vrot.lane.b32.xlu0 %v2729, 24
        %v2748 = vpop.permute.xlu0 %2747
        %2749 = vrot.lane.b32.xlu0 %v2730, 24
        %v2750 = vpop.permute.xlu0 %2749
        %2751 = vrot.lane.b32.xlu0 %v2731, 24
        %v2752 = vpop.permute.xlu0 %2751
        %2753 = vrot.lane.b32.xlu0 %v2732, 24
        %v2754 = vpop.permute.xlu0 %2753
        %2755 = vrot.lane.b32.xlu0 %v2733, 24
        %v2756 = vpop.permute.xlu0 %2755
        %2757 = vrot.lane.b32.xlu0 %v2734, 24
        %v2758 = vpop.permute.xlu0 %2757
        %vm2767 = vcmask 261312
        %2768 = vst.msk [vmem:[#allocation2] sm:$0xff] %vm2767, %v2744
        %2769 = vst.msk [vmem:[#allocation2 + $0x8] sm:$0xff] %vm2767, %v2746
        %2770 = vst.msk [vmem:[#allocation2 + $0x10] sm:$0xff] %vm2767, %v2748
        %2771 = vst.msk [vmem:[#allocation2 + $0x18] sm:$0xff] %vm2767, %v2750
        %2772 = vst.msk [vmem:[#allocation2 + $0x20] sm:$0xff] %vm2767, %v2752
        %2773 = vst.msk [vmem:[#allocation2 + $0x28] sm:$0xff] %vm2767, %v2754
        %2774 = vst.msk [vmem:[#allocation2 + $0x30] sm:$0xff] %vm2767, %v2756
        %2775 = vst.msk [vmem:[#allocation2 + $0x38] sm:$0xff] %vm2767, %v2758
        %v2776 = vld [vmem:[#allocation2] sm:$0xff]
        %v2777 = vld [vmem:[#allocation2 + $0x8] sm:$0xff]
        %v2778 = vld [vmem:[#allocation2 + $0x10] sm:$0xff]
        %v2779 = vld [vmem:[#allocation2 + $0x18] sm:$0xff]
        %v2780 = vld [vmem:[#allocation2 + $0x20] sm:$0xff]
        %v2781 = vld [vmem:[#allocation2 + $0x28] sm:$0xff]
        %v2782 = vld [vmem:[#allocation2 + $0x30] sm:$0xff]
        %v2783 = vld [vmem:[#allocation2 + $0x38] sm:$0xff]
        %v2784 = vld [vmem:[%s19] sm:$0xf]
        %v2785 = vld [vmem:[%s19 + $0x4] sm:$0xf]
        %v2786 = vld [vmem:[%s19 + $0x8] sm:$0xf]
        %v2787 = vld [vmem:[%s19 + $0xc] sm:$0xf]
        %v2788 = vpack.c.bf16 %v2777, %v2776
        %v2789 = vpack.c.bf16 %v2779, %v2778
        %v2790 = vpack.c.bf16 %v2781, %v2780
        %v2791 = vpack.c.bf16 %v2783, %v2782
        %v2792 = vld [vmem:[%s21] sm:$0x1]
        %v2794 = vlaneseq
        %v2795 = vshrl.u32 %v2794, 7
        %v2796 = vsub.s32 0, %v2795
        %v2797 = vrot.slane %v2792, %v2796
        %v2803 = vunpack.c.l.b16 %v2784
        %v2804 = vunpack.c.l.b16 %v2785
        %v2805 = vunpack.c.l.b16 %v2786
        %v2806 = vunpack.c.l.b16 %v2787
        %v2807 = vpack.c.b16 %v2804, %v2803
        %v2808 = vpack.c.b16 %v2806, %v2805
        %v2812 = vsel %vm1269, %v2788, 0
        %v2815 = vsel %vm1269, %v2789, 0
        %v2818 = vsel %vm1269, %v2790, 0
        %v2821 = vsel %vm1269, %v2791, 0
        %2823 = vmatprep.subr.bf16.mxu0 0
        %2824 = vmatpush1.bf16.msra.mxu0 %v2807
        %2825 = vmatprep.subr.bf16.mxu0 0
        %2826 = vmatpush1.bf16.msra.mxu0 %v2808
        %2827 = vmatprep.subr.bf16.mxu0 0
        %2828 = vmatpush1.bf16.msra.mxu0 0
        %2829 = vmatprep.subr.bf16.mxu0 0
        %2830 = vmatpush1.bf16.msra.mxu0 0
        %2831 = vmatprep.subr.bf16.mxu0 0
        %2832 = vmatpush1.bf16.msra.mxu0 0
        %2833 = vmatprep.subr.bf16.mxu0 0
        %2834 = vmatpush1.bf16.msra.mxu0 0
        %2835 = vmatprep.subr.bf16.mxu0 0
        %2836 = vmatpush1.bf16.msra.mxu0 0
        %2837 = vmatprep.subr.bf16.mxu0 0
        %2838 = vmatpush1.bf16.msra.mxu0 0
        %2839 = vmatprep.subr.bf16.mxu0 0
        %2840 = vmatpush1.bf16.msra.mxu0 0
        %2841 = vmatprep.subr.bf16.mxu0 0
        %2842 = vmatpush1.bf16.msra.mxu0 0
        %2843 = vmatprep.subr.bf16.mxu0 0
        %2844 = vmatpush1.bf16.msra.mxu0 0
        %2845 = vmatprep.subr.bf16.mxu0 0
        %2846 = vmatpush1.bf16.msra.mxu0 0
        %2847 = vmatprep.subr.bf16.mxu0 0
        %2848 = vmatpush1.bf16.msra.mxu0 0
        %2849 = vmatprep.subr.bf16.mxu0 0
        %2850 = vmatpush1.bf16.msra.mxu0 0
        %2851 = vmatprep.subr.bf16.mxu0 0
        %2852 = vmatpush1.bf16.msra.mxu0 0
        %2853 = vmatprep.subr.bf16.mxu0 0
        %2854 = vmatpush1.bf16.msra.mxu0 0
        %2855 = vmatprep.mubr.bf16.mxu0 0
        %2856 = vmatmul.mubr.bf16.gmra.mrb[0].mxu0 %v2812
        %v2857 = vpop.f32.mrb[0].mxu0
        %v2858 = vadd.f32 %v2797, %v2857
        %v2859 = vpop.f32.mrb[0].mxu0
        %v2860 = vpop.f32.mrb[0].mxu0
        %v2861 = vadd.f32 %v2797, %v2860
        %v2862 = vpop.f32.mrb[0].mxu0
        %2863 = vmatprep.mubr.bf16.mxu0 0
        %2864 = vmatmul.mubr.bf16.gmra.mrb[0].mxu0 %v2815
        %v2865 = vpop.f32.mrb[0].mxu0
        %v2866 = vadd.f32 %v2797, %v2865
        %v2867 = vpop.f32.mrb[0].mxu0
        %v2868 = vpop.f32.mrb[0].mxu0
        %v2869 = vadd.f32 %v2797, %v2868
        %v2870 = vpop.f32.mrb[0].mxu0
        %2871 = vmatprep.mubr.bf16.mxu0 0
        %2872 = vmatmul.mubr.bf16.gmra.mrb[0].mxu0 %v2818
        %v2873 = vpop.f32.mrb[0].mxu0
        %v2874 = vadd.f32 %v2797, %v2873
        %v2875 = vpop.f32.mrb[0].mxu0
        %v2876 = vpop.f32.mrb[0].mxu0
        %v2877 = vadd.f32 %v2797, %v2876
        %v2878 = vpop.f32.mrb[0].mxu0
        %2879 = vmatprep.mubr.bf16.mxu0 0
        %2880 = vmatmul.mubr.bf16.gmra.mrb[0].mxu0 %v2821
        %v2881 = vpop.f32.mrb[0].mxu0
        %v2882 = vadd.f32 %v2797, %v2881
        %v2883 = vpop.f32.mrb[0].mxu0
        %v2884 = vpop.f32.mrb[0].mxu0
        %v2885 = vadd.f32 %v2797, %v2884
        %v2886 = vpop.f32.mrb[0].mxu0
        %2887 = vdwg.mxu0
        %v2888 = vadd.f32 %v2858, %v1259
        %v2889 = vadd.f32 %v2861, %v1260
        %v2890 = vadd.f32 %v2866, %v1261
        %v2891 = vadd.f32 %v2869, %v1262
        %v2892 = vadd.f32 %v2874, %v1263
        %v2893 = vadd.f32 %v2877, %v1264
        %v2894 = vadd.f32 %v2882, %v1265
        %v2895 = vadd.f32 %v2885, %v1266
        %v2896 = vld [vmem:[%s23] sm:$0x1]
        %v2897 = vld [vmem:[%s25] sm:$0x1]
        %v2898 = vsel %vm1269, %v2888, 0.0
        %2899 = vadd.xlane.f32.xlu0 %v2898
        %v2900 = vpop.xlane.xlu0 %2899
        %v2901 = vsel %vm1269, %v2889, 0.0
        %2902 = vadd.xlane.f32.xlu0 %v2901
        %v2903 = vpop.xlane.xlu0 %2902
        %v2904 = vsel %vm1269, %v2890, 0.0
        %2905 = vadd.xlane.f32.xlu0 %v2904
        %v2906 = vpop.xlane.xlu0 %2905
        %v2907 = vsel %vm1269, %v2891, 0.0
        %2908 = vadd.xlane.f32.xlu0 %v2907
        %v2909 = vpop.xlane.xlu0 %2908
        %v2910 = vsel %vm1269, %v2892, 0.0
        %2911 = vadd.xlane.f32.xlu0 %v2910
        %v2912 = vpop.xlane.xlu0 %2911
        %v2913 = vsel %vm1269, %v2893, 0.0
        %2914 = vadd.xlane.f32.xlu0 %v2913
        %v2915 = vpop.xlane.xlu0 %2914
        %v2916 = vsel %vm1269, %v2894, 0.0
        %2917 = vadd.xlane.f32.xlu0 %v2916
        %v2918 = vpop.xlane.xlu0 %2917
        %v2919 = vsel %vm1269, %v2895, 0.0
        %2920 = vadd.xlane.f32.xlu0 %v2919
        %v2921 = vpop.xlane.xlu0 %2920
        %v2922 = vmul.f32 %v2900, %v1294
        %v2923 = vmul.f32 %v2903, %v1294
        %v2924 = vmul.f32 %v2906, %v1294
        %v2925 = vmul.f32 %v2909, %v1294
        %v2926 = vmul.f32 %v2912, %v1294
        %v2927 = vmul.f32 %v2915, %v1294
        %v2928 = vmul.f32 %v2918, %v1294
        %v2929 = vmul.f32 %v2921, %v1294
        %v2930 = vsub.f32 %v2888, %v2922
        %v2931 = vsub.f32 %v2889, %v2923
        %v2932 = vsub.f32 %v2890, %v2924
        %v2933 = vsub.f32 %v2891, %v2925
        %v2934 = vsub.f32 %v2892, %v2926
        %v2935 = vsub.f32 %v2893, %v2927
        %v2936 = vsub.f32 %v2894, %v2928
        %v2937 = vsub.f32 %v2895, %v2929
        %v2938 = vmul.f32 %v2930, %v2930
        %v2939 = vmul.f32 %v2931, %v2931
        %v2940 = vmul.f32 %v2932, %v2932
        %v2941 = vmul.f32 %v2933, %v2933
        %v2942 = vmul.f32 %v2934, %v2934
        %v2943 = vmul.f32 %v2935, %v2935
        %v2944 = vmul.f32 %v2936, %v2936
        %v2945 = vmul.f32 %v2937, %v2937
        %v2946 = vsel %vm1269, %v2938, 0.0
        %2947 = vadd.xlane.f32.xlu0 %v2946
        %v2948 = vpop.xlane.xlu0 %2947
        %v2949 = vsel %vm1269, %v2939, 0.0
        %2950 = vadd.xlane.f32.xlu0 %v2949
        %v2951 = vpop.xlane.xlu0 %2950
        %v2952 = vsel %vm1269, %v2940, 0.0
        %2953 = vadd.xlane.f32.xlu0 %v2952
        %v2954 = vpop.xlane.xlu0 %2953
        %v2955 = vsel %vm1269, %v2941, 0.0
        %2956 = vadd.xlane.f32.xlu0 %v2955
        %v2957 = vpop.xlane.xlu0 %2956
        %v2958 = vsel %vm1269, %v2942, 0.0
        %2959 = vadd.xlane.f32.xlu0 %v2958
        %v2960 = vpop.xlane.xlu0 %2959
        %v2961 = vsel %vm1269, %v2943, 0.0
        %2962 = vadd.xlane.f32.xlu0 %v2961
        %v2963 = vpop.xlane.xlu0 %2962
        %v2964 = vsel %vm1269, %v2944, 0.0
        %2965 = vadd.xlane.f32.xlu0 %v2964
        %v2966 = vpop.xlane.xlu0 %2965
        %v2967 = vsel %vm1269, %v2945, 0.0
        %2968 = vadd.xlane.f32.xlu0 %v2967
        %v2969 = vpop.xlane.xlu0 %2968
        %v2970 = vmul.f32 %v2948, %v1294
        %v2971 = vmul.f32 %v2951, %v1294
        %v2972 = vmul.f32 %v2954, %v1294
        %v2973 = vmul.f32 %v2957, %v1294
        %v2974 = vmul.f32 %v2960, %v1294
        %v2975 = vmul.f32 %v2963, %v1294
        %v2976 = vmul.f32 %v2966, %v1294
        %v2977 = vmul.f32 %v2969, %v1294
        %v2978 = vadd.f32 %v2970, 1e-05
        %v2979 = vadd.f32 %v2971, 1e-05
        %v2980 = vadd.f32 %v2972, 1e-05
        %v2981 = vadd.f32 %v2973, 1e-05
        %v2982 = vadd.f32 %v2974, 1e-05
        %v2983 = vadd.f32 %v2975, 1e-05
        %v2984 = vadd.f32 %v2976, 1e-05
        %v2985 = vadd.f32 %v2977, 1e-05
        %v2986 = vrsqrt.pop %v2978
        %v2987 = vrsqrt.pop %v2979
        %v2988 = vrsqrt.pop %v2980
        %v2989 = vrsqrt.pop %v2981
        %v2990 = vrsqrt.pop %v2982
        %v2991 = vrsqrt.pop %v2983
        %v2992 = vrsqrt.pop %v2984
        %v2993 = vrsqrt.pop %v2985
        %v2994 = vmul.f32 %v2930, %v2986
        %v2995 = vmul.f32 %v2931, %v2987
        %v2996 = vmul.f32 %v2932, %v2988
        %v2997 = vmul.f32 %v2933, %v2989
        %v2998 = vmul.f32 %v2934, %v2990
        %v2999 = vmul.f32 %v2935, %v2991
        %v3000 = vmul.f32 %v2936, %v2992
        %v3001 = vmul.f32 %v2937, %v2993
        %v3003 = vlaneseq
        %v3004 = vshrl.u32 %v3003, 7
        %v3005 = vsub.s32 0, %v3004
        %v3006 = vrot.slane %v2896, %v3005
        %v3008 = vmul.f32 %v2994, %v3006
        %v3009 = vmul.f32 %v2995, %v3006
        %v3010 = vmul.f32 %v2996, %v3006
        %v3011 = vmul.f32 %v2997, %v3006
        %v3012 = vmul.f32 %v2998, %v3006
        %v3013 = vmul.f32 %v2999, %v3006
        %v3014 = vmul.f32 %v3000, %v3006
        %v3015 = vmul.f32 %v3001, %v3006
        %v3017 = vlaneseq
        %v3018 = vshrl.u32 %v3017, 7
        %v3019 = vsub.s32 0, %v3018
        %v3020 = vrot.slane %v2897, %v3019
        %v3022 = vadd.f32 %v3008, %v3020
        %v3023 = vadd.f32 %v3009, %v3020
        %v3024 = vadd.f32 %v3010, %v3020
        %v3025 = vadd.f32 %v3011, %v3020
        %v3026 = vadd.f32 %v3012, %v3020
        %v3027 = vadd.f32 %v3013, %v3020
        %v3028 = vadd.f32 %v3014, %v3020
        %v3029 = vadd.f32 %v3015, %v3020
        %v3030 = vld [vmem:[%s27] sm:$0xf]
        %v3031 = vld [vmem:[%s27 + $0x4] sm:$0xf]
        %v3032 = vld [vmem:[%s27 + $0x8] sm:$0xf]
        %v3033 = vld [vmem:[%s27 + $0xc] sm:$0xf]
        %v3034 = vpack.c.bf16 %v3023, %v3022
        %v3035 = vpack.c.bf16 %v3025, %v3024
        %v3036 = vpack.c.bf16 %v3027, %v3026
        %v3037 = vpack.c.bf16 %v3029, %v3028
        %v3038 = vld [vmem:[%s29] sm:$0x1]
        %v3040 = vlaneseq
        %v3041 = vshrl.u32 %v3040, 7
        %v3042 = vsub.s32 0, %v3041
        %v3043 = vrot.slane %v3038, %v3042
        %v3049 = vunpack.c.l.b16 %v3030
        %v3050 = vunpack.c.l.b16 %v3031
        %v3051 = vunpack.c.l.b16 %v3032
        %v3052 = vunpack.c.l.b16 %v3033
        %v3053 = vpack.c.b16 %v3050, %v3049
        %v3054 = vpack.c.b16 %v3052, %v3051
        %v3058 = vsel %vm1269, %v3034, 0
        %v3061 = vsel %vm1269, %v3035, 0
        %v3064 = vsel %vm1269, %v3036, 0
        %v3067 = vsel %vm1269, %v3037, 0
        %3069 = vmatprep.subr.bf16.mxu0 0
        %3070 = vmatpush1.bf16.msra.mxu0 %v3053
        %3071 = vmatprep.subr.bf16.mxu0 0
        %3072 = vmatpush1.bf16.msra.mxu0 %v3054
        %3073 = vmatprep.subr.bf16.mxu0 0
        %3074 = vmatpush1.bf16.msra.mxu0 0
        %3075 = vmatprep.subr.bf16.mxu0 0
        %3076 = vmatpush1.bf16.msra.mxu0 0
        %3077 = vmatprep.subr.bf16.mxu0 0
        %3078 = vmatpush1.bf16.msra.mxu0 0
        %3079 = vmatprep.subr.bf16.mxu0 0
        %3080 = vmatpush1.bf16.msra.mxu0 0
        %3081 = vmatprep.subr.bf16.mxu0 0
        %3082 = vmatpush1.bf16.msra.mxu0 0
        %3083 = vmatprep.subr.bf16.mxu0 0
        %3084 = vmatpush1.bf16.msra.mxu0 0
        %3085 = vmatprep.subr.bf16.mxu0 0
        %3086 = vmatpush1.bf16.msra.mxu0 0
        %3087 = vmatprep.subr.bf16.mxu0 0
        %3088 = vmatpush1.bf16.msra.mxu0 0
        %3089 = vmatprep.subr.bf16.mxu0 0
        %3090 = vmatpush1.bf16.msra.mxu0 0
        %3091 = vmatprep.subr.bf16.mxu0 0
        %3092 = vmatpush1.bf16.msra.mxu0 0
        %3093 = vmatprep.subr.bf16.mxu0 0
        %3094 = vmatpush1.bf16.msra.mxu0 0
        %3095 = vmatprep.subr.bf16.mxu0 0
        %3096 = vmatpush1.bf16.msra.mxu0 0
        %3097 = vmatprep.subr.bf16.mxu0 0
        %3098 = vmatpush1.bf16.msra.mxu0 0
        %3099 = vmatprep.subr.bf16.mxu0 0
        %3100 = vmatpush1.bf16.msra.mxu0 0
        %3101 = vmatprep.mubr.bf16.mxu0 0
        %3102 = vmatmul.mubr.bf16.gmra.mrb[0].mxu0 %v3058
        %v3103 = vpop.f32.mrb[0].mxu0
        %v3104 = vadd.f32 %v3043, %v3103
        %v3105 = vpop.f32.mrb[0].mxu0
        %v3106 = vpop.f32.mrb[0].mxu0
        %v3107 = vadd.f32 %v3043, %v3106
        %v3108 = vpop.f32.mrb[0].mxu0
        %3109 = vmatprep.mubr.bf16.mxu0 0
        %3110 = vmatmul.mubr.bf16.gmra.mrb[0].mxu0 %v3061
        %v3111 = vpop.f32.mrb[0].mxu0
        %v3112 = vadd.f32 %v3043, %v3111
        %v3113 = vpop.f32.mrb[0].mxu0
        %v3114 = vpop.f32.mrb[0].mxu0
        %v3115 = vadd.f32 %v3043, %v3114
        %v3116 = vpop.f32.mrb[0].mxu0
        %3117 = vmatprep.mubr.bf16.mxu0 0
        %3118 = vmatmul.mubr.bf16.gmra.mrb[0].mxu0 %v3064
        %v3119 = vpop.f32.mrb[0].mxu0
        %v3120 = vadd.f32 %v3043, %v3119
        %v3121 = vpop.f32.mrb[0].mxu0
        %v3122 = vpop.f32.mrb[0].mxu0
        %v3123 = vadd.f32 %v3043, %v3122
        %v3124 = vpop.f32.mrb[0].mxu0
        %3125 = vmatprep.mubr.bf16.mxu0 0
        %3126 = vmatmul.mubr.bf16.gmra.mrb[0].mxu0 %v3067
        %v3127 = vpop.f32.mrb[0].mxu0
        %v3128 = vadd.f32 %v3043, %v3127
        %v3129 = vpop.f32.mrb[0].mxu0
        %v3130 = vpop.f32.mrb[0].mxu0
        %v3131 = vadd.f32 %v3043, %v3130
        %v3132 = vpop.f32.mrb[0].mxu0
        %3133 = vdwg.mxu0
        %v3134 = vmul.f32 %v3104, 0.5
        %v3135 = vmul.f32 %v3107, 0.5
        %v3136 = vmul.f32 %v3112, 0.5
        %v3137 = vmul.f32 %v3115, 0.5
        %v3138 = vmul.f32 %v3120, 0.5
        %v3139 = vmul.f32 %v3123, 0.5
        %v3140 = vmul.f32 %v3128, 0.5
        %v3141 = vmul.f32 %v3131, 0.5
        %v3142 = vmul.f32 %v3104, 0.70710677
        %v3143 = vmul.f32 %v3107, 0.70710677
        %v3144 = vmul.f32 %v3112, 0.70710677
        %v3145 = vmul.f32 %v3115, 0.70710677
        %v3146 = vmul.f32 %v3120, 0.70710677
        %v3147 = vmul.f32 %v3123, 0.70710677
        %v3148 = vmul.f32 %v3128, 0.70710677
        %v3149 = vmul.f32 %v3131, 0.70710677
        %v3150 = verf.f32.pop %v3142
        %v3151 = verf.f32.pop %v3143
        %v3152 = verf.f32.pop %v3144
        %v3153 = verf.f32.pop %v3145
        %v3154 = verf.f32.pop %v3146
        %v3155 = verf.f32.pop %v3147
        %v3156 = verf.f32.pop %v3148
        %v3157 = verf.f32.pop %v3149
        %v3158 = vadd.f32 %v3150, 1.0
        %v3159 = vadd.f32 %v3151, 1.0
        %v3160 = vadd.f32 %v3152, 1.0
        %v3161 = vadd.f32 %v3153, 1.0
        %v3162 = vadd.f32 %v3154, 1.0
        %v3163 = vadd.f32 %v3155, 1.0
        %v3164 = vadd.f32 %v3156, 1.0
        %v3165 = vadd.f32 %v3157, 1.0
        %v3166 = vmul.f32 %v3134, %v3158
        %v3167 = vmul.f32 %v3135, %v3159
        %v3168 = vmul.f32 %v3136, %v3160
        %v3169 = vmul.f32 %v3137, %v3161
        %v3170 = vmul.f32 %v3138, %v3162
        %v3171 = vmul.f32 %v3139, %v3163
        %v3172 = vmul.f32 %v3140, %v3164
        %v3173 = vmul.f32 %v3141, %v3165
        %v3174 = vld [vmem:[%s31] sm:$0xf]
        %v3175 = vld [vmem:[%s31 + $0x4] sm:$0xf]
        %v3176 = vld [vmem:[%s31 + $0x8] sm:$0xf]
        %v3177 = vld [vmem:[%s31 + $0xc] sm:$0xf]
        %v3178 = vld [vmem:[%s31 + $0x10] sm:$0xf]
        %v3179 = vld [vmem:[%s31 + $0x14] sm:$0xf]
        %v3180 = vld [vmem:[%s31 + $0x18] sm:$0xf]
        %v3181 = vld [vmem:[%s31 + $0x1c] sm:$0xf]
        %v3182 = vld [vmem:[%s31 + $0x20] sm:$0xf]
        %v3183 = vld [vmem:[%s31 + $0x24] sm:$0xf]
        %v3184 = vld [vmem:[%s31 + $0x28] sm:$0xf]
        %v3185 = vld [vmem:[%s31 + $0x2c] sm:$0xf]
        %v3186 = vld [vmem:[%s31 + $0x30] sm:$0xf]
        %v3187 = vld [vmem:[%s31 + $0x34] sm:$0xf]
        %v3188 = vld [vmem:[%s31 + $0x38] sm:$0xf]
        %v3189 = vld [vmem:[%s31 + $0x3c] sm:$0xf]
        %v3190 = vpack.c.bf16 %v3167, %v3166
        %v3191 = vpack.c.bf16 %v3169, %v3168
        %v3192 = vpack.c.bf16 %v3171, %v3170
        %v3193 = vpack.c.bf16 %v3173, %v3172
        %v3194 = vld [vmem:[%s33] sm:$0x1]
        %v3196 = vlaneseq
        %v3197 = vshrl.u32 %v3196, 7
        %v3198 = vsub.s32 0, %v3197
        %v3199 = vrot.slane %v3194, %v3198
        %v3217 = vunpack.c.l.b16 %v3174
        %v3218 = vunpack.c.l.b16 %v3175
        %v3219 = vunpack.c.l.b16 %v3176
        %v3220 = vunpack.c.l.b16 %v3177
        %v3221 = vunpack.c.l.b16 %v3178
        %v3222 = vunpack.c.l.b16 %v3179
        %v3223 = vunpack.c.l.b16 %v3180
        %v3224 = vunpack.c.l.b16 %v3181
        %v3225 = vunpack.c.l.b16 %v3182
        %v3226 = vunpack.c.l.b16 %v3183
        %v3227 = vunpack.c.l.b16 %v3184
        %v3228 = vunpack.c.l.b16 %v3185
        %v3229 = vunpack.c.l.b16 %v3186
        %v3230 = vunpack.c.l.b16 %v3187
        %v3231 = vunpack.c.l.b16 %v3188
        %v3232 = vunpack.c.l.b16 %v3189
        %v3233 = vpack.c.b16 %v3218, %v3217
        %v3234 = vpack.c.b16 %v3220, %v3219
        %v3235 = vpack.c.b16 %v3222, %v3221
        %v3236 = vpack.c.b16 %v3224, %v3223
        %v3237 = vpack.c.b16 %v3226, %v3225
        %v3238 = vpack.c.b16 %v3228, %v3227
        %v3239 = vpack.c.b16 %v3230, %v3229
        %v3240 = vpack.c.b16 %v3232, %v3231
        %3249 = vmatprep.subr.bf16.mxu0 0
        %3250 = vmatpush1.bf16.msra.mxu0 %v3233
        %3251 = vmatprep.subr.bf16.mxu0 0
        %3252 = vmatpush1.bf16.msra.mxu0 %v3234
        %3253 = vmatprep.subr.bf16.mxu0 0
        %3254 = vmatpush1.bf16.msra.mxu0 %v3235
        %3255 = vmatprep.subr.bf16.mxu0 0
        %3256 = vmatpush1.bf16.msra.mxu0 %v3236
        %3257 = vmatprep.subr.bf16.mxu0 0
        %3258 = vmatpush1.bf16.msra.mxu0 %v3237
        %3259 = vmatprep.subr.bf16.mxu0 0
        %3260 = vmatpush1.bf16.msra.mxu0 %v3238
        %3261 = vmatprep.subr.bf16.mxu0 0
        %3262 = vmatpush1.bf16.msra.mxu0 %v3239
        %3263 = vmatprep.subr.bf16.mxu0 0
        %3264 = vmatpush1.bf16.msra.mxu0 %v3240
        %3265 = vmatprep.subr.bf16.mxu0 0
        %3266 = vmatpush1.bf16.msra.mxu0 0
        %3267 = vmatprep.subr.bf16.mxu0 0
        %3268 = vmatpush1.bf16.msra.mxu0 0
        %3269 = vmatprep.subr.bf16.mxu0 0
        %3270 = vmatpush1.bf16.msra.mxu0 0
        %3271 = vmatprep.subr.bf16.mxu0 0
        %3272 = vmatpush1.bf16.msra.mxu0 0
        %3273 = vmatprep.subr.bf16.mxu0 0
        %3274 = vmatpush1.bf16.msra.mxu0 0
        %3275 = vmatprep.subr.bf16.mxu0 0
        %3276 = vmatpush1.bf16.msra.mxu0 0
        %3277 = vmatprep.subr.bf16.mxu0 0
        %3278 = vmatpush1.bf16.msra.mxu0 0
        %3279 = vmatprep.subr.bf16.mxu0 0
        %3280 = vmatpush1.bf16.msra.mxu0 0
        %3281 = vmatprep.mubr.bf16.mxu0 0
        %3282 = vmatmul.mubr.bf16.gmra.mrb[0].mxu0 %v3190
        %v3283 = vpop.f32.mrb[0].mxu0
        %v3284 = vadd.f32 %v3199, %v3283
        %v3285 = vpop.f32.mrb[0].mxu0
        %v3286 = vpop.f32.mrb[0].mxu0
        %v3287 = vadd.f32 %v3199, %v3286
        %v3288 = vpop.f32.mrb[0].mxu0
        %3289 = vmatprep.mubr.bf16.mxu0 0
        %3290 = vmatmul.mubr.bf16.gmra.mrb[0].mxu0 %v3191
        %v3291 = vpop.f32.mrb[0].mxu0
        %v3292 = vadd.f32 %v3199, %v3291
        %v3293 = vpop.f32.mrb[0].mxu0
        %v3294 = vpop.f32.mrb[0].mxu0
        %v3295 = vadd.f32 %v3199, %v3294
        %v3296 = vpop.f32.mrb[0].mxu0
        %3297 = vmatprep.mubr.bf16.mxu0 0
        %3298 = vmatmul.mubr.bf16.gmra.mrb[0].mxu0 %v3192
        %v3299 = vpop.f32.mrb[0].mxu0
        %v3300 = vadd.f32 %v3199, %v3299
        %v3301 = vpop.f32.mrb[0].mxu0
        %v3302 = vpop.f32.mrb[0].mxu0
        %v3303 = vadd.f32 %v3199, %v3302
        %v3304 = vpop.f32.mrb[0].mxu0
        %3305 = vmatprep.mubr.bf16.mxu0 0
        %3306 = vmatmul.mubr.bf16.gmra.mrb[0].mxu0 %v3193
        %v3307 = vpop.f32.mrb[0].mxu0
        %v3308 = vadd.f32 %v3199, %v3307
        %v3309 = vpop.f32.mrb[0].mxu0
        %v3310 = vpop.f32.mrb[0].mxu0
        %v3311 = vadd.f32 %v3199, %v3310
        %v3312 = vpop.f32.mrb[0].mxu0
        %3313 = vdwg.mxu0
        %v3314 = vadd.f32 %v3284, %v2888
        %v3315 = vadd.f32 %v3287, %v2889
        %v3316 = vadd.f32 %v3292, %v2890
        %v3317 = vadd.f32 %v3295, %v2891
        %v3318 = vadd.f32 %v3300, %v2892
        %v3319 = vadd.f32 %v3303, %v2893
        %v3320 = vadd.f32 %v3308, %v2894
        %v3321 = vadd.f32 %v3311, %v2895
        %v3322 = vld [vmem:[%s35] sm:$0x1]
        %v3323 = vld [vmem:[%s37] sm:$0x1]
        %v3324 = vsel %vm1269, %v3314, 0.0
        %3325 = vadd.xlane.f32.xlu0 %v3324
        %v3326 = vpop.xlane.xlu0 %3325
        %v3327 = vsel %vm1269, %v3315, 0.0
        %3328 = vadd.xlane.f32.xlu0 %v3327
        %v3329 = vpop.xlane.xlu0 %3328
        %v3330 = vsel %vm1269, %v3316, 0.0
        %3331 = vadd.xlane.f32.xlu0 %v3330
        %v3332 = vpop.xlane.xlu0 %3331
        %v3333 = vsel %vm1269, %v3317, 0.0
        %3334 = vadd.xlane.f32.xlu0 %v3333
        %v3335 = vpop.xlane.xlu0 %3334
        %v3336 = vsel %vm1269, %v3318, 0.0
        %3337 = vadd.xlane.f32.xlu0 %v3336
        %v3338 = vpop.xlane.xlu0 %3337
        %v3339 = vsel %vm1269, %v3319, 0.0
        %3340 = vadd.xlane.f32.xlu0 %v3339
        %v3341 = vpop.xlane.xlu0 %3340
        %v3342 = vsel %vm1269, %v3320, 0.0
        %3343 = vadd.xlane.f32.xlu0 %v3342
        %v3344 = vpop.xlane.xlu0 %3343
        %v3345 = vsel %vm1269, %v3321, 0.0
        %3346 = vadd.xlane.f32.xlu0 %v3345
        %v3347 = vpop.xlane.xlu0 %3346
        %v3348 = vmul.f32 %v3326, %v1294
        %v3349 = vmul.f32 %v3329, %v1294
        %v3350 = vmul.f32 %v3332, %v1294
        %v3351 = vmul.f32 %v3335, %v1294
        %v3352 = vmul.f32 %v3338, %v1294
        %v3353 = vmul.f32 %v3341, %v1294
        %v3354 = vmul.f32 %v3344, %v1294
        %v3355 = vmul.f32 %v3347, %v1294
        %v3356 = vsub.f32 %v3314, %v3348
        %v3357 = vsub.f32 %v3315, %v3349
        %v3358 = vsub.f32 %v3316, %v3350
        %v3359 = vsub.f32 %v3317, %v3351
        %v3360 = vsub.f32 %v3318, %v3352
        %v3361 = vsub.f32 %v3319, %v3353
        %v3362 = vsub.f32 %v3320, %v3354
        %v3363 = vsub.f32 %v3321, %v3355
        %v3364 = vmul.f32 %v3356, %v3356
        %v3365 = vmul.f32 %v3357, %v3357
        %v3366 = vmul.f32 %v3358, %v3358
        %v3367 = vmul.f32 %v3359, %v3359
        %v3368 = vmul.f32 %v3360, %v3360
        %v3369 = vmul.f32 %v3361, %v3361
        %v3370 = vmul.f32 %v3362, %v3362
        %v3371 = vmul.f32 %v3363, %v3363
        %v3372 = vsel %vm1269, %v3364, 0.0
        %3373 = vadd.xlane.f32.xlu0 %v3372
        %v3374 = vpop.xlane.xlu0 %3373
        %v3375 = vsel %vm1269, %v3365, 0.0
        %3376 = vadd.xlane.f32.xlu0 %v3375
        %v3377 = vpop.xlane.xlu0 %3376
        %v3378 = vsel %vm1269, %v3366, 0.0
        %3379 = vadd.xlane.f32.xlu0 %v3378
        %v3380 = vpop.xlane.xlu0 %3379
        %v3381 = vsel %vm1269, %v3367, 0.0
        %3382 = vadd.xlane.f32.xlu0 %v3381
        %v3383 = vpop.xlane.xlu0 %3382
        %v3384 = vsel %vm1269, %v3368, 0.0
        %3385 = vadd.xlane.f32.xlu0 %v3384
        %v3386 = vpop.xlane.xlu0 %3385
        %v3387 = vsel %vm1269, %v3369, 0.0
        %3388 = vadd.xlane.f32.xlu0 %v3387
        %v3389 = vpop.xlane.xlu0 %3388
        %v3390 = vsel %vm1269, %v3370, 0.0
        %3391 = vadd.xlane.f32.xlu0 %v3390
        %v3392 = vpop.xlane.xlu0 %3391
        %v3393 = vsel %vm1269, %v3371, 0.0
        %3394 = vadd.xlane.f32.xlu0 %v3393
        %v3395 = vpop.xlane.xlu0 %3394
        %v3396 = vmul.f32 %v3374, %v1294
        %v3397 = vmul.f32 %v3377, %v1294
        %v3398 = vmul.f32 %v3380, %v1294
        %v3399 = vmul.f32 %v3383, %v1294
        %v3400 = vmul.f32 %v3386, %v1294
        %v3401 = vmul.f32 %v3389, %v1294
        %v3402 = vmul.f32 %v3392, %v1294
        %v3403 = vmul.f32 %v3395, %v1294
        %v3404 = vadd.f32 %v3396, 1e-05
        %v3405 = vadd.f32 %v3397, 1e-05
        %v3406 = vadd.f32 %v3398, 1e-05
        %v3407 = vadd.f32 %v3399, 1e-05
        %v3408 = vadd.f32 %v3400, 1e-05
        %v3409 = vadd.f32 %v3401, 1e-05
        %v3410 = vadd.f32 %v3402, 1e-05
        %v3411 = vadd.f32 %v3403, 1e-05
        %v3412 = vrsqrt.pop %v3404
        %v3413 = vrsqrt.pop %v3405
        %v3414 = vrsqrt.pop %v3406
        %v3415 = vrsqrt.pop %v3407
        %v3416 = vrsqrt.pop %v3408
        %v3417 = vrsqrt.pop %v3409
        %v3418 = vrsqrt.pop %v3410
        %v3419 = vrsqrt.pop %v3411
        %v3420 = vmul.f32 %v3356, %v3412
        %v3421 = vmul.f32 %v3357, %v3413
        %v3422 = vmul.f32 %v3358, %v3414
        %v3423 = vmul.f32 %v3359, %v3415
        %v3424 = vmul.f32 %v3360, %v3416
        %v3425 = vmul.f32 %v3361, %v3417
        %v3426 = vmul.f32 %v3362, %v3418
        %v3427 = vmul.f32 %v3363, %v3419
        %v3429 = vlaneseq
        %v3430 = vshrl.u32 %v3429, 7
        %v3431 = vsub.s32 0, %v3430
        %v3432 = vrot.slane %v3322, %v3431
        %v3434 = vmul.f32 %v3420, %v3432
        %v3435 = vmul.f32 %v3421, %v3432
        %v3436 = vmul.f32 %v3422, %v3432
        %v3437 = vmul.f32 %v3423, %v3432
        %v3438 = vmul.f32 %v3424, %v3432
        %v3439 = vmul.f32 %v3425, %v3432
        %v3440 = vmul.f32 %v3426, %v3432
        %v3441 = vmul.f32 %v3427, %v3432
        %v3443 = vlaneseq
        %v3444 = vshrl.u32 %v3443, 7
        %v3445 = vsub.s32 0, %v3444
        %v3446 = vrot.slane %v3323, %v3445
        %v3448 = vadd.f32 %v3434, %v3446
        %v3449 = vadd.f32 %v3435, %v3446
        %v3450 = vadd.f32 %v3436, %v3446
        %v3451 = vadd.f32 %v3437, %v3446
        %v3452 = vadd.f32 %v3438, %v3446
        %v3453 = vadd.f32 %v3439, %v3446
        %v3454 = vadd.f32 %v3440, %v3446
        %v3455 = vadd.f32 %v3441, %v3446
        %v3456 = vld [vmem:[%s39] sm:$0xf]
        %v3457 = vld [vmem:[%s39 + $0x4] sm:$0xf]
        %v3458 = vld [vmem:[%s39 + $0x8] sm:$0xf]
        %v3459 = vld [vmem:[%s39 + $0xc] sm:$0xf]
        %v3460 = vpack.c.bf16 %v3449, %v3448
        %v3461 = vpack.c.bf16 %v3451, %v3450
        %v3462 = vpack.c.bf16 %v3453, %v3452
        %v3463 = vpack.c.bf16 %v3455, %v3454
        %v3468 = vunpack.c.l.b16 %v3456
        %v3469 = vunpack.c.l.b16 %v3457
        %v3470 = vunpack.c.l.b16 %v3458
        %v3471 = vunpack.c.l.b16 %v3459
        %v3472 = vpack.c.b16 %v3469, %v3468
        %v3473 = vpack.c.b16 %v3471, %v3470
        %v3477 = vsel %vm1269, %v3460, 0
        %v3480 = vsel %vm1269, %v3461, 0
        %v3483 = vsel %vm1269, %v3462, 0
        %v3486 = vsel %vm1269, %v3463, 0
        %3488 = vmatprep.subr.bf16.mxu0 0
        %3489 = vmatpush1.bf16.msra.mxu0 %v3472
        %3490 = vmatprep.subr.bf16.mxu0 0
        %3491 = vmatpush1.bf16.msra.mxu0 %v3473
        %3492 = vmatprep.subr.bf16.mxu0 0
        %3493 = vmatpush1.bf16.msra.mxu0 0
        %3494 = vmatprep.subr.bf16.mxu0 0
        %3495 = vmatpush1.bf16.msra.mxu0 0
        %3496 = vmatprep.subr.bf16.mxu0 0
        %3497 = vmatpush1.bf16.msra.mxu0 0
        %3498 = vmatprep.subr.bf16.mxu0 0
        %3499 = vmatpush1.bf16.msra.mxu0 0
        %3500 = vmatprep.subr.bf16.mxu0 0
        %3501 = vmatpush1.bf16.msra.mxu0 0
        %3502 = vmatprep.subr.bf16.mxu0 0
        %3503 = vmatpush1.bf16.msra.mxu0 0
        %3504 = vmatprep.subr.bf16.mxu0 0
        %3505 = vmatpush1.bf16.msra.mxu0 0
        %3506 = vmatprep.subr.bf16.mxu0 0
        %3507 = vmatpush1.bf16.msra.mxu0 0
        %3508 = vmatprep.subr.bf16.mxu0 0
        %3509 = vmatpush1.bf16.msra.mxu0 0
        %3510 = vmatprep.subr.bf16.mxu0 0
        %3511 = vmatpush1.bf16.msra.mxu0 0
        %3512 = vmatprep.subr.bf16.mxu0 0
        %3513 = vmatpush1.bf16.msra.mxu0 0
        %3514 = vmatprep.subr.bf16.mxu0 0
        %3515 = vmatpush1.bf16.msra.mxu0 0
        %3516 = vmatprep.subr.bf16.mxu0 0
        %3517 = vmatpush1.bf16.msra.mxu0 0
        %3518 = vmatprep.subr.bf16.mxu0 0
        %3519 = vmatpush1.bf16.msra.mxu0 0
        %3520 = vmatprep.mubr.bf16.mxu0 0
        %3521 = vmatmul.mubr.bf16.gmra.mrb[0].mxu0 %v3477
        %v3522 = vpop.f32.mrb[0].mxu0
        %v3523 = vadd.f32 0.0, %v3522
        %v3524 = vpop.f32.mrb[0].mxu0
        %v3525 = vpop.f32.mrb[0].mxu0
        %v3526 = vadd.f32 0.0, %v3525
        %v3527 = vpop.f32.mrb[0].mxu0
        %3528 = vmatprep.mubr.bf16.mxu0 0
        %3529 = vmatmul.mubr.bf16.gmra.mrb[0].mxu0 %v3480
        %v3530 = vpop.f32.mrb[0].mxu0
        %v3531 = vadd.f32 0.0, %v3530
        %v3532 = vpop.f32.mrb[0].mxu0
        %v3533 = vpop.f32.mrb[0].mxu0
        %v3534 = vadd.f32 0.0, %v3533
        %v3535 = vpop.f32.mrb[0].mxu0
        %3536 = vmatprep.mubr.bf16.mxu0 0
        %3537 = vmatmul.mubr.bf16.gmra.mrb[0].mxu0 %v3483
        %v3538 = vpop.f32.mrb[0].mxu0
        %v3539 = vadd.f32 0.0, %v3538
        %v3540 = vpop.f32.mrb[0].mxu0
        %v3541 = vpop.f32.mrb[0].mxu0
        %v3542 = vadd.f32 0.0, %v3541
        %v3543 = vpop.f32.mrb[0].mxu0
        %3544 = vmatprep.mubr.bf16.mxu0 0
        %3545 = vmatmul.mubr.bf16.gmra.mrb[0].mxu0 %v3486
        %v3546 = vpop.f32.mrb[0].mxu0
        %v3547 = vadd.f32 0.0, %v3546
        %v3548 = vpop.f32.mrb[0].mxu0
        %v3549 = vpop.f32.mrb[0].mxu0
        %v3550 = vadd.f32 0.0, %v3549
        %v3551 = vpop.f32.mrb[0].mxu0
        %3552 = vdwg.mxu0
        %v3553 = vpack.c.bf16 %v3526, %v3523
        %v3554 = vpack.c.bf16 %v3534, %v3531
        %v3555 = vpack.c.bf16 %v3542, %v3539
        %v3556 = vpack.c.bf16 %v3550, %v3547
        %3561 = vrot.lane.b32.xlu0 %v3553, 96
        %v3562 = vpop.permute.xlu0 %3561
        %3563 = vrot.lane.b32.xlu0 %v3554, 96
        %v3564 = vpop.permute.xlu0 %3563
        %3565 = vrot.lane.b32.xlu0 %v3555, 96
        %v3566 = vpop.permute.xlu0 %3565
        %3567 = vrot.lane.b32.xlu0 %v3556, 96
        %v3568 = vpop.permute.xlu0 %3567
        %v3570 = vsel %vm1516, %v3553, 0
        %v3573 = vsel %vm1516, %v3554, 0
        %v3576 = vsel %vm1516, %v3555, 0
        %v3579 = vsel %vm1516, %v3556, 0
        %v3582 = vsel %vm1516, %v3562, 0
        %v3585 = vsel %vm1516, %v3564, 0
        %v3588 = vsel %vm1516, %v3566, 0
        %v3591 = vsel %vm1516, %v3568, 0
        %3593 = vmatprep.subr.bf16.mxu0 0
        %3594 = vmatpush1.bf16.xpose.msra.mxu0 %v3582
        %3595 = vmatprep.subr.bf16.mxu0 0
        %3596 = vmatpush1.bf16.xpose.msra.mxu0 %v3585
        %3597 = vmatprep.subr.bf16.mxu0 0
        %3598 = vmatpush1.bf16.xpose.msra.mxu0 %v3588
        %3599 = vmatprep.subr.bf16.mxu0 0
        %3600 = vmatpush1.bf16.xpose.msra.mxu0 %v3591
        %3601 = vmatprep.subr.bf16.mxu0 0
        %3602 = vmatpush1.bf16.xpose.msra.mxu0 0
        %3603 = vmatprep.subr.bf16.mxu0 0
        %3604 = vmatpush1.bf16.xpose.msra.mxu0 0
        %3605 = vmatprep.subr.bf16.mxu0 0
        %3606 = vmatpush1.bf16.xpose.msra.mxu0 0
        %3607 = vmatprep.subr.bf16.mxu0 0
        %3608 = vmatpush1.bf16.xpose.msra.mxu0 0
        %3609 = vmatprep.subr.bf16.mxu0 0
        %3610 = vmatpush1.bf16.xpose.msra.mxu0 0
        %3611 = vmatprep.subr.bf16.mxu0 0
        %3612 = vmatpush1.bf16.xpose.msra.mxu0 0
        %3613 = vmatprep.subr.bf16.mxu0 0
        %3614 = vmatpush1.bf16.xpose.msra.mxu0 0
        %3615 = vmatprep.subr.bf16.mxu0 0
        %3616 = vmatpush1.bf16.xpose.msra.mxu0 0
        %3617 = vmatprep.subr.bf16.mxu0 0
        %3618 = vmatpush1.bf16.xpose.msra.mxu0 0
        %3619 = vmatprep.subr.bf16.mxu0 0
        %3620 = vmatpush1.bf16.xpose.msra.mxu0 0
        %3621 = vmatprep.subr.bf16.mxu0 0
        %3622 = vmatpush1.bf16.xpose.msra.mxu0 0
        %3623 = vmatprep.subr.bf16.mxu0 0
        %3624 = vmatpush1.bf16.xpose.msra.mxu0 0
        %3625 = vmatprep.mubr.bf16.mxu0 0
        %3626 = vmatmul.mubr.bf16.gmra.mrb[0].mxu0 %v3570
        %v3627 = vpop.f32.mrb[0].mxu0
        %v3628 = vadd.f32 0.0, %v3627
        %v3629 = vpop.f32.mrb[0].mxu0
        %v3630 = vpop.f32.mrb[0].mxu0
        %v3631 = vadd.f32 0.0, %v3630
        %v3632 = vpop.f32.mrb[0].mxu0
        %3633 = vmatprep.mubr.bf16.mxu0 0
        %3634 = vmatmul.mubr.bf16.gmra.mrb[0].mxu0 %v3573
        %v3635 = vpop.f32.mrb[0].mxu0
        %v3636 = vadd.f32 0.0, %v3635
        %v3637 = vpop.f32.mrb[0].mxu0
        %v3638 = vpop.f32.mrb[0].mxu0
        %v3639 = vadd.f32 0.0, %v3638
        %v3640 = vpop.f32.mrb[0].mxu0
        %3641 = vmatprep.mubr.bf16.mxu0 0
        %3642 = vmatmul.mubr.bf16.gmra.mrb[0].mxu0 %v3576
        %v3643 = vpop.f32.mrb[0].mxu0
        %v3644 = vadd.f32 0.0, %v3643
        %v3645 = vpop.f32.mrb[0].mxu0
        %v3646 = vpop.f32.mrb[0].mxu0
        %v3647 = vadd.f32 0.0, %v3646
        %v3648 = vpop.f32.mrb[0].mxu0
        %3649 = vmatprep.mubr.bf16.mxu0 0
        %3650 = vmatmul.mubr.bf16.gmra.mrb[0].mxu0 %v3579
        %v3651 = vpop.f32.mrb[0].mxu0
        %v3652 = vadd.f32 0.0, %v3651
        %v3653 = vpop.f32.mrb[0].mxu0
        %v3654 = vpop.f32.mrb[0].mxu0
        %v3655 = vadd.f32 0.0, %v3654
        %v3656 = vpop.f32.mrb[0].mxu0
        %3657 = vdwg.mxu0
        %v3658 = vsel %vm1174, %v3628, -inf
        %3659 = vmax.xlane.f32.xlu0 %v3658
        %v3660 = vpop.xlane.xlu0 %3659
        %v3661 = vsel %vm1174, %v3631, -inf
        %3662 = vmax.xlane.f32.xlu0 %v3661
        %v3663 = vpop.xlane.xlu0 %3662
        %v3664 = vsel %vm1174, %v3636, -inf
        %3665 = vmax.xlane.f32.xlu0 %v3664
        %v3666 = vpop.xlane.xlu0 %3665
        %v3667 = vsel %vm1174, %v3639, -inf
        %3668 = vmax.xlane.f32.xlu0 %v3667
        %v3669 = vpop.xlane.xlu0 %3668
        %v3670 = vsel %vm1174, %v3644, -inf
        %3671 = vmax.xlane.f32.xlu0 %v3670
        %v3672 = vpop.xlane.xlu0 %3671
        %v3673 = vsel %vm1174, %v3647, -inf
        %3674 = vmax.xlane.f32.xlu0 %v3673
        %v3675 = vpop.xlane.xlu0 %3674
        %v3676 = vsel %vm1174, %v3652, -inf
        %3677 = vmax.xlane.f32.xlu0 %v3676
        %v3678 = vpop.xlane.xlu0 %3677
        %v3679 = vsel %vm1174, %v3655, -inf
        %3680 = vmax.xlane.f32.xlu0 %v3679
        %v3681 = vpop.xlane.xlu0 %3680
        %v3682 = vsub.f32 %v3628, %v3660
        %v3683 = vsub.f32 %v3631, %v3663
        %v3684 = vsub.f32 %v3636, %v3666
        %v3685 = vsub.f32 %v3639, %v3669
        %v3686 = vsub.f32 %v3644, %v3672
        %v3687 = vsub.f32 %v3647, %v3675
        %v3688 = vsub.f32 %v3652, %v3678
        %v3689 = vsub.f32 %v3655, %v3681
        %v3690 = vmul.f32 %v3682, 1.442695
        %v3691 = vpow.pop %v3690
        %v3692 = vmul.f32 %v3683, 1.442695
        %v3693 = vpow.pop %v3692
        %v3694 = vmul.f32 %v3684, 1.442695
        %v3695 = vpow.pop %v3694
        %v3696 = vmul.f32 %v3685, 1.442695
        %v3697 = vpow.pop %v3696
        %v3698 = vmul.f32 %v3686, 1.442695
        %v3699 = vpow.pop %v3698
        %v3700 = vmul.f32 %v3687, 1.442695
        %v3701 = vpow.pop %v3700
        %v3702 = vmul.f32 %v3688, 1.442695
        %v3703 = vpow.pop %v3702
        %v3704 = vmul.f32 %v3689, 1.442695
        %v3705 = vpow.pop %v3704
        %v3706 = vsel %vm1174, %v3691, 0.0
        %3707 = vadd.xlane.f32.xlu0 %v3706
        %v3708 = vpop.xlane.xlu0 %3707
        %v3709 = vsel %vm1174, %v3693, 0.0
        %3710 = vadd.xlane.f32.xlu0 %v3709
        %v3711 = vpop.xlane.xlu0 %3710
        %v3712 = vsel %vm1174, %v3695, 0.0
        %3713 = vadd.xlane.f32.xlu0 %v3712
        %v3714 = vpop.xlane.xlu0 %3713
        %v3715 = vsel %vm1174, %v3697, 0.0
        %3716 = vadd.xlane.f32.xlu0 %v3715
        %v3717 = vpop.xlane.xlu0 %3716
        %v3718 = vsel %vm1174, %v3699, 0.0
        %3719 = vadd.xlane.f32.xlu0 %v3718
        %v3720 = vpop.xlane.xlu0 %3719
        %v3721 = vsel %vm1174, %v3701, 0.0
        %3722 = vadd.xlane.f32.xlu0 %v3721
        %v3723 = vpop.xlane.xlu0 %3722
        %v3724 = vsel %vm1174, %v3703, 0.0
        %3725 = vadd.xlane.f32.xlu0 %v3724
        %v3726 = vpop.xlane.xlu0 %3725
        %v3727 = vsel %vm1174, %v3705, 0.0
        %3728 = vadd.xlane.f32.xlu0 %v3727
        %v3729 = vpop.xlane.xlu0 %3728
        %v3730 = vpack.c.bf16 %v3693, %v3691
        %v3731 = vpack.c.bf16 %v3697, %v3695
        %v3732 = vpack.c.bf16 %v3701, %v3699
        %v3733 = vpack.c.bf16 %v3705, %v3703
        %3734 = vrot.lane.b32.xlu0 %v3553, 64
        %v3735 = vpop.permute.xlu0 %3734
        %3736 = vrot.lane.b32.xlu0 %v3554, 64
        %v3737 = vpop.permute.xlu0 %3736
        %3738 = vrot.lane.b32.xlu0 %v3555, 64
        %v3739 = vpop.permute.xlu0 %3738
        %3740 = vrot.lane.b32.xlu0 %v3556, 64
        %v3741 = vpop.permute.xlu0 %3740
        %v3747 = vsel %vm1174, %v3730, 0
        %v3750 = vsel %vm1174, %v3731, 0
        %v3753 = vsel %vm1174, %v3732, 0
        %v3756 = vsel %vm1174, %v3733, 0
        %3758 = vmatprep.subr.bf16.mxu0 0
        %3759 = vmatpush1.bf16.msra.mxu0 %v3735
        %3760 = vmatprep.subr.bf16.mxu0 0
        %3761 = vmatpush1.bf16.msra.mxu0 %v3737
        %3762 = vmatprep.subr.bf16.mxu0 0
        %3763 = vmatpush1.bf16.msra.mxu0 %v3739
        %3764 = vmatprep.subr.bf16.mxu0 0
        %3765 = vmatpush1.bf16.msra.mxu0 %v3741
        %3766 = vmatprep.subr.bf16.mxu0 0
        %3767 = vmatpush1.bf16.msra.mxu0 0
        %3768 = vmatprep.subr.bf16.mxu0 0
        %3769 = vmatpush1.bf16.msra.mxu0 0
        %3770 = vmatprep.subr.bf16.mxu0 0
        %3771 = vmatpush1.bf16.msra.mxu0 0
        %3772 = vmatprep.subr.bf16.mxu0 0
        %3773 = vmatpush1.bf16.msra.mxu0 0
        %3774 = vmatprep.subr.bf16.mxu0 0
        %3775 = vmatpush1.bf16.msra.mxu0 0
        %3776 = vmatprep.subr.bf16.mxu0 0
        %3777 = vmatpush1.bf16.msra.mxu0 0
        %3778 = vmatprep.subr.bf16.mxu0 0
        %3779 = vmatpush1.bf16.msra.mxu0 0
        %3780 = vmatprep.subr.bf16.mxu0 0
        %3781 = vmatpush1.bf16.msra.mxu0 0
        %3782 = vmatprep.subr.bf16.mxu0 0
        %3783 = vmatpush1.bf16.msra.mxu0 0
        %3784 = vmatprep.subr.bf16.mxu0 0
        %3785 = vmatpush1.bf16.msra.mxu0 0
        %3786 = vmatprep.subr.bf16.mxu0 0
        %3787 = vmatpush1.bf16.msra.mxu0 0
        %3788 = vmatprep.subr.bf16.mxu0 0
        %3789 = vmatpush1.bf16.msra.mxu0 0
        %3790 = vmatprep.mubr.bf16.mxu0 0
        %3791 = vmatmul.mubr.bf16.gmra.mrb[0].mxu0 %v3747
        %v3792 = vpop.f32.mrb[0].mxu0
        %v3793 = vadd.f32 0.0, %v3792
        %v3794 = vpop.f32.mrb[0].mxu0
        %v3795 = vpop.f32.mrb[0].mxu0
        %v3796 = vadd.f32 0.0, %v3795
        %v3797 = vpop.f32.mrb[0].mxu0
        %3798 = vmatprep.mubr.bf16.mxu0 0
        %3799 = vmatmul.mubr.bf16.gmra.mrb[0].mxu0 %v3750
        %v3800 = vpop.f32.mrb[0].mxu0
        %v3801 = vadd.f32 0.0, %v3800
        %v3802 = vpop.f32.mrb[0].mxu0
        %v3803 = vpop.f32.mrb[0].mxu0
        %v3804 = vadd.f32 0.0, %v3803
        %v3805 = vpop.f32.mrb[0].mxu0
        %3806 = vmatprep.mubr.bf16.mxu0 0
        %3807 = vmatmul.mubr.bf16.gmra.mrb[0].mxu0 %v3753
        %v3808 = vpop.f32.mrb[0].mxu0
        %v3809 = vadd.f32 0.0, %v3808
        %v3810 = vpop.f32.mrb[0].mxu0
        %v3811 = vpop.f32.mrb[0].mxu0
        %v3812 = vadd.f32 0.0, %v3811
        %v3813 = vpop.f32.mrb[0].mxu0
        %3814 = vmatprep.mubr.bf16.mxu0 0
        %3815 = vmatmul.mubr.bf16.gmra.mrb[0].mxu0 %v3756
        %v3816 = vpop.f32.mrb[0].mxu0
        %v3817 = vadd.f32 0.0, %v3816
        %v3818 = vpop.f32.mrb[0].mxu0
        %v3819 = vpop.f32.mrb[0].mxu0
        %v3820 = vadd.f32 0.0, %v3819
        %v3821 = vpop.f32.mrb[0].mxu0
        %3822 = vdwg.mxu0
        %v3823 = vrcp.pop %v3708
        %v3824 = vrcp.pop %v3711
        %v3825 = vrcp.pop %v3714
        %v3826 = vrcp.pop %v3717
        %v3827 = vrcp.pop %v3720
        %v3828 = vrcp.pop %v3723
        %v3829 = vrcp.pop %v3726
        %v3830 = vrcp.pop %v3729
        %v3831 = vmul.f32 %v3793, %v3823
        %v3832 = vmul.f32 %v3796, %v3824
        %v3833 = vmul.f32 %v3801, %v3825
        %v3834 = vmul.f32 %v3804, %v3826
        %v3835 = vmul.f32 %v3809, %v3827
        %v3836 = vmul.f32 %v3812, %v3828
        %v3837 = vmul.f32 %v3817, %v3829
        %v3838 = vmul.f32 %v3820, %v3830
        %3839 = vst.msk [vmem:[#allocation2] sm:$0xff] %vm1516, %v3831
        %3840 = vst.msk [vmem:[#allocation2 + $0x8] sm:$0xff] %vm1516, %v3832
        %3841 = vst.msk [vmem:[#allocation2 + $0x10] sm:$0xff] %vm1516, %v3833
        %3842 = vst.msk [vmem:[#allocation2 + $0x18] sm:$0xff] %vm1516, %v3834
        %3843 = vst.msk [vmem:[#allocation2 + $0x20] sm:$0xff] %vm1516, %v3835
        %3844 = vst.msk [vmem:[#allocation2 + $0x28] sm:$0xff] %vm1516, %v3836
        %3845 = vst.msk [vmem:[#allocation2 + $0x30] sm:$0xff] %vm1516, %v3837
        %3846 = vst.msk [vmem:[#allocation2 + $0x38] sm:$0xff] %vm1516, %v3838
        %3847 = vrot.lane.b32.xlu0 %v3553, 120
        %v3848 = vpop.permute.xlu0 %3847
        %3849 = vrot.lane.b32.xlu0 %v3554, 120
        %v3850 = vpop.permute.xlu0 %3849
        %3851 = vrot.lane.b32.xlu0 %v3555, 120
        %v3852 = vpop.permute.xlu0 %3851
        %3853 = vrot.lane.b32.xlu0 %v3556, 120
        %v3854 = vpop.permute.xlu0 %3853
        %3855 = vrot.lane.b32.xlu0 %v3553, 88
        %v3856 = vpop.permute.xlu0 %3855
        %3857 = vrot.lane.b32.xlu0 %v3554, 88
        %v3858 = vpop.permute.xlu0 %3857
        %3859 = vrot.lane.b32.xlu0 %v3555, 88
        %v3860 = vpop.permute.xlu0 %3859
        %3861 = vrot.lane.b32.xlu0 %v3556, 88
        %v3862 = vpop.permute.xlu0 %3861
        %v3864 = vsel %vm1516, %v3848, 0
        %v3867 = vsel %vm1516, %v3850, 0
        %v3870 = vsel %vm1516, %v3852, 0
        %v3873 = vsel %vm1516, %v3854, 0
        %v3876 = vsel %vm1516, %v3856, 0
        %v3879 = vsel %vm1516, %v3858, 0
        %v3882 = vsel %vm1516, %v3860, 0
        %v3885 = vsel %vm1516, %v3862, 0
        %3887 = vmatprep.subr.bf16.mxu0 0
        %3888 = vmatpush1.bf16.xpose.msra.mxu0 %v3876
        %3889 = vmatprep.subr.bf16.mxu0 0
        %3890 = vmatpush1.bf16.xpose.msra.mxu0 %v3879
        %3891 = vmatprep.subr.bf16.mxu0 0
        %3892 = vmatpush1.bf16.xpose.msra.mxu0 %v3882
        %3893 = vmatprep.subr.bf16.mxu0 0
        %3894 = vmatpush1.bf16.xpose.msra.mxu0 %v3885
        %3895 = vmatprep.subr.bf16.mxu0 0
        %3896 = vmatpush1.bf16.xpose.msra.mxu0 0
        %3897 = vmatprep.subr.bf16.mxu0 0
        %3898 = vmatpush1.bf16.xpose.msra.mxu0 0
        %3899 = vmatprep.subr.bf16.mxu0 0
        %3900 = vmatpush1.bf16.xpose.msra.mxu0 0
        %3901 = vmatprep.subr.bf16.mxu0 0
        %3902 = vmatpush1.bf16.xpose.msra.mxu0 0
        %3903 = vmatprep.subr.bf16.mxu0 0
        %3904 = vmatpush1.bf16.xpose.msra.mxu0 0
        %3905 = vmatprep.subr.bf16.mxu0 0
        %3906 = vmatpush1.bf16.xpose.msra.mxu0 0
        %3907 = vmatprep.subr.bf16.mxu0 0
        %3908 = vmatpush1.bf16.xpose.msra.mxu0 0
        %3909 = vmatprep.subr.bf16.mxu0 0
        %3910 = vmatpush1.bf16.xpose.msra.mxu0 0
        %3911 = vmatprep.subr.bf16.mxu0 0
        %3912 = vmatpush1.bf16.xpose.msra.mxu0 0
        %3913 = vmatprep.subr.bf16.mxu0 0
        %3914 = vmatpush1.bf16.xpose.msra.mxu0 0
        %3915 = vmatprep.subr.bf16.mxu0 0
        %3916 = vmatpush1.bf16.xpose.msra.mxu0 0
        %3917 = vmatprep.subr.bf16.mxu0 0
        %3918 = vmatpush1.bf16.xpose.msra.mxu0 0
        %3919 = vmatprep.mubr.bf16.mxu0 0
        %3920 = vmatmul.mubr.bf16.gmra.mrb[0].mxu0 %v3864
        %v3921 = vpop.f32.mrb[0].mxu0
        %v3922 = vadd.f32 0.0, %v3921
        %v3923 = vpop.f32.mrb[0].mxu0
        %v3924 = vpop.f32.mrb[0].mxu0
        %v3925 = vadd.f32 0.0, %v3924
        %v3926 = vpop.f32.mrb[0].mxu0
        %3927 = vmatprep.mubr.bf16.mxu0 0
        %3928 = vmatmul.mubr.bf16.gmra.mrb[0].mxu0 %v3867
        %v3929 = vpop.f32.mrb[0].mxu0
        %v3930 = vadd.f32 0.0, %v3929
        %v3931 = vpop.f32.mrb[0].mxu0
        %v3932 = vpop.f32.mrb[0].mxu0
        %v3933 = vadd.f32 0.0, %v3932
        %v3934 = vpop.f32.mrb[0].mxu0
        %3935 = vmatprep.mubr.bf16.mxu0 0
        %3936 = vmatmul.mubr.bf16.gmra.mrb[0].mxu0 %v3870
        %v3937 = vpop.f32.mrb[0].mxu0
        %v3938 = vadd.f32 0.0, %v3937
        %v3939 = vpop.f32.mrb[0].mxu0
        %v3940 = vpop.f32.mrb[0].mxu0
        %v3941 = vadd.f32 0.0, %v3940
        %v3942 = vpop.f32.mrb[0].mxu0
        %3943 = vmatprep.mubr.bf16.mxu0 0
        %3944 = vmatmul.mubr.bf16.gmra.mrb[0].mxu0 %v3873
        %v3945 = vpop.f32.mrb[0].mxu0
        %v3946 = vadd.f32 0.0, %v3945
        %v3947 = vpop.f32.mrb[0].mxu0
        %v3948 = vpop.f32.mrb[0].mxu0
        %v3949 = vadd.f32 0.0, %v3948
        %v3950 = vpop.f32.mrb[0].mxu0
        %3951 = vdwg.mxu0
        %v3952 = vsel %vm1174, %v3922, -inf
        %3953 = vmax.xlane.f32.xlu0 %v3952
        %v3954 = vpop.xlane.xlu0 %3953
        %v3955 = vsel %vm1174, %v3925, -inf
        %3956 = vmax.xlane.f32.xlu0 %v3955
        %v3957 = vpop.xlane.xlu0 %3956
        %v3958 = vsel %vm1174, %v3930, -inf
        %3959 = vmax.xlane.f32.xlu0 %v3958
        %v3960 = vpop.xlane.xlu0 %3959
        %v3961 = vsel %vm1174, %v3933, -inf
        %3962 = vmax.xlane.f32.xlu0 %v3961
        %v3963 = vpop.xlane.xlu0 %3962
        %v3964 = vsel %vm1174, %v3938, -inf
        %3965 = vmax.xlane.f32.xlu0 %v3964
        %v3966 = vpop.xlane.xlu0 %3965
        %v3967 = vsel %vm1174, %v3941, -inf
        %3968 = vmax.xlane.f32.xlu0 %v3967
        %v3969 = vpop.xlane.xlu0 %3968
        %v3970 = vsel %vm1174, %v3946, -inf
        %3971 = vmax.xlane.f32.xlu0 %v3970
        %v3972 = vpop.xlane.xlu0 %3971
        %v3973 = vsel %vm1174, %v3949, -inf
        %3974 = vmax.xlane.f32.xlu0 %v3973
        %v3975 = vpop.xlane.xlu0 %3974
        %v3976 = vsub.f32 %v3922, %v3954
        %v3977 = vsub.f32 %v3925, %v3957
        %v3978 = vsub.f32 %v3930, %v3960
        %v3979 = vsub.f32 %v3933, %v3963
        %v3980 = vsub.f32 %v3938, %v3966
        %v3981 = vsub.f32 %v3941, %v3969
        %v3982 = vsub.f32 %v3946, %v3972
        %v3983 = vsub.f32 %v3949, %v3975
        %v3984 = vmul.f32 %v3976, 1.442695
        %v3985 = vpow.pop %v3984
        %v3986 = vmul.f32 %v3977, 1.442695
        %v3987 = vpow.pop %v3986
        %v3988 = vmul.f32 %v3978, 1.442695
        %v3989 = vpow.pop %v3988
        %v3990 = vmul.f32 %v3979, 1.442695
        %v3991 = vpow.pop %v3990
        %v3992 = vmul.f32 %v3980, 1.442695
        %v3993 = vpow.pop %v3992
        %v3994 = vmul.f32 %v3981, 1.442695
        %v3995 = vpow.pop %v3994
        %v3996 = vmul.f32 %v3982, 1.442695
        %v3997 = vpow.pop %v3996
        %v3998 = vmul.f32 %v3983, 1.442695
        %v3999 = vpow.pop %v3998
        %v4000 = vsel %vm1174, %v3985, 0.0
        %4001 = vadd.xlane.f32.xlu0 %v4000
        %v4002 = vpop.xlane.xlu0 %4001
        %v4003 = vsel %vm1174, %v3987, 0.0
        %4004 = vadd.xlane.f32.xlu0 %v4003
        %v4005 = vpop.xlane.xlu0 %4004
        %v4006 = vsel %vm1174, %v3989, 0.0
        %4007 = vadd.xlane.f32.xlu0 %v4006
        %v4008 = vpop.xlane.xlu0 %4007
        %v4009 = vsel %vm1174, %v3991, 0.0
        %4010 = vadd.xlane.f32.xlu0 %v4009
        %v4011 = vpop.xlane.xlu0 %4010
        %v4012 = vsel %vm1174, %v3993, 0.0
        %4013 = vadd.xlane.f32.xlu0 %v4012
        %v4014 = vpop.xlane.xlu0 %4013
        %v4015 = vsel %vm1174, %v3995, 0.0
        %4016 = vadd.xlane.f32.xlu0 %v4015
        %v4017 = vpop.xlane.xlu0 %4016
        %v4018 = vsel %vm1174, %v3997, 0.0
        %4019 = vadd.xlane.f32.xlu0 %v4018
        %v4020 = vpop.xlane.xlu0 %4019
        %v4021 = vsel %vm1174, %v3999, 0.0
        %4022 = vadd.xlane.f32.xlu0 %v4021
        %v4023 = vpop.xlane.xlu0 %4022
        %v4024 = vpack.c.bf16 %v3987, %v3985
        %v4025 = vpack.c.bf16 %v3991, %v3989
        %v4026 = vpack.c.bf16 %v3995, %v3993
        %v4027 = vpack.c.bf16 %v3999, %v3997
        %4028 = vrot.lane.b32.xlu0 %v3553, 56
        %v4029 = vpop.permute.xlu0 %4028
        %4030 = vrot.lane.b32.xlu0 %v3554, 56
        %v4031 = vpop.permute.xlu0 %4030
        %4032 = vrot.lane.b32.xlu0 %v3555, 56
        %v4033 = vpop.permute.xlu0 %4032
        %4034 = vrot.lane.b32.xlu0 %v3556, 56
        %v4035 = vpop.permute.xlu0 %4034
        %v4041 = vsel %vm1174, %v4024, 0
        %v4044 = vsel %vm1174, %v4025, 0
        %v4047 = vsel %vm1174, %v4026, 0
        %v4050 = vsel %vm1174, %v4027, 0
        %4052 = vmatprep.subr.bf16.mxu0 0
        %4053 = vmatpush1.bf16.msra.mxu0 %v4029
        %4054 = vmatprep.subr.bf16.mxu0 0
        %4055 = vmatpush1.bf16.msra.mxu0 %v4031
        %4056 = vmatprep.subr.bf16.mxu0 0
        %4057 = vmatpush1.bf16.msra.mxu0 %v4033
        %4058 = vmatprep.subr.bf16.mxu0 0
        %4059 = vmatpush1.bf16.msra.mxu0 %v4035
        %4060 = vmatprep.subr.bf16.mxu0 0
        %4061 = vmatpush1.bf16.msra.mxu0 0
        %4062 = vmatprep.subr.bf16.mxu0 0
        %4063 = vmatpush1.bf16.msra.mxu0 0
        %4064 = vmatprep.subr.bf16.mxu0 0
        %4065 = vmatpush1.bf16.msra.mxu0 0
        %4066 = vmatprep.subr.bf16.mxu0 0
        %4067 = vmatpush1.bf16.msra.mxu0 0
        %4068 = vmatprep.subr.bf16.mxu0 0
        %4069 = vmatpush1.bf16.msra.mxu0 0
        %4070 = vmatprep.subr.bf16.mxu0 0
        %4071 = vmatpush1.bf16.msra.mxu0 0
        %4072 = vmatprep.subr.bf16.mxu0 0
        %4073 = vmatpush1.bf16.msra.mxu0 0
        %4074 = vmatprep.subr.bf16.mxu0 0
        %4075 = vmatpush1.bf16.msra.mxu0 0
        %4076 = vmatprep.subr.bf16.mxu0 0
        %4077 = vmatpush1.bf16.msra.mxu0 0
        %4078 = vmatprep.subr.bf16.mxu0 0
        %4079 = vmatpush1.bf16.msra.mxu0 0
        %4080 = vmatprep.subr.bf16.mxu0 0
        %4081 = vmatpush1.bf16.msra.mxu0 0
        %4082 = vmatprep.subr.bf16.mxu0 0
        %4083 = vmatpush1.bf16.msra.mxu0 0
        %4084 = vmatprep.mubr.bf16.mxu0 0
        %4085 = vmatmul.mubr.bf16.gmra.mrb[0].mxu0 %v4041
        %v4086 = vpop.f32.mrb[0].mxu0
        %v4087 = vadd.f32 0.0, %v4086
        %v4088 = vpop.f32.mrb[0].mxu0
        %v4089 = vpop.f32.mrb[0].mxu0
        %v4090 = vadd.f32 0.0, %v4089
        %v4091 = vpop.f32.mrb[0].mxu0
        %4092 = vmatprep.mubr.bf16.mxu0 0
        %4093 = vmatmul.mubr.bf16.gmra.mrb[0].mxu0 %v4044
        %v4094 = vpop.f32.mrb[0].mxu0
        %v4095 = vadd.f32 0.0, %v4094
        %v4096 = vpop.f32.mrb[0].mxu0
        %v4097 = vpop.f32.mrb[0].mxu0
        %v4098 = vadd.f32 0.0, %v4097
        %v4099 = vpop.f32.mrb[0].mxu0
        %4100 = vmatprep.mubr.bf16.mxu0 0
        %4101 = vmatmul.mubr.bf16.gmra.mrb[0].mxu0 %v4047
        %v4102 = vpop.f32.mrb[0].mxu0
        %v4103 = vadd.f32 0.0, %v4102
        %v4104 = vpop.f32.mrb[0].mxu0
        %v4105 = vpop.f32.mrb[0].mxu0
        %v4106 = vadd.f32 0.0, %v4105
        %v4107 = vpop.f32.mrb[0].mxu0
        %4108 = vmatprep.mubr.bf16.mxu0 0
        %4109 = vmatmul.mubr.bf16.gmra.mrb[0].mxu0 %v4050
        %v4110 = vpop.f32.mrb[0].mxu0
        %v4111 = vadd.f32 0.0, %v4110
        %v4112 = vpop.f32.mrb[0].mxu0
        %v4113 = vpop.f32.mrb[0].mxu0
        %v4114 = vadd.f32 0.0, %v4113
        %v4115 = vpop.f32.mrb[0].mxu0
        %4116 = vdwg.mxu0
        %v4117 = vrcp.pop %v4002
        %v4118 = vrcp.pop %v4005
        %v4119 = vrcp.pop %v4008
        %v4120 = vrcp.pop %v4011
        %v4121 = vrcp.pop %v4014
        %v4122 = vrcp.pop %v4017
        %v4123 = vrcp.pop %v4020
        %v4124 = vrcp.pop %v4023
        %v4125 = vmul.f32 %v4087, %v4117
        %v4126 = vmul.f32 %v4090, %v4118
        %v4127 = vmul.f32 %v4095, %v4119
        %v4128 = vmul.f32 %v4098, %v4120
        %v4129 = vmul.f32 %v4103, %v4121
        %v4130 = vmul.f32 %v4106, %v4122
        %v4131 = vmul.f32 %v4111, %v4123
        %v4132 = vmul.f32 %v4114, %v4124
        %4141 = vrot.lane.b32.xlu0 %v4125, 8
        %v4142 = vpop.permute.xlu0 %4141
        %4143 = vrot.lane.b32.xlu0 %v4126, 8
        %v4144 = vpop.permute.xlu0 %4143
        %4145 = vrot.lane.b32.xlu0 %v4127, 8
        %v4146 = vpop.permute.xlu0 %4145
        %4147 = vrot.lane.b32.xlu0 %v4128, 8
        %v4148 = vpop.permute.xlu0 %4147
        %4149 = vrot.lane.b32.xlu0 %v4129, 8
        %v4150 = vpop.permute.xlu0 %4149
        %4151 = vrot.lane.b32.xlu0 %v4130, 8
        %v4152 = vpop.permute.xlu0 %4151
        %4153 = vrot.lane.b32.xlu0 %v4131, 8
        %v4154 = vpop.permute.xlu0 %4153
        %4155 = vrot.lane.b32.xlu0 %v4132, 8
        %v4156 = vpop.permute.xlu0 %4155
        %4165 = vst.msk [vmem:[#allocation2] sm:$0xff] %vm2113, %v4142
        %4166 = vst.msk [vmem:[#allocation2 + $0x8] sm:$0xff] %vm2113, %v4144
        %4167 = vst.msk [vmem:[#allocation2 + $0x10] sm:$0xff] %vm2113, %v4146
        %4168 = vst.msk [vmem:[#allocation2 + $0x18] sm:$0xff] %vm2113, %v4148
        %4169 = vst.msk [vmem:[#allocation2 + $0x20] sm:$0xff] %vm2113, %v4150
        %4170 = vst.msk [vmem:[#allocation2 + $0x28] sm:$0xff] %vm2113, %v4152
        %4171 = vst.msk [vmem:[#allocation2 + $0x30] sm:$0xff] %vm2113, %v4154
        %4172 = vst.msk [vmem:[#allocation2 + $0x38] sm:$0xff] %vm2113, %v4156
        %4173 = vrot.lane.b32.xlu0 %v3553, 112
        %v4174 = vpop.permute.xlu0 %4173
        %4175 = vrot.lane.b32.xlu0 %v3554, 112
        %v4176 = vpop.permute.xlu0 %4175
        %4177 = vrot.lane.b32.xlu0 %v3555, 112
        %v4178 = vpop.permute.xlu0 %4177
        %4179 = vrot.lane.b32.xlu0 %v3556, 112
        %v4180 = vpop.permute.xlu0 %4179
        %4181 = vrot.lane.b32.xlu0 %v3553, 80
        %v4182 = vpop.permute.xlu0 %4181
        %4183 = vrot.lane.b32.xlu0 %v3554, 80
        %v4184 = vpop.permute.xlu0 %4183
        %4185 = vrot.lane.b32.xlu0 %v3555, 80
        %v4186 = vpop.permute.xlu0 %4185
        %4187 = vrot.lane.b32.xlu0 %v3556, 80
        %v4188 = vpop.permute.xlu0 %4187
        %v4190 = vsel %vm1516, %v4174, 0
        %v4193 = vsel %vm1516, %v4176, 0
        %v4196 = vsel %vm1516, %v4178, 0
        %v4199 = vsel %vm1516, %v4180, 0
        %v4202 = vsel %vm1516, %v4182, 0
        %v4205 = vsel %vm1516, %v4184, 0
        %v4208 = vsel %vm1516, %v4186, 0
        %v4211 = vsel %vm1516, %v4188, 0
        %4213 = vmatprep.subr.bf16.mxu0 0
        %4214 = vmatpush1.bf16.xpose.msra.mxu0 %v4202
        %4215 = vmatprep.subr.bf16.mxu0 0
        %4216 = vmatpush1.bf16.xpose.msra.mxu0 %v4205
        %4217 = vmatprep.subr.bf16.mxu0 0
        %4218 = vmatpush1.bf16.xpose.msra.mxu0 %v4208
        %4219 = vmatprep.subr.bf16.mxu0 0
        %4220 = vmatpush1.bf16.xpose.msra.mxu0 %v4211
        %4221 = vmatprep.subr.bf16.mxu0 0
        %4222 = vmatpush1.bf16.xpose.msra.mxu0 0
        %4223 = vmatprep.subr.bf16.mxu0 0
        %4224 = vmatpush1.bf16.xpose.msra.mxu0 0
        %4225 = vmatprep.subr.bf16.mxu0 0
        %4226 = vmatpush1.bf16.xpose.msra.mxu0 0
        %4227 = vmatprep.subr.bf16.mxu0 0
        %4228 = vmatpush1.bf16.xpose.msra.mxu0 0
        %4229 = vmatprep.subr.bf16.mxu0 0
        %4230 = vmatpush1.bf16.xpose.msra.mxu0 0
        %4231 = vmatprep.subr.bf16.mxu0 0
        %4232 = vmatpush1.bf16.xpose.msra.mxu0 0
        %4233 = vmatprep.subr.bf16.mxu0 0
        %4234 = vmatpush1.bf16.xpose.msra.mxu0 0
        %4235 = vmatprep.subr.bf16.mxu0 0
        %4236 = vmatpush1.bf16.xpose.msra.mxu0 0
        %4237 = vmatprep.subr.bf16.mxu0 0
        %4238 = vmatpush1.bf16.xpose.msra.mxu0 0
        %4239 = vmatprep.subr.bf16.mxu0 0
        %4240 = vmatpush1.bf16.xpose.msra.mxu0 0
        %4241 = vmatprep.subr.bf16.mxu0 0
        %4242 = vmatpush1.bf16.xpose.msra.mxu0 0
        %4243 = vmatprep.subr.bf16.mxu0 0
        %4244 = vmatpush1.bf16.xpose.msra.mxu0 0
        %4245 = vmatprep.mubr.bf16.mxu0 0
        %4246 = vmatmul.mubr.bf16.gmra.mrb[0].mxu0 %v4190
        %v4247 = vpop.f32.mrb[0].mxu0
        %v4248 = vadd.f32 0.0, %v4247
        %v4249 = vpop.f32.mrb[0].mxu0
        %v4250 = vpop.f32.mrb[0].mxu0
        %v4251 = vadd.f32 0.0, %v4250
        %v4252 = vpop.f32.mrb[0].mxu0
        %4253 = vmatprep.mubr.bf16.mxu0 0
        %4254 = vmatmul.mubr.bf16.gmra.mrb[0].mxu0 %v4193
        %v4255 = vpop.f32.mrb[0].mxu0
        %v4256 = vadd.f32 0.0, %v4255
        %v4257 = vpop.f32.mrb[0].mxu0
        %v4258 = vpop.f32.mrb[0].mxu0
        %v4259 = vadd.f32 0.0, %v4258
        %v4260 = vpop.f32.mrb[0].mxu0
        %4261 = vmatprep.mubr.bf16.mxu0 0
        %4262 = vmatmul.mubr.bf16.gmra.mrb[0].mxu0 %v4196
        %v4263 = vpop.f32.mrb[0].mxu0
        %v4264 = vadd.f32 0.0, %v4263
        %v4265 = vpop.f32.mrb[0].mxu0
        %v4266 = vpop.f32.mrb[0].mxu0
        %v4267 = vadd.f32 0.0, %v4266
        %v4268 = vpop.f32.mrb[0].mxu0
        %4269 = vmatprep.mubr.bf16.mxu0 0
        %4270 = vmatmul.mubr.bf16.gmra.mrb[0].mxu0 %v4199
        %v4271 = vpop.f32.mrb[0].mxu0
        %v4272 = vadd.f32 0.0, %v4271
        %v4273 = vpop.f32.mrb[0].mxu0
        %v4274 = vpop.f32.mrb[0].mxu0
        %v4275 = vadd.f32 0.0, %v4274
        %v4276 = vpop.f32.mrb[0].mxu0
        %4277 = vdwg.mxu0
        %v4278 = vsel %vm1174, %v4248, -inf
        %4279 = vmax.xlane.f32.xlu0 %v4278
        %v4280 = vpop.xlane.xlu0 %4279
        %v4281 = vsel %vm1174, %v4251, -inf
        %4282 = vmax.xlane.f32.xlu0 %v4281
        %v4283 = vpop.xlane.xlu0 %4282
        %v4284 = vsel %vm1174, %v4256, -inf
        %4285 = vmax.xlane.f32.xlu0 %v4284
        %v4286 = vpop.xlane.xlu0 %4285
        %v4287 = vsel %vm1174, %v4259, -inf
        %4288 = vmax.xlane.f32.xlu0 %v4287
        %v4289 = vpop.xlane.xlu0 %4288
        %v4290 = vsel %vm1174, %v4264, -inf
        %4291 = vmax.xlane.f32.xlu0 %v4290
        %v4292 = vpop.xlane.xlu0 %4291
        %v4293 = vsel %vm1174, %v4267, -inf
        %4294 = vmax.xlane.f32.xlu0 %v4293
        %v4295 = vpop.xlane.xlu0 %4294
        %v4296 = vsel %vm1174, %v4272, -inf
        %4297 = vmax.xlane.f32.xlu0 %v4296
        %v4298 = vpop.xlane.xlu0 %4297
        %v4299 = vsel %vm1174, %v4275, -inf
        %4300 = vmax.xlane.f32.xlu0 %v4299
        %v4301 = vpop.xlane.xlu0 %4300
        %v4302 = vsub.f32 %v4248, %v4280
        %v4303 = vsub.f32 %v4251, %v4283
        %v4304 = vsub.f32 %v4256, %v4286
        %v4305 = vsub.f32 %v4259, %v4289
        %v4306 = vsub.f32 %v4264, %v4292
        %v4307 = vsub.f32 %v4267, %v4295
        %v4308 = vsub.f32 %v4272, %v4298
        %v4309 = vsub.f32 %v4275, %v4301
        %v4310 = vmul.f32 %v4302, 1.442695
        %v4311 = vpow.pop %v4310
        %v4312 = vmul.f32 %v4303, 1.442695
        %v4313 = vpow.pop %v4312
        %v4314 = vmul.f32 %v4304, 1.442695
        %v4315 = vpow.pop %v4314
        %v4316 = vmul.f32 %v4305, 1.442695
        %v4317 = vpow.pop %v4316
        %v4318 = vmul.f32 %v4306, 1.442695
        %v4319 = vpow.pop %v4318
        %v4320 = vmul.f32 %v4307, 1.442695
        %v4321 = vpow.pop %v4320
        %v4322 = vmul.f32 %v4308, 1.442695
        %v4323 = vpow.pop %v4322
        %v4324 = vmul.f32 %v4309, 1.442695
        %v4325 = vpow.pop %v4324
        %v4326 = vsel %vm1174, %v4311, 0.0
        %4327 = vadd.xlane.f32.xlu0 %v4326
        %v4328 = vpop.xlane.xlu0 %4327
        %v4329 = vsel %vm1174, %v4313, 0.0
        %4330 = vadd.xlane.f32.xlu0 %v4329
        %v4331 = vpop.xlane.xlu0 %4330
        %v4332 = vsel %vm1174, %v4315, 0.0
        %4333 = vadd.xlane.f32.xlu0 %v4332
        %v4334 = vpop.xlane.xlu0 %4333
        %v4335 = vsel %vm1174, %v4317, 0.0
        %4336 = vadd.xlane.f32.xlu0 %v4335
        %v4337 = vpop.xlane.xlu0 %4336
        %v4338 = vsel %vm1174, %v4319, 0.0
        %4339 = vadd.xlane.f32.xlu0 %v4338
        %v4340 = vpop.xlane.xlu0 %4339
        %v4341 = vsel %vm1174, %v4321, 0.0
        %4342 = vadd.xlane.f32.xlu0 %v4341
        %v4343 = vpop.xlane.xlu0 %4342
        %v4344 = vsel %vm1174, %v4323, 0.0
        %4345 = vadd.xlane.f32.xlu0 %v4344
        %v4346 = vpop.xlane.xlu0 %4345
        %v4347 = vsel %vm1174, %v4325, 0.0
        %4348 = vadd.xlane.f32.xlu0 %v4347
        %v4349 = vpop.xlane.xlu0 %4348
        %v4350 = vpack.c.bf16 %v4313, %v4311
        %v4351 = vpack.c.bf16 %v4317, %v4315
        %v4352 = vpack.c.bf16 %v4321, %v4319
        %v4353 = vpack.c.bf16 %v4325, %v4323
        %4354 = vrot.lane.b32.xlu0 %v3553, 48
        %v4355 = vpop.permute.xlu0 %4354
        %4356 = vrot.lane.b32.xlu0 %v3554, 48
        %v4357 = vpop.permute.xlu0 %4356
        %4358 = vrot.lane.b32.xlu0 %v3555, 48
        %v4359 = vpop.permute.xlu0 %4358
        %4360 = vrot.lane.b32.xlu0 %v3556, 48
        %v4361 = vpop.permute.xlu0 %4360
        %v4367 = vsel %vm1174, %v4350, 0
        %v4370 = vsel %vm1174, %v4351, 0
        %v4373 = vsel %vm1174, %v4352, 0
        %v4376 = vsel %vm1174, %v4353, 0
        %4378 = vmatprep.subr.bf16.mxu0 0
        %4379 = vmatpush1.bf16.msra.mxu0 %v4355
        %4380 = vmatprep.subr.bf16.mxu0 0
        %4381 = vmatpush1.bf16.msra.mxu0 %v4357
        %4382 = vmatprep.subr.bf16.mxu0 0
        %4383 = vmatpush1.bf16.msra.mxu0 %v4359
        %4384 = vmatprep.subr.bf16.mxu0 0
        %4385 = vmatpush1.bf16.msra.mxu0 %v4361
        %4386 = vmatprep.subr.bf16.mxu0 0
        %4387 = vmatpush1.bf16.msra.mxu0 0
        %4388 = vmatprep.subr.bf16.mxu0 0
        %4389 = vmatpush1.bf16.msra.mxu0 0
        %4390 = vmatprep.subr.bf16.mxu0 0
        %4391 = vmatpush1.bf16.msra.mxu0 0
        %4392 = vmatprep.subr.bf16.mxu0 0
        %4393 = vmatpush1.bf16.msra.mxu0 0
        %4394 = vmatprep.subr.bf16.mxu0 0
        %4395 = vmatpush1.bf16.msra.mxu0 0
        %4396 = vmatprep.subr.bf16.mxu0 0
        %4397 = vmatpush1.bf16.msra.mxu0 0
        %4398 = vmatprep.subr.bf16.mxu0 0
        %4399 = vmatpush1.bf16.msra.mxu0 0
        %4400 = vmatprep.subr.bf16.mxu0 0
        %4401 = vmatpush1.bf16.msra.mxu0 0
        %4402 = vmatprep.subr.bf16.mxu0 0
        %4403 = vmatpush1.bf16.msra.mxu0 0
        %4404 = vmatprep.subr.bf16.mxu0 0
        %4405 = vmatpush1.bf16.msra.mxu0 0
        %4406 = vmatprep.subr.bf16.mxu0 0
        %4407 = vmatpush1.bf16.msra.mxu0 0
        %4408 = vmatprep.subr.bf16.mxu0 0
        %4409 = vmatpush1.bf16.msra.mxu0 0
        %4410 = vmatprep.mubr.bf16.mxu0 0
        %4411 = vmatmul.mubr.bf16.gmra.mrb[0].mxu0 %v4367
        %v4412 = vpop.f32.mrb[0].mxu0
        %v4413 = vadd.f32 0.0, %v4412
        %v4414 = vpop.f32.mrb[0].mxu0
        %v4415 = vpop.f32.mrb[0].mxu0
        %v4416 = vadd.f32 0.0, %v4415
        %v4417 = vpop.f32.mrb[0].mxu0
        %4418 = vmatprep.mubr.bf16.mxu0 0
        %4419 = vmatmul.mubr.bf16.gmra.mrb[0].mxu0 %v4370
        %v4420 = vpop.f32.mrb[0].mxu0
        %v4421 = vadd.f32 0.0, %v4420
        %v4422 = vpop.f32.mrb[0].mxu0
        %v4423 = vpop.f32.mrb[0].mxu0
        %v4424 = vadd.f32 0.0, %v4423
        %v4425 = vpop.f32.mrb[0].mxu0
        %4426 = vmatprep.mubr.bf16.mxu0 0
        %4427 = vmatmul.mubr.bf16.gmra.mrb[0].mxu0 %v4373
        %v4428 = vpop.f32.mrb[0].mxu0
        %v4429 = vadd.f32 0.0, %v4428
        %v4430 = vpop.f32.mrb[0].mxu0
        %v4431 = vpop.f32.mrb[0].mxu0
        %v4432 = vadd.f32 0.0, %v4431
        %v4433 = vpop.f32.mrb[0].mxu0
        %4434 = vmatprep.mubr.bf16.mxu0 0
        %4435 = vmatmul.mubr.bf16.gmra.mrb[0].mxu0 %v4376
        %v4436 = vpop.f32.mrb[0].mxu0
        %v4437 = vadd.f32 0.0, %v4436
        %v4438 = vpop.f32.mrb[0].mxu0
        %v4439 = vpop.f32.mrb[0].mxu0
        %v4440 = vadd.f32 0.0, %v4439
        %v4441 = vpop.f32.mrb[0].mxu0
        %4442 = vdwg.mxu0
        %v4443 = vrcp.pop %v4328
        %v4444 = vrcp.pop %v4331
        %v4445 = vrcp.pop %v4334
        %v4446 = vrcp.pop %v4337
        %v4447 = vrcp.pop %v4340
        %v4448 = vrcp.pop %v4343
        %v4449 = vrcp.pop %v4346
        %v4450 = vrcp.pop %v4349
        %v4451 = vmul.f32 %v4413, %v4443
        %v4452 = vmul.f32 %v4416, %v4444
        %v4453 = vmul.f32 %v4421, %v4445
        %v4454 = vmul.f32 %v4424, %v4446
        %v4455 = vmul.f32 %v4429, %v4447
        %v4456 = vmul.f32 %v4432, %v4448
        %v4457 = vmul.f32 %v4437, %v4449
        %v4458 = vmul.f32 %v4440, %v4450
        %4467 = vrot.lane.b32.xlu0 %v4451, 16
        %v4468 = vpop.permute.xlu0 %4467
        %4469 = vrot.lane.b32.xlu0 %v4452, 16
        %v4470 = vpop.permute.xlu0 %4469
        %4471 = vrot.lane.b32.xlu0 %v4453, 16
        %v4472 = vpop.permute.xlu0 %4471
        %4473 = vrot.lane.b32.xlu0 %v4454, 16
        %v4474 = vpop.permute.xlu0 %4473
        %4475 = vrot.lane.b32.xlu0 %v4455, 16
        %v4476 = vpop.permute.xlu0 %4475
        %4477 = vrot.lane.b32.xlu0 %v4456, 16
        %v4478 = vpop.permute.xlu0 %4477
        %4479 = vrot.lane.b32.xlu0 %v4457, 16
        %v4480 = vpop.permute.xlu0 %4479
        %4481 = vrot.lane.b32.xlu0 %v4458, 16
        %v4482 = vpop.permute.xlu0 %4481
        %4491 = vst.msk [vmem:[#allocation2] sm:$0xff] %vm2440, %v4468
        %4492 = vst.msk [vmem:[#allocation2 + $0x8] sm:$0xff] %vm2440, %v4470
        %4493 = vst.msk [vmem:[#allocation2 + $0x10] sm:$0xff] %vm2440, %v4472
        %4494 = vst.msk [vmem:[#allocation2 + $0x18] sm:$0xff] %vm2440, %v4474
        %4495 = vst.msk [vmem:[#allocation2 + $0x20] sm:$0xff] %vm2440, %v4476
        %4496 = vst.msk [vmem:[#allocation2 + $0x28] sm:$0xff] %vm2440, %v4478
        %4497 = vst.msk [vmem:[#allocation2 + $0x30] sm:$0xff] %vm2440, %v4480
        %4498 = vst.msk [vmem:[#allocation2 + $0x38] sm:$0xff] %vm2440, %v4482
        %4499 = vrot.lane.b32.xlu0 %v3553, 104
        %v4500 = vpop.permute.xlu0 %4499
        %4501 = vrot.lane.b32.xlu0 %v3554, 104
        %v4502 = vpop.permute.xlu0 %4501
        %4503 = vrot.lane.b32.xlu0 %v3555, 104
        %v4504 = vpop.permute.xlu0 %4503
        %4505 = vrot.lane.b32.xlu0 %v3556, 104
        %v4506 = vpop.permute.xlu0 %4505
        %4507 = vrot.lane.b32.xlu0 %v3553, 72
        %v4508 = vpop.permute.xlu0 %4507
        %4509 = vrot.lane.b32.xlu0 %v3554, 72
        %v4510 = vpop.permute.xlu0 %4509
        %4511 = vrot.lane.b32.xlu0 %v3555, 72
        %v4512 = vpop.permute.xlu0 %4511
        %4513 = vrot.lane.b32.xlu0 %v3556, 72
        %v4514 = vpop.permute.xlu0 %4513
        %v4516 = vsel %vm1516, %v4500, 0
        %v4519 = vsel %vm1516, %v4502, 0
        %v4522 = vsel %vm1516, %v4504, 0
        %v4525 = vsel %vm1516, %v4506, 0
        %v4528 = vsel %vm1516, %v4508, 0
        %v4531 = vsel %vm1516, %v4510, 0
        %v4534 = vsel %vm1516, %v4512, 0
        %v4537 = vsel %vm1516, %v4514, 0
        %4539 = vmatprep.subr.bf16.mxu0 0
        %4540 = vmatpush1.bf16.xpose.msra.mxu0 %v4528
        %4541 = vmatprep.subr.bf16.mxu0 0
        %4542 = vmatpush1.bf16.xpose.msra.mxu0 %v4531
        %4543 = vmatprep.subr.bf16.mxu0 0
        %4544 = vmatpush1.bf16.xpose.msra.mxu0 %v4534
        %4545 = vmatprep.subr.bf16.mxu0 0
        %4546 = vmatpush1.bf16.xpose.msra.mxu0 %v4537
        %4547 = vmatprep.subr.bf16.mxu0 0
        %4548 = vmatpush1.bf16.xpose.msra.mxu0 0
        %4549 = vmatprep.subr.bf16.mxu0 0
        %4550 = vmatpush1.bf16.xpose.msra.mxu0 0
        %4551 = vmatprep.subr.bf16.mxu0 0
        %4552 = vmatpush1.bf16.xpose.msra.mxu0 0
        %4553 = vmatprep.subr.bf16.mxu0 0
        %4554 = vmatpush1.bf16.xpose.msra.mxu0 0
        %4555 = vmatprep.subr.bf16.mxu0 0
        %4556 = vmatpush1.bf16.xpose.msra.mxu0 0
        %4557 = vmatprep.subr.bf16.mxu0 0
        %4558 = vmatpush1.bf16.xpose.msra.mxu0 0
        %4559 = vmatprep.subr.bf16.mxu0 0
        %4560 = vmatpush1.bf16.xpose.msra.mxu0 0
        %4561 = vmatprep.subr.bf16.mxu0 0
        %4562 = vmatpush1.bf16.xpose.msra.mxu0 0
        %4563 = vmatprep.subr.bf16.mxu0 0
        %4564 = vmatpush1.bf16.xpose.msra.mxu0 0
        %4565 = vmatprep.subr.bf16.mxu0 0
        %4566 = vmatpush1.bf16.xpose.msra.mxu0 0
        %4567 = vmatprep.subr.bf16.mxu0 0
        %4568 = vmatpush1.bf16.xpose.msra.mxu0 0
        %4569 = vmatprep.subr.bf16.mxu0 0
        %4570 = vmatpush1.bf16.xpose.msra.mxu0 0
        %4571 = vmatprep.mubr.bf16.mxu0 0
        %4572 = vmatmul.mubr.bf16.gmra.mrb[0].mxu0 %v4516
        %v4573 = vpop.f32.mrb[0].mxu0
        %v4574 = vadd.f32 0.0, %v4573
        %v4575 = vpop.f32.mrb[0].mxu0
        %v4576 = vpop.f32.mrb[0].mxu0
        %v4577 = vadd.f32 0.0, %v4576
        %v4578 = vpop.f32.mrb[0].mxu0
        %4579 = vmatprep.mubr.bf16.mxu0 0
        %4580 = vmatmul.mubr.bf16.gmra.mrb[0].mxu0 %v4519
        %v4581 = vpop.f32.mrb[0].mxu0
        %v4582 = vadd.f32 0.0, %v4581
        %v4583 = vpop.f32.mrb[0].mxu0
        %v4584 = vpop.f32.mrb[0].mxu0
        %v4585 = vadd.f32 0.0, %v4584
        %v4586 = vpop.f32.mrb[0].mxu0
        %4587 = vmatprep.mubr.bf16.mxu0 0
        %4588 = vmatmul.mubr.bf16.gmra.mrb[0].mxu0 %v4522
        %v4589 = vpop.f32.mrb[0].mxu0
        %v4590 = vadd.f32 0.0, %v4589
        %v4591 = vpop.f32.mrb[0].mxu0
        %v4592 = vpop.f32.mrb[0].mxu0
        %v4593 = vadd.f32 0.0, %v4592
        %v4594 = vpop.f32.mrb[0].mxu0
        %4595 = vmatprep.mubr.bf16.mxu0 0
        %4596 = vmatmul.mubr.bf16.gmra.mrb[0].mxu0 %v4525
        %v4597 = vpop.f32.mrb[0].mxu0
        %v4598 = vadd.f32 0.0, %v4597
        %v4599 = vpop.f32.mrb[0].mxu0
        %v4600 = vpop.f32.mrb[0].mxu0
        %v4601 = vadd.f32 0.0, %v4600
        %v4602 = vpop.f32.mrb[0].mxu0
        %4603 = vdwg.mxu0
        %v4604 = vsel %vm1174, %v4574, -inf
        %4605 = vmax.xlane.f32.xlu0 %v4604
        %v4606 = vpop.xlane.xlu0 %4605
        %v4607 = vsel %vm1174, %v4577, -inf
        %4608 = vmax.xlane.f32.xlu0 %v4607
        %v4609 = vpop.xlane.xlu0 %4608
        %v4610 = vsel %vm1174, %v4582, -inf
        %4611 = vmax.xlane.f32.xlu0 %v4610
        %v4612 = vpop.xlane.xlu0 %4611
        %v4613 = vsel %vm1174, %v4585, -inf
        %4614 = vmax.xlane.f32.xlu0 %v4613
        %v4615 = vpop.xlane.xlu0 %4614
        %v4616 = vsel %vm1174, %v4590, -inf
        %4617 = vmax.xlane.f32.xlu0 %v4616
        %v4618 = vpop.xlane.xlu0 %4617
        %v4619 = vsel %vm1174, %v4593, -inf
        %4620 = vmax.xlane.f32.xlu0 %v4619
        %v4621 = vpop.xlane.xlu0 %4620
        %v4622 = vsel %vm1174, %v4598, -inf
        %4623 = vmax.xlane.f32.xlu0 %v4622
        %v4624 = vpop.xlane.xlu0 %4623
        %v4625 = vsel %vm1174, %v4601, -inf
        %4626 = vmax.xlane.f32.xlu0 %v4625
        %v4627 = vpop.xlane.xlu0 %4626
        %v4628 = vsub.f32 %v4574, %v4606
        %v4629 = vsub.f32 %v4577, %v4609
        %v4630 = vsub.f32 %v4582, %v4612
        %v4631 = vsub.f32 %v4585, %v4615
        %v4632 = vsub.f32 %v4590, %v4618
        %v4633 = vsub.f32 %v4593, %v4621
        %v4634 = vsub.f32 %v4598, %v4624
        %v4635 = vsub.f32 %v4601, %v4627
        %v4636 = vmul.f32 %v4628, 1.442695
        %v4637 = vpow.pop %v4636
        %v4638 = vmul.f32 %v4629, 1.442695
        %v4639 = vpow.pop %v4638
        %v4640 = vmul.f32 %v4630, 1.442695
        %v4641 = vpow.pop %v4640
        %v4642 = vmul.f32 %v4631, 1.442695
        %v4643 = vpow.pop %v4642
        %v4644 = vmul.f32 %v4632, 1.442695
        %v4645 = vpow.pop %v4644
        %v4646 = vmul.f32 %v4633, 1.442695
        %v4647 = vpow.pop %v4646
        %v4648 = vmul.f32 %v4634, 1.442695
        %v4649 = vpow.pop %v4648
        %v4650 = vmul.f32 %v4635, 1.442695
        %v4651 = vpow.pop %v4650
        %v4652 = vsel %vm1174, %v4637, 0.0
        %4653 = vadd.xlane.f32.xlu0 %v4652
        %v4654 = vpop.xlane.xlu0 %4653
        %v4655 = vsel %vm1174, %v4639, 0.0
        %4656 = vadd.xlane.f32.xlu0 %v4655
        %v4657 = vpop.xlane.xlu0 %4656
        %v4658 = vsel %vm1174, %v4641, 0.0
        %4659 = vadd.xlane.f32.xlu0 %v4658
        %v4660 = vpop.xlane.xlu0 %4659
        %v4661 = vsel %vm1174, %v4643, 0.0
        %4662 = vadd.xlane.f32.xlu0 %v4661
        %v4663 = vpop.xlane.xlu0 %4662
        %v4664 = vsel %vm1174, %v4645, 0.0
        %4665 = vadd.xlane.f32.xlu0 %v4664
        %v4666 = vpop.xlane.xlu0 %4665
        %v4667 = vsel %vm1174, %v4647, 0.0
        %4668 = vadd.xlane.f32.xlu0 %v4667
        %v4669 = vpop.xlane.xlu0 %4668
        %v4670 = vsel %vm1174, %v4649, 0.0
        %4671 = vadd.xlane.f32.xlu0 %v4670
        %v4672 = vpop.xlane.xlu0 %4671
        %v4673 = vsel %vm1174, %v4651, 0.0
        %4674 = vadd.xlane.f32.xlu0 %v4673
        %v4675 = vpop.xlane.xlu0 %4674
        %v4676 = vpack.c.bf16 %v4639, %v4637
        %v4677 = vpack.c.bf16 %v4643, %v4641
        %v4678 = vpack.c.bf16 %v4647, %v4645
        %v4679 = vpack.c.bf16 %v4651, %v4649
        %4680 = vrot.lane.b32.xlu0 %v3553, 40
        %v4681 = vpop.permute.xlu0 %4680
        %4682 = vrot.lane.b32.xlu0 %v3554, 40
        %v4683 = vpop.permute.xlu0 %4682
        %4684 = vrot.lane.b32.xlu0 %v3555, 40
        %v4685 = vpop.permute.xlu0 %4684
        %4686 = vrot.lane.b32.xlu0 %v3556, 40
        %v4687 = vpop.permute.xlu0 %4686
        %v4693 = vsel %vm1174, %v4676, 0
        %v4696 = vsel %vm1174, %v4677, 0
        %v4699 = vsel %vm1174, %v4678, 0
        %v4702 = vsel %vm1174, %v4679, 0
        %4704 = vmatprep.subr.bf16.mxu0 0
        %4705 = vmatpush1.bf16.msra.mxu0 %v4681
        %4706 = vmatprep.subr.bf16.mxu0 0
        %4707 = vmatpush1.bf16.msra.mxu0 %v4683
        %4708 = vmatprep.subr.bf16.mxu0 0
        %4709 = vmatpush1.bf16.msra.mxu0 %v4685
        %4710 = vmatprep.subr.bf16.mxu0 0
        %4711 = vmatpush1.bf16.msra.mxu0 %v4687
        %4712 = vmatprep.subr.bf16.mxu0 0
        %4713 = vmatpush1.bf16.msra.mxu0 0
        %4714 = vmatprep.subr.bf16.mxu0 0
        %4715 = vmatpush1.bf16.msra.mxu0 0
        %4716 = vmatprep.subr.bf16.mxu0 0
        %4717 = vmatpush1.bf16.msra.mxu0 0
        %4718 = vmatprep.subr.bf16.mxu0 0
        %4719 = vmatpush1.bf16.msra.mxu0 0
        %4720 = vmatprep.subr.bf16.mxu0 0
        %4721 = vmatpush1.bf16.msra.mxu0 0
        %4722 = vmatprep.subr.bf16.mxu0 0
        %4723 = vmatpush1.bf16.msra.mxu0 0
        %4724 = vmatprep.subr.bf16.mxu0 0
        %4725 = vmatpush1.bf16.msra.mxu0 0
        %4726 = vmatprep.subr.bf16.mxu0 0
        %4727 = vmatpush1.bf16.msra.mxu0 0
        %4728 = vmatprep.subr.bf16.mxu0 0
        %4729 = vmatpush1.bf16.msra.mxu0 0
        %4730 = vmatprep.subr.bf16.mxu0 0
        %4731 = vmatpush1.bf16.msra.mxu0 0
        %4732 = vmatprep.subr.bf16.mxu0 0
        %4733 = vmatpush1.bf16.msra.mxu0 0
        %4734 = vmatprep.subr.bf16.mxu0 0
        %4735 = vmatpush1.bf16.msra.mxu0 0
        %4736 = vmatprep.mubr.bf16.mxu0 0
        %4737 = vmatmul.mubr.bf16.gmra.mrb[0].mxu0 %v4693
        %v4738 = vpop.f32.mrb[0].mxu0
        %v4739 = vadd.f32 0.0, %v4738
        %v4740 = vpop.f32.mrb[0].mxu0
        %v4741 = vpop.f32.mrb[0].mxu0
        %v4742 = vadd.f32 0.0, %v4741
        %v4743 = vpop.f32.mrb[0].mxu0
        %4744 = vmatprep.mubr.bf16.mxu0 0
        %4745 = vmatmul.mubr.bf16.gmra.mrb[0].mxu0 %v4696
        %v4746 = vpop.f32.mrb[0].mxu0
        %v4747 = vadd.f32 0.0, %v4746
        %v4748 = vpop.f32.mrb[0].mxu0
        %v4749 = vpop.f32.mrb[0].mxu0
        %v4750 = vadd.f32 0.0, %v4749
        %v4751 = vpop.f32.mrb[0].mxu0
        %4752 = vmatprep.mubr.bf16.mxu0 0
        %4753 = vmatmul.mubr.bf16.gmra.mrb[0].mxu0 %v4699
        %v4754 = vpop.f32.mrb[0].mxu0
        %v4755 = vadd.f32 0.0, %v4754
        %v4756 = vpop.f32.mrb[0].mxu0
        %v4757 = vpop.f32.mrb[0].mxu0
        %v4758 = vadd.f32 0.0, %v4757
        %v4759 = vpop.f32.mrb[0].mxu0
        %4760 = vmatprep.mubr.bf16.mxu0 0
        %4761 = vmatmul.mubr.bf16.gmra.mrb[0].mxu0 %v4702
        %v4762 = vpop.f32.mrb[0].mxu0
        %v4763 = vadd.f32 0.0, %v4762
        %v4764 = vpop.f32.mrb[0].mxu0
        %v4765 = vpop.f32.mrb[0].mxu0
        %v4766 = vadd.f32 0.0, %v4765
        %v4767 = vpop.f32.mrb[0].mxu0
        %4768 = vdwg.mxu0
        %v4769 = vrcp.pop %v4654
        %v4770 = vrcp.pop %v4657
        %v4771 = vrcp.pop %v4660
        %v4772 = vrcp.pop %v4663
        %v4773 = vrcp.pop %v4666
        %v4774 = vrcp.pop %v4669
        %v4775 = vrcp.pop %v4672
        %v4776 = vrcp.pop %v4675
        %v4777 = vmul.f32 %v4739, %v4769
        %v4778 = vmul.f32 %v4742, %v4770
        %v4779 = vmul.f32 %v4747, %v4771
        %v4780 = vmul.f32 %v4750, %v4772
        %v4781 = vmul.f32 %v4755, %v4773
        %v4782 = vmul.f32 %v4758, %v4774
        %v4783 = vmul.f32 %v4763, %v4775
        %v4784 = vmul.f32 %v4766, %v4776
        %4793 = vrot.lane.b32.xlu0 %v4777, 24
        %v4794 = vpop.permute.xlu0 %4793
        %4795 = vrot.lane.b32.xlu0 %v4778, 24
        %v4796 = vpop.permute.xlu0 %4795
        %4797 = vrot.lane.b32.xlu0 %v4779, 24
        %v4798 = vpop.permute.xlu0 %4797
        %4799 = vrot.lane.b32.xlu0 %v4780, 24
        %v4800 = vpop.permute.xlu0 %4799
        %4801 = vrot.lane.b32.xlu0 %v4781, 24
        %v4802 = vpop.permute.xlu0 %4801
        %4803 = vrot.lane.b32.xlu0 %v4782, 24
        %v4804 = vpop.permute.xlu0 %4803
        %4805 = vrot.lane.b32.xlu0 %v4783, 24
        %v4806 = vpop.permute.xlu0 %4805
        %4807 = vrot.lane.b32.xlu0 %v4784, 24
        %v4808 = vpop.permute.xlu0 %4807
        %4817 = vst.msk [vmem:[#allocation2] sm:$0xff] %vm2767, %v4794
        %4818 = vst.msk [vmem:[#allocation2 + $0x8] sm:$0xff] %vm2767, %v4796
        %4819 = vst.msk [vmem:[#allocation2 + $0x10] sm:$0xff] %vm2767, %v4798
        %4820 = vst.msk [vmem:[#allocation2 + $0x18] sm:$0xff] %vm2767, %v4800
        %4821 = vst.msk [vmem:[#allocation2 + $0x20] sm:$0xff] %vm2767, %v4802
        %4822 = vst.msk [vmem:[#allocation2 + $0x28] sm:$0xff] %vm2767, %v4804
        %4823 = vst.msk [vmem:[#allocation2 + $0x30] sm:$0xff] %vm2767, %v4806
        %4824 = vst.msk [vmem:[#allocation2 + $0x38] sm:$0xff] %vm2767, %v4808
        %v4825 = vld [vmem:[#allocation2] sm:$0xff]
        %v4826 = vld [vmem:[#allocation2 + $0x8] sm:$0xff]
        %v4827 = vld [vmem:[#allocation2 + $0x10] sm:$0xff]
        %v4828 = vld [vmem:[#allocation2 + $0x18] sm:$0xff]
        %v4829 = vld [vmem:[#allocation2 + $0x20] sm:$0xff]
        %v4830 = vld [vmem:[#allocation2 + $0x28] sm:$0xff]
        %v4831 = vld [vmem:[#allocation2 + $0x30] sm:$0xff]
        %v4832 = vld [vmem:[#allocation2 + $0x38] sm:$0xff]
        %v4833 = vld [vmem:[%s41] sm:$0xf]
        %v4834 = vld [vmem:[%s41 + $0x4] sm:$0xf]
        %v4835 = vld [vmem:[%s41 + $0x8] sm:$0xf]
        %v4836 = vld [vmem:[%s41 + $0xc] sm:$0xf]
        %v4837 = vpack.c.bf16 %v4826, %v4825
        %v4838 = vpack.c.bf16 %v4828, %v4827
        %v4839 = vpack.c.bf16 %v4830, %v4829
        %v4840 = vpack.c.bf16 %v4832, %v4831
        %v4841 = vld [vmem:[%s43] sm:$0x1]
        %v4843 = vlaneseq
        %v4844 = vshrl.u32 %v4843, 7
        %v4845 = vsub.s32 0, %v4844
        %v4846 = vrot.slane %v4841, %v4845
        %v4852 = vunpack.c.l.b16 %v4833
        %v4853 = vunpack.c.l.b16 %v4834
        %v4854 = vunpack.c.l.b16 %v4835
        %v4855 = vunpack.c.l.b16 %v4836
        %v4856 = vpack.c.b16 %v4853, %v4852
        %v4857 = vpack.c.b16 %v4855, %v4854
        %v4861 = vsel %vm1269, %v4837, 0
        %v4864 = vsel %vm1269, %v4838, 0
        %v4867 = vsel %vm1269, %v4839, 0
        %v4870 = vsel %vm1269, %v4840, 0
        %4872 = vmatprep.subr.bf16.mxu0 0
        %4873 = vmatpush1.bf16.msra.mxu0 %v4856
        %4874 = vmatprep.subr.bf16.mxu0 0
        %4875 = vmatpush1.bf16.msra.mxu0 %v4857
        %4876 = vmatprep.subr.bf16.mxu0 0
        %4877 = vmatpush1.bf16.msra.mxu0 0
        %4878 = vmatprep.subr.bf16.mxu0 0
        %4879 = vmatpush1.bf16.msra.mxu0 0
        %4880 = vmatprep.subr.bf16.mxu0 0
        %4881 = vmatpush1.bf16.msra.mxu0 0
        %4882 = vmatprep.subr.bf16.mxu0 0
        %4883 = vmatpush1.bf16.msra.mxu0 0
        %4884 = vmatprep.subr.bf16.mxu0 0
        %4885 = vmatpush1.bf16.msra.mxu0 0
        %4886 = vmatprep.subr.bf16.mxu0 0
        %4887 = vmatpush1.bf16.msra.mxu0 0
        %4888 = vmatprep.subr.bf16.mxu0 0
        %4889 = vmatpush1.bf16.msra.mxu0 0
        %4890 = vmatprep.subr.bf16.mxu0 0
        %4891 = vmatpush1.bf16.msra.mxu0 0
        %4892 = vmatprep.subr.bf16.mxu0 0
        %4893 = vmatpush1.bf16.msra.mxu0 0
        %4894 = vmatprep.subr.bf16.mxu0 0
        %4895 = vmatpush1.bf16.msra.mxu0 0
        %4896 = vmatprep.subr.bf16.mxu0 0
        %4897 = vmatpush1.bf16.msra.mxu0 0
        %4898 = vmatprep.subr.bf16.mxu0 0
        %4899 = vmatpush1.bf16.msra.mxu0 0
        %4900 = vmatprep.subr.bf16.mxu0 0
        %4901 = vmatpush1.bf16.msra.mxu0 0
        %4902 = vmatprep.subr.bf16.mxu0 0
        %4903 = vmatpush1.bf16.msra.mxu0 0
        %4904 = vmatprep.mubr.bf16.mxu0 0
        %4905 = vmatmul.mubr.bf16.gmra.mrb[0].mxu0 %v4861
        %v4906 = vpop.f32.mrb[0].mxu0
        %v4907 = vadd.f32 %v4846, %v4906
        %v4908 = vpop.f32.mrb[0].mxu0
        %v4909 = vpop.f32.mrb[0].mxu0
        %v4910 = vadd.f32 %v4846, %v4909
        %v4911 = vpop.f32.mrb[0].mxu0
        %4912 = vmatprep.mubr.bf16.mxu0 0
        %4913 = vmatmul.mubr.bf16.gmra.mrb[0].mxu0 %v4864
        %v4914 = vpop.f32.mrb[0].mxu0
        %v4915 = vadd.f32 %v4846, %v4914
        %v4916 = vpop.f32.mrb[0].mxu0
        %v4917 = vpop.f32.mrb[0].mxu0
        %v4918 = vadd.f32 %v4846, %v4917
        %v4919 = vpop.f32.mrb[0].mxu0
        %4920 = vmatprep.mubr.bf16.mxu0 0
        %4921 = vmatmul.mubr.bf16.gmra.mrb[0].mxu0 %v4867
        %v4922 = vpop.f32.mrb[0].mxu0
        %v4923 = vadd.f32 %v4846, %v4922
        %v4924 = vpop.f32.mrb[0].mxu0
        %v4925 = vpop.f32.mrb[0].mxu0
        %v4926 = vadd.f32 %v4846, %v4925
        %v4927 = vpop.f32.mrb[0].mxu0
        %4928 = vmatprep.mubr.bf16.mxu0 0
        %4929 = vmatmul.mubr.bf16.gmra.mrb[0].mxu0 %v4870
        %v4930 = vpop.f32.mrb[0].mxu0
        %v4931 = vadd.f32 %v4846, %v4930
        %v4932 = vpop.f32.mrb[0].mxu0
        %v4933 = vpop.f32.mrb[0].mxu0
        %v4934 = vadd.f32 %v4846, %v4933
        %v4935 = vpop.f32.mrb[0].mxu0
        %4936 = vdwg.mxu0
        %v4937 = vadd.f32 %v4907, %v3314
        %v4938 = vadd.f32 %v4910, %v3315
        %v4939 = vadd.f32 %v4915, %v3316
        %v4940 = vadd.f32 %v4918, %v3317
        %v4941 = vadd.f32 %v4923, %v3318
        %v4942 = vadd.f32 %v4926, %v3319
        %v4943 = vadd.f32 %v4931, %v3320
        %v4944 = vadd.f32 %v4934, %v3321
        %v4945 = vld [vmem:[%s45] sm:$0x1]
        %v4946 = vld [vmem:[%s47] sm:$0x1]
        %v4947 = vsel %vm1269, %v4937, 0.0
        %4948 = vadd.xlane.f32.xlu0 %v4947
        %v4949 = vpop.xlane.xlu0 %4948
        %v4950 = vsel %vm1269, %v4938, 0.0
        %4951 = vadd.xlane.f32.xlu0 %v4950
        %v4952 = vpop.xlane.xlu0 %4951
        %v4953 = vsel %vm1269, %v4939, 0.0
        %4954 = vadd.xlane.f32.xlu0 %v4953
        %v4955 = vpop.xlane.xlu0 %4954
        %v4956 = vsel %vm1269, %v4940, 0.0
        %4957 = vadd.xlane.f32.xlu0 %v4956
        %v4958 = vpop.xlane.xlu0 %4957
        %v4959 = vsel %vm1269, %v4941, 0.0
        %4960 = vadd.xlane.f32.xlu0 %v4959
        %v4961 = vpop.xlane.xlu0 %4960
        %v4962 = vsel %vm1269, %v4942, 0.0
        %4963 = vadd.xlane.f32.xlu0 %v4962
        %v4964 = vpop.xlane.xlu0 %4963
        %v4965 = vsel %vm1269, %v4943, 0.0
        %4966 = vadd.xlane.f32.xlu0 %v4965
        %v4967 = vpop.xlane.xlu0 %4966
        %v4968 = vsel %vm1269, %v4944, 0.0
        %4969 = vadd.xlane.f32.xlu0 %v4968
        %v4970 = vpop.xlane.xlu0 %4969
        %v4971 = vmul.f32 %v4949, %v1294
        %v4972 = vmul.f32 %v4952, %v1294
        %v4973 = vmul.f32 %v4955, %v1294
        %v4974 = vmul.f32 %v4958, %v1294
        %v4975 = vmul.f32 %v4961, %v1294
        %v4976 = vmul.f32 %v4964, %v1294
        %v4977 = vmul.f32 %v4967, %v1294
        %v4978 = vmul.f32 %v4970, %v1294
        %v4979 = vsub.f32 %v4937, %v4971
        %v4980 = vsub.f32 %v4938, %v4972
        %v4981 = vsub.f32 %v4939, %v4973
        %v4982 = vsub.f32 %v4940, %v4974
        %v4983 = vsub.f32 %v4941, %v4975
        %v4984 = vsub.f32 %v4942, %v4976
        %v4985 = vsub.f32 %v4943, %v4977
        %v4986 = vsub.f32 %v4944, %v4978
        %v4987 = vmul.f32 %v4979, %v4979
        %v4988 = vmul.f32 %v4980, %v4980
        %v4989 = vmul.f32 %v4981, %v4981
        %v4990 = vmul.f32 %v4982, %v4982
        %v4991 = vmul.f32 %v4983, %v4983
        %v4992 = vmul.f32 %v4984, %v4984
        %v4993 = vmul.f32 %v4985, %v4985
        %v4994 = vmul.f32 %v4986, %v4986
        %v4995 = vsel %vm1269, %v4987, 0.0
        %4996 = vadd.xlane.f32.xlu0 %v4995
        %v4997 = vpop.xlane.xlu0 %4996
        %v4998 = vsel %vm1269, %v4988, 0.0
        %4999 = vadd.xlane.f32.xlu0 %v4998
        %v5000 = vpop.xlane.xlu0 %4999
        %v5001 = vsel %vm1269, %v4989, 0.0
        %5002 = vadd.xlane.f32.xlu0 %v5001
        %v5003 = vpop.xlane.xlu0 %5002
        %v5004 = vsel %vm1269, %v4990, 0.0
        %5005 = vadd.xlane.f32.xlu0 %v5004
        %v5006 = vpop.xlane.xlu0 %5005
        %v5007 = vsel %vm1269, %v4991, 0.0
        %5008 = vadd.xlane.f32.xlu0 %v5007
        %v5009 = vpop.xlane.xlu0 %5008
        %v5010 = vsel %vm1269, %v4992, 0.0
        %5011 = vadd.xlane.f32.xlu0 %v5010
        %v5012 = vpop.xlane.xlu0 %5011
        %v5013 = vsel %vm1269, %v4993, 0.0
        %5014 = vadd.xlane.f32.xlu0 %v5013
        %v5015 = vpop.xlane.xlu0 %5014
        %v5016 = vsel %vm1269, %v4994, 0.0
        %5017 = vadd.xlane.f32.xlu0 %v5016
        %v5018 = vpop.xlane.xlu0 %5017
        %v5019 = vmul.f32 %v4997, %v1294
        %v5020 = vmul.f32 %v5000, %v1294
        %v5021 = vmul.f32 %v5003, %v1294
        %v5022 = vmul.f32 %v5006, %v1294
        %v5023 = vmul.f32 %v5009, %v1294
        %v5024 = vmul.f32 %v5012, %v1294
        %v5025 = vmul.f32 %v5015, %v1294
        %v5026 = vmul.f32 %v5018, %v1294
        %v5027 = vadd.f32 %v5019, 1e-05
        %v5028 = vadd.f32 %v5020, 1e-05
        %v5029 = vadd.f32 %v5021, 1e-05
        %v5030 = vadd.f32 %v5022, 1e-05
        %v5031 = vadd.f32 %v5023, 1e-05
        %v5032 = vadd.f32 %v5024, 1e-05
        %v5033 = vadd.f32 %v5025, 1e-05
        %v5034 = vadd.f32 %v5026, 1e-05
        %v5035 = vrsqrt.pop %v5027
        %v5036 = vrsqrt.pop %v5028
        %v5037 = vrsqrt.pop %v5029
        %v5038 = vrsqrt.pop %v5030
        %v5039 = vrsqrt.pop %v5031
        %v5040 = vrsqrt.pop %v5032
        %v5041 = vrsqrt.pop %v5033
        %v5042 = vrsqrt.pop %v5034
        %v5043 = vmul.f32 %v4979, %v5035
        %v5044 = vmul.f32 %v4980, %v5036
        %v5045 = vmul.f32 %v4981, %v5037
        %v5046 = vmul.f32 %v4982, %v5038
        %v5047 = vmul.f32 %v4983, %v5039
        %v5048 = vmul.f32 %v4984, %v5040
        %v5049 = vmul.f32 %v4985, %v5041
        %v5050 = vmul.f32 %v4986, %v5042
        %v5052 = vlaneseq
        %v5053 = vshrl.u32 %v5052, 7
        %v5054 = vsub.s32 0, %v5053
        %v5055 = vrot.slane %v4945, %v5054
        %v5057 = vmul.f32 %v5043, %v5055
        %v5058 = vmul.f32 %v5044, %v5055
        %v5059 = vmul.f32 %v5045, %v5055
        %v5060 = vmul.f32 %v5046, %v5055
        %v5061 = vmul.f32 %v5047, %v5055
        %v5062 = vmul.f32 %v5048, %v5055
        %v5063 = vmul.f32 %v5049, %v5055
        %v5064 = vmul.f32 %v5050, %v5055
        %v5066 = vlaneseq
        %v5067 = vshrl.u32 %v5066, 7
        %v5068 = vsub.s32 0, %v5067
        %v5069 = vrot.slane %v4946, %v5068
        %v5071 = vadd.f32 %v5057, %v5069
        %v5072 = vadd.f32 %v5058, %v5069
        %v5073 = vadd.f32 %v5059, %v5069
        %v5074 = vadd.f32 %v5060, %v5069
        %v5075 = vadd.f32 %v5061, %v5069
        %v5076 = vadd.f32 %v5062, %v5069
        %v5077 = vadd.f32 %v5063, %v5069
        %v5078 = vadd.f32 %v5064, %v5069
        %v5079 = vld [vmem:[%s49] sm:$0xf]
        %v5080 = vld [vmem:[%s49 + $0x4] sm:$0xf]
        %v5081 = vld [vmem:[%s49 + $0x8] sm:$0xf]
        %v5082 = vld [vmem:[%s49 + $0xc] sm:$0xf]
        %v5083 = vpack.c.bf16 %v5072, %v5071
        %v5084 = vpack.c.bf16 %v5074, %v5073
        %v5085 = vpack.c.bf16 %v5076, %v5075
        %v5086 = vpack.c.bf16 %v5078, %v5077
        %v5087 = vld [vmem:[%s51] sm:$0x1]
        %v5089 = vlaneseq
        %v5090 = vshrl.u32 %v5089, 7
        %v5091 = vsub.s32 0, %v5090
        %v5092 = vrot.slane %v5087, %v5091
        %v5098 = vunpack.c.l.b16 %v5079
        %v5099 = vunpack.c.l.b16 %v5080
        %v5100 = vunpack.c.l.b16 %v5081
        %v5101 = vunpack.c.l.b16 %v5082
        %v5102 = vpack.c.b16 %v5099, %v5098
        %v5103 = vpack.c.b16 %v5101, %v5100
        %v5107 = vsel %vm1269, %v5083, 0
        %v5110 = vsel %vm1269, %v5084, 0
        %v5113 = vsel %vm1269, %v5085, 0
        %v5116 = vsel %vm1269, %v5086, 0
        %5118 = vmatprep.subr.bf16.mxu0 0
        %5119 = vmatpush1.bf16.msra.mxu0 %v5102
        %5120 = vmatprep.subr.bf16.mxu0 0
        %5121 = vmatpush1.bf16.msra.mxu0 %v5103
        %5122 = vmatprep.subr.bf16.mxu0 0
        %5123 = vmatpush1.bf16.msra.mxu0 0
        %5124 = vmatprep.subr.bf16.mxu0 0
        %5125 = vmatpush1.bf16.msra.mxu0 0
        %5126 = vmatprep.subr.bf16.mxu0 0
        %5127 = vmatpush1.bf16.msra.mxu0 0
        %5128 = vmatprep.subr.bf16.mxu0 0
        %5129 = vmatpush1.bf16.msra.mxu0 0
        %5130 = vmatprep.subr.bf16.mxu0 0
        %5131 = vmatpush1.bf16.msra.mxu0 0
        %5132 = vmatprep.subr.bf16.mxu0 0
        %5133 = vmatpush1.bf16.msra.mxu0 0
        %5134 = vmatprep.subr.bf16.mxu0 0
        %5135 = vmatpush1.bf16.msra.mxu0 0
        %5136 = vmatprep.subr.bf16.mxu0 0
        %5137 = vmatpush1.bf16.msra.mxu0 0
        %5138 = vmatprep.subr.bf16.mxu0 0
        %5139 = vmatpush1.bf16.msra.mxu0 0
        %5140 = vmatprep.subr.bf16.mxu0 0
        %5141 = vmatpush1.bf16.msra.mxu0 0
        %5142 = vmatprep.subr.bf16.mxu0 0
        %5143 = vmatpush1.bf16.msra.mxu0 0
        %5144 = vmatprep.subr.bf16.mxu0 0
        %5145 = vmatpush1.bf16.msra.mxu0 0
        %5146 = vmatprep.subr.bf16.mxu0 0
        %5147 = vmatpush1.bf16.msra.mxu0 0
        %5148 = vmatprep.subr.bf16.mxu0 0
        %5149 = vmatpush1.bf16.msra.mxu0 0
        %5150 = vmatprep.mubr.bf16.mxu0 0
        %5151 = vmatmul.mubr.bf16.gmra.mrb[0].mxu0 %v5107
        %v5152 = vpop.f32.mrb[0].mxu0
        %v5153 = vadd.f32 %v5092, %v5152
        %v5154 = vpop.f32.mrb[0].mxu0
        %v5155 = vpop.f32.mrb[0].mxu0
        %v5156 = vadd.f32 %v5092, %v5155
        %v5157 = vpop.f32.mrb[0].mxu0
        %5158 = vmatprep.mubr.bf16.mxu0 0
        %5159 = vmatmul.mubr.bf16.gmra.mrb[0].mxu0 %v5110
        %v5160 = vpop.f32.mrb[0].mxu0
        %v5161 = vadd.f32 %v5092, %v5160
        %v5162 = vpop.f32.mrb[0].mxu0
        %v5163 = vpop.f32.mrb[0].mxu0
        %v5164 = vadd.f32 %v5092, %v5163
        %v5165 = vpop.f32.mrb[0].mxu0
        %5166 = vmatprep.mubr.bf16.mxu0 0
        %5167 = vmatmul.mubr.bf16.gmra.mrb[0].mxu0 %v5113
        %v5168 = vpop.f32.mrb[0].mxu0
        %v5169 = vadd.f32 %v5092, %v5168
        %v5170 = vpop.f32.mrb[0].mxu0
        %v5171 = vpop.f32.mrb[0].mxu0
        %v5172 = vadd.f32 %v5092, %v5171
        %v5173 = vpop.f32.mrb[0].mxu0
        %5174 = vmatprep.mubr.bf16.mxu0 0
        %5175 = vmatmul.mubr.bf16.gmra.mrb[0].mxu0 %v5116
        %v5176 = vpop.f32.mrb[0].mxu0
        %v5177 = vadd.f32 %v5092, %v5176
        %v5178 = vpop.f32.mrb[0].mxu0
        %v5179 = vpop.f32.mrb[0].mxu0
        %v5180 = vadd.f32 %v5092, %v5179
        %v5181 = vpop.f32.mrb[0].mxu0
        %5182 = vdwg.mxu0
        %v5183 = vmul.f32 %v5153, 0.5
        %v5184 = vmul.f32 %v5156, 0.5
        %v5185 = vmul.f32 %v5161, 0.5
        %v5186 = vmul.f32 %v5164, 0.5
        %v5187 = vmul.f32 %v5169, 0.5
        %v5188 = vmul.f32 %v5172, 0.5
        %v5189 = vmul.f32 %v5177, 0.5
        %v5190 = vmul.f32 %v5180, 0.5
        %v5191 = vmul.f32 %v5153, 0.70710677
        %v5192 = vmul.f32 %v5156, 0.70710677
        %v5193 = vmul.f32 %v5161, 0.70710677
        %v5194 = vmul.f32 %v5164, 0.70710677
        %v5195 = vmul.f32 %v5169, 0.70710677
        %v5196 = vmul.f32 %v5172, 0.70710677
        %v5197 = vmul.f32 %v5177, 0.70710677
        %v5198 = vmul.f32 %v5180, 0.70710677
        %v5199 = verf.f32.pop %v5191
        %v5200 = verf.f32.pop %v5192
        %v5201 = verf.f32.pop %v5193
        %v5202 = verf.f32.pop %v5194
        %v5203 = verf.f32.pop %v5195
        %v5204 = verf.f32.pop %v5196
        %v5205 = verf.f32.pop %v5197
        %v5206 = verf.f32.pop %v5198
        %v5207 = vadd.f32 %v5199, 1.0
        %v5208 = vadd.f32 %v5200, 1.0
        %v5209 = vadd.f32 %v5201, 1.0
        %v5210 = vadd.f32 %v5202, 1.0
        %v5211 = vadd.f32 %v5203, 1.0
        %v5212 = vadd.f32 %v5204, 1.0
        %v5213 = vadd.f32 %v5205, 1.0
        %v5214 = vadd.f32 %v5206, 1.0
        %v5215 = vmul.f32 %v5183, %v5207
        %v5216 = vmul.f32 %v5184, %v5208
        %v5217 = vmul.f32 %v5185, %v5209
        %v5218 = vmul.f32 %v5186, %v5210
        %v5219 = vmul.f32 %v5187, %v5211
        %v5220 = vmul.f32 %v5188, %v5212
        %v5221 = vmul.f32 %v5189, %v5213
        %v5222 = vmul.f32 %v5190, %v5214
        %v5223 = vld [vmem:[%s53] sm:$0xf]
        %v5224 = vld [vmem:[%s53 + $0x4] sm:$0xf]
        %v5225 = vld [vmem:[%s53 + $0x8] sm:$0xf]
        %v5226 = vld [vmem:[%s53 + $0xc] sm:$0xf]
        %v5227 = vld [vmem:[%s53 + $0x10] sm:$0xf]
        %v5228 = vld [vmem:[%s53 + $0x14] sm:$0xf]
        %v5229 = vld [vmem:[%s53 + $0x18] sm:$0xf]
        %v5230 = vld [vmem:[%s53 + $0x1c] sm:$0xf]
        %v5231 = vld [vmem:[%s53 + $0x20] sm:$0xf]
        %v5232 = vld [vmem:[%s53 + $0x24] sm:$0xf]
        %v5233 = vld [vmem:[%s53 + $0x28] sm:$0xf]
        %v5234 = vld [vmem:[%s53 + $0x2c] sm:$0xf]
        %v5235 = vld [vmem:[%s53 + $0x30] sm:$0xf]
        %v5236 = vld [vmem:[%s53 + $0x34] sm:$0xf]
        %v5237 = vld [vmem:[%s53 + $0x38] sm:$0xf]
        %v5238 = vld [vmem:[%s53 + $0x3c] sm:$0xf]
        %v5239 = vpack.c.bf16 %v5216, %v5215
        %v5240 = vpack.c.bf16 %v5218, %v5217
        %v5241 = vpack.c.bf16 %v5220, %v5219
        %v5242 = vpack.c.bf16 %v5222, %v5221
        %v5243 = vld [vmem:[%s55] sm:$0x1]
        %v5245 = vlaneseq
        %v5246 = vshrl.u32 %v5245, 7
        %v5247 = vsub.s32 0, %v5246
        %v5248 = vrot.slane %v5243, %v5247
        %v5266 = vunpack.c.l.b16 %v5223
        %v5267 = vunpack.c.l.b16 %v5224
        %v5268 = vunpack.c.l.b16 %v5225
        %v5269 = vunpack.c.l.b16 %v5226
        %v5270 = vunpack.c.l.b16 %v5227
        %v5271 = vunpack.c.l.b16 %v5228
        %v5272 = vunpack.c.l.b16 %v5229
        %v5273 = vunpack.c.l.b16 %v5230
        %v5274 = vunpack.c.l.b16 %v5231
        %v5275 = vunpack.c.l.b16 %v5232
        %v5276 = vunpack.c.l.b16 %v5233
        %v5277 = vunpack.c.l.b16 %v5234
        %v5278 = vunpack.c.l.b16 %v5235
        %v5279 = vunpack.c.l.b16 %v5236
        %v5280 = vunpack.c.l.b16 %v5237
        %v5281 = vunpack.c.l.b16 %v5238
        %v5282 = vpack.c.b16 %v5267, %v5266
        %v5283 = vpack.c.b16 %v5269, %v5268
        %v5284 = vpack.c.b16 %v5271, %v5270
        %v5285 = vpack.c.b16 %v5273, %v5272
        %v5286 = vpack.c.b16 %v5275, %v5274
        %v5287 = vpack.c.b16 %v5277, %v5276
        %v5288 = vpack.c.b16 %v5279, %v5278
        %v5289 = vpack.c.b16 %v5281, %v5280
        %5298 = vmatprep.subr.bf16.mxu0 0
        %5299 = vmatpush1.bf16.msra.mxu0 %v5282
        %5300 = vmatprep.subr.bf16.mxu0 0
        %5301 = vmatpush1.bf16.msra.mxu0 %v5283
        %5302 = vmatprep.subr.bf16.mxu0 0
        %5303 = vmatpush1.bf16.msra.mxu0 %v5284
        %5304 = vmatprep.subr.bf16.mxu0 0
        %5305 = vmatpush1.bf16.msra.mxu0 %v5285
        %5306 = vmatprep.subr.bf16.mxu0 0
        %5307 = vmatpush1.bf16.msra.mxu0 %v5286
        %5308 = vmatprep.subr.bf16.mxu0 0
        %5309 = vmatpush1.bf16.msra.mxu0 %v5287
        %5310 = vmatprep.subr.bf16.mxu0 0
        %5311 = vmatpush1.bf16.msra.mxu0 %v5288
        %5312 = vmatprep.subr.bf16.mxu0 0
        %5313 = vmatpush1.bf16.msra.mxu0 %v5289
        %5314 = vmatprep.subr.bf16.mxu0 0
        %5315 = vmatpush1.bf16.msra.mxu0 0
        %5316 = vmatprep.subr.bf16.mxu0 0
        %5317 = vmatpush1.bf16.msra.mxu0 0
        %5318 = vmatprep.subr.bf16.mxu0 0
        %5319 = vmatpush1.bf16.msra.mxu0 0
        %5320 = vmatprep.subr.bf16.mxu0 0
        %5321 = vmatpush1.bf16.msra.mxu0 0
        %5322 = vmatprep.subr.bf16.mxu0 0
        %5323 = vmatpush1.bf16.msra.mxu0 0
        %5324 = vmatprep.subr.bf16.mxu0 0
        %5325 = vmatpush1.bf16.msra.mxu0 0
        %5326 = vmatprep.subr.bf16.mxu0 0
        %5327 = vmatpush1.bf16.msra.mxu0 0
        %5328 = vmatprep.subr.bf16.mxu0 0
        %5329 = vmatpush1.bf16.msra.mxu0 0
        %5330 = vmatprep.mubr.bf16.mxu0 0
        %5331 = vmatmul.mubr.bf16.gmra.mrb[0].mxu0 %v5239
        %v5332 = vpop.f32.mrb[0].mxu0
        %v5333 = vadd.f32 %v5248, %v5332
        %v5334 = vpop.f32.mrb[0].mxu0
        %v5335 = vpop.f32.mrb[0].mxu0
        %v5336 = vadd.f32 %v5248, %v5335
        %v5337 = vpop.f32.mrb[0].mxu0
        %5338 = vmatprep.mubr.bf16.mxu0 0
        %5339 = vmatmul.mubr.bf16.gmra.mrb[0].mxu0 %v5240
        %v5340 = vpop.f32.mrb[0].mxu0
        %v5341 = vadd.f32 %v5248, %v5340
        %v5342 = vpop.f32.mrb[0].mxu0
        %v5343 = vpop.f32.mrb[0].mxu0
        %v5344 = vadd.f32 %v5248, %v5343
        %v5345 = vpop.f32.mrb[0].mxu0
        %5346 = vmatprep.mubr.bf16.mxu0 0
        %5347 = vmatmul.mubr.bf16.gmra.mrb[0].mxu0 %v5241
        %v5348 = vpop.f32.mrb[0].mxu0
        %v5349 = vadd.f32 %v5248, %v5348
        %v5350 = vpop.f32.mrb[0].mxu0
        %v5351 = vpop.f32.mrb[0].mxu0
        %v5352 = vadd.f32 %v5248, %v5351
        %v5353 = vpop.f32.mrb[0].mxu0
        %5354 = vmatprep.mubr.bf16.mxu0 0
        %5355 = vmatmul.mubr.bf16.gmra.mrb[0].mxu0 %v5242
        %v5356 = vpop.f32.mrb[0].mxu0
        %v5357 = vadd.f32 %v5248, %v5356
        %v5358 = vpop.f32.mrb[0].mxu0
        %v5359 = vpop.f32.mrb[0].mxu0
        %v5360 = vadd.f32 %v5248, %v5359
        %v5361 = vpop.f32.mrb[0].mxu0
        %5362 = vdwg.mxu0
        %v5363 = vadd.f32 %v5333, %v4937
        %v5364 = vadd.f32 %v5336, %v4938
        %v5365 = vadd.f32 %v5341, %v4939
        %v5366 = vadd.f32 %v5344, %v4940
        %v5367 = vadd.f32 %v5349, %v4941
        %v5368 = vadd.f32 %v5352, %v4942
        %v5369 = vadd.f32 %v5357, %v4943
        %v5370 = vadd.f32 %v5360, %v4944
        %v5371 = vld [vmem:[%s57] sm:$0x1]
        %v5372 = vld [vmem:[%s59] sm:$0x1]
        %v5373 = vsel %vm1269, %v5363, 0.0
        %5374 = vadd.xlane.f32.xlu0 %v5373
        %v5375 = vpop.xlane.xlu0 %5374
        %v5376 = vsel %vm1269, %v5364, 0.0
        %5377 = vadd.xlane.f32.xlu0 %v5376
        %v5378 = vpop.xlane.xlu0 %5377
        %v5379 = vsel %vm1269, %v5365, 0.0
        %5380 = vadd.xlane.f32.xlu0 %v5379
        %v5381 = vpop.xlane.xlu0 %5380
        %v5382 = vsel %vm1269, %v5366, 0.0
        %5383 = vadd.xlane.f32.xlu0 %v5382
        %v5384 = vpop.xlane.xlu0 %5383
        %v5385 = vsel %vm1269, %v5367, 0.0
        %5386 = vadd.xlane.f32.xlu0 %v5385
        %v5387 = vpop.xlane.xlu0 %5386
        %v5388 = vsel %vm1269, %v5368, 0.0
        %5389 = vadd.xlane.f32.xlu0 %v5388
        %v5390 = vpop.xlane.xlu0 %5389
        %v5391 = vsel %vm1269, %v5369, 0.0
        %5392 = vadd.xlane.f32.xlu0 %v5391
        %v5393 = vpop.xlane.xlu0 %5392
        %v5394 = vsel %vm1269, %v5370, 0.0
        %5395 = vadd.xlane.f32.xlu0 %v5394
        %v5396 = vpop.xlane.xlu0 %5395
        %v5397 = vmul.f32 %v5375, %v1294
        %v5398 = vmul.f32 %v5378, %v1294
        %v5399 = vmul.f32 %v5381, %v1294
        %v5400 = vmul.f32 %v5384, %v1294
        %v5401 = vmul.f32 %v5387, %v1294
        %v5402 = vmul.f32 %v5390, %v1294
        %v5403 = vmul.f32 %v5393, %v1294
        %v5404 = vmul.f32 %v5396, %v1294
        %v5405 = vsub.f32 %v5363, %v5397
        %v5406 = vsub.f32 %v5364, %v5398
        %v5407 = vsub.f32 %v5365, %v5399
        %v5408 = vsub.f32 %v5366, %v5400
        %v5409 = vsub.f32 %v5367, %v5401
        %v5410 = vsub.f32 %v5368, %v5402
        %v5411 = vsub.f32 %v5369, %v5403
        %v5412 = vsub.f32 %v5370, %v5404
        %v5413 = vmul.f32 %v5405, %v5405
        %v5414 = vmul.f32 %v5406, %v5406
        %v5415 = vmul.f32 %v5407, %v5407
        %v5416 = vmul.f32 %v5408, %v5408
        %v5417 = vmul.f32 %v5409, %v5409
        %v5418 = vmul.f32 %v5410, %v5410
        %v5419 = vmul.f32 %v5411, %v5411
        %v5420 = vmul.f32 %v5412, %v5412
        %v5421 = vsel %vm1269, %v5413, 0.0
        %5422 = vadd.xlane.f32.xlu0 %v5421
        %v5423 = vpop.xlane.xlu0 %5422
        %v5424 = vsel %vm1269, %v5414, 0.0
        %5425 = vadd.xlane.f32.xlu0 %v5424
        %v5426 = vpop.xlane.xlu0 %5425
        %v5427 = vsel %vm1269, %v5415, 0.0
        %5428 = vadd.xlane.f32.xlu0 %v5427
        %v5429 = vpop.xlane.xlu0 %5428
        %v5430 = vsel %vm1269, %v5416, 0.0
        %5431 = vadd.xlane.f32.xlu0 %v5430
        %v5432 = vpop.xlane.xlu0 %5431
        %v5433 = vsel %vm1269, %v5417, 0.0
        %5434 = vadd.xlane.f32.xlu0 %v5433
        %v5435 = vpop.xlane.xlu0 %5434
        %v5436 = vsel %vm1269, %v5418, 0.0
        %5437 = vadd.xlane.f32.xlu0 %v5436
        %v5438 = vpop.xlane.xlu0 %5437
        %v5439 = vsel %vm1269, %v5419, 0.0
        %5440 = vadd.xlane.f32.xlu0 %v5439
        %v5441 = vpop.xlane.xlu0 %5440
        %v5442 = vsel %vm1269, %v5420, 0.0
        %5443 = vadd.xlane.f32.xlu0 %v5442
        %v5444 = vpop.xlane.xlu0 %5443
        %v5445 = vmul.f32 %v5423, %v1294
        %v5446 = vmul.f32 %v5426, %v1294
        %v5447 = vmul.f32 %v5429, %v1294
        %v5448 = vmul.f32 %v5432, %v1294
        %v5449 = vmul.f32 %v5435, %v1294
        %v5450 = vmul.f32 %v5438, %v1294
        %v5451 = vmul.f32 %v5441, %v1294
        %v5452 = vmul.f32 %v5444, %v1294
        %v5453 = vadd.f32 %v5445, 1e-05
        %v5454 = vadd.f32 %v5446, 1e-05
        %v5455 = vadd.f32 %v5447, 1e-05
        %v5456 = vadd.f32 %v5448, 1e-05
        %v5457 = vadd.f32 %v5449, 1e-05
        %v5458 = vadd.f32 %v5450, 1e-05
        %v5459 = vadd.f32 %v5451, 1e-05
        %v5460 = vadd.f32 %v5452, 1e-05
        %v5461 = vrsqrt.pop %v5453
        %v5462 = vrsqrt.pop %v5454
        %v5463 = vrsqrt.pop %v5455
        %v5464 = vrsqrt.pop %v5456
        %v5465 = vrsqrt.pop %v5457
        %v5466 = vrsqrt.pop %v5458
        %v5467 = vrsqrt.pop %v5459
        %v5468 = vrsqrt.pop %v5460
        %v5469 = vmul.f32 %v5405, %v5461
        %v5470 = vmul.f32 %v5406, %v5462
        %v5471 = vmul.f32 %v5407, %v5463
        %v5472 = vmul.f32 %v5408, %v5464
        %v5473 = vmul.f32 %v5409, %v5465
        %v5474 = vmul.f32 %v5410, %v5466
        %v5475 = vmul.f32 %v5411, %v5467
        %v5476 = vmul.f32 %v5412, %v5468
        %v5478 = vlaneseq
        %v5479 = vshrl.u32 %v5478, 7
        %v5480 = vsub.s32 0, %v5479
        %v5481 = vrot.slane %v5371, %v5480
        %v5483 = vmul.f32 %v5469, %v5481
        %v5484 = vmul.f32 %v5470, %v5481
        %v5485 = vmul.f32 %v5471, %v5481
        %v5486 = vmul.f32 %v5472, %v5481
        %v5487 = vmul.f32 %v5473, %v5481
        %v5488 = vmul.f32 %v5474, %v5481
        %v5489 = vmul.f32 %v5475, %v5481
        %v5490 = vmul.f32 %v5476, %v5481
        %v5492 = vlaneseq
        %v5493 = vshrl.u32 %v5492, 7
        %v5494 = vsub.s32 0, %v5493
        %v5495 = vrot.slane %v5372, %v5494
        %v5497 = vadd.f32 %v5483, %v5495
        %v5498 = vadd.f32 %v5484, %v5495
        %v5499 = vadd.f32 %v5485, %v5495
        %v5500 = vadd.f32 %v5486, %v5495
        %v5501 = vadd.f32 %v5487, %v5495
        %v5502 = vadd.f32 %v5488, %v5495
        %v5503 = vadd.f32 %v5489, %v5495
        %v5504 = vadd.f32 %v5490, %v5495
        %v5505 = vld [vmem:[%s61] sm:$0xf]
        %v5506 = vld [vmem:[%s61 + $0x4] sm:$0xf]
        %v5507 = vld [vmem:[%s61 + $0x8] sm:$0xf]
        %v5508 = vld [vmem:[%s61 + $0xc] sm:$0xf]
        %v5509 = vpack.c.bf16 %v5498, %v5497
        %v5510 = vpack.c.bf16 %v5500, %v5499
        %v5511 = vpack.c.bf16 %v5502, %v5501
        %v5512 = vpack.c.bf16 %v5504, %v5503
        %v5513 = vld [vmem:[%s63] sm:$0x1]
        %v5515 = vlaneseq
        %v5516 = vshrl.u32 %v5515, 7
        %v5517 = vsub.s32 0, %v5516
        %v5518 = vrot.slane %v5513, %v5517
        %v5524 = vunpack.c.l.b16 %v5505
        %v5525 = vunpack.c.l.b16 %v5506
        %v5526 = vunpack.c.l.b16 %v5507
        %v5527 = vunpack.c.l.b16 %v5508
        %v5528 = vpack.c.b16 %v5525, %v5524
        %v5529 = vpack.c.b16 %v5527, %v5526
        %v5533 = vsel %vm1269, %v5509, 0
        %v5536 = vsel %vm1269, %v5510, 0
        %v5539 = vsel %vm1269, %v5511, 0
        %v5542 = vsel %vm1269, %v5512, 0
        %5544 = vmatprep.subr.bf16.mxu0 0
        %5545 = vmatpush1.bf16.msra.mxu0 %v5528
        %5546 = vmatprep.subr.bf16.mxu0 0
        %5547 = vmatpush1.bf16.msra.mxu0 %v5529
        %5548 = vmatprep.subr.bf16.mxu0 0
        %5549 = vmatpush1.bf16.msra.mxu0 0
        %5550 = vmatprep.subr.bf16.mxu0 0
        %5551 = vmatpush1.bf16.msra.mxu0 0
        %5552 = vmatprep.subr.bf16.mxu0 0
        %5553 = vmatpush1.bf16.msra.mxu0 0
        %5554 = vmatprep.subr.bf16.mxu0 0
        %5555 = vmatpush1.bf16.msra.mxu0 0
        %5556 = vmatprep.subr.bf16.mxu0 0
        %5557 = vmatpush1.bf16.msra.mxu0 0
        %5558 = vmatprep.subr.bf16.mxu0 0
        %5559 = vmatpush1.bf16.msra.mxu0 0
        %5560 = vmatprep.subr.bf16.mxu0 0
        %5561 = vmatpush1.bf16.msra.mxu0 0
        %5562 = vmatprep.subr.bf16.mxu0 0
        %5563 = vmatpush1.bf16.msra.mxu0 0
        %5564 = vmatprep.subr.bf16.mxu0 0
        %5565 = vmatpush1.bf16.msra.mxu0 0
        %5566 = vmatprep.subr.bf16.mxu0 0
        %5567 = vmatpush1.bf16.msra.mxu0 0
        %5568 = vmatprep.subr.bf16.mxu0 0
        %5569 = vmatpush1.bf16.msra.mxu0 0
        %5570 = vmatprep.subr.bf16.mxu0 0
        %5571 = vmatpush1.bf16.msra.mxu0 0
        %5572 = vmatprep.subr.bf16.mxu0 0
        %5573 = vmatpush1.bf16.msra.mxu0 0
        %5574 = vmatprep.subr.bf16.mxu0 0
        %5575 = vmatpush1.bf16.msra.mxu0 0
        %5576 = vmatprep.mubr.bf16.mxu0 0
        %5577 = vmatmul.mubr.bf16.gmra.mrb[0].mxu0 %v5533
        %v5578 = vpop.f32.mrb[0].mxu0
        %v5579 = vadd.f32 %v5518, %v5578
        %v5580 = vpop.f32.mrb[0].mxu0
        %v5581 = vpop.f32.mrb[0].mxu0
        %v5582 = vadd.f32 %v5518, %v5581
        %v5583 = vpop.f32.mrb[0].mxu0
        %5584 = vmatprep.mubr.bf16.mxu0 0
        %5585 = vmatmul.mubr.bf16.gmra.mrb[0].mxu0 %v5536
        %v5586 = vpop.f32.mrb[0].mxu0
        %v5587 = vadd.f32 %v5518, %v5586
        %v5588 = vpop.f32.mrb[0].mxu0
        %v5589 = vpop.f32.mrb[0].mxu0
        %v5590 = vadd.f32 %v5518, %v5589
        %v5591 = vpop.f32.mrb[0].mxu0
        %5592 = vmatprep.mubr.bf16.mxu0 0
        %5593 = vmatmul.mubr.bf16.gmra.mrb[0].mxu0 %v5539
        %v5594 = vpop.f32.mrb[0].mxu0
        %v5595 = vadd.f32 %v5518, %v5594
        %v5596 = vpop.f32.mrb[0].mxu0
        %v5597 = vpop.f32.mrb[0].mxu0
        %v5598 = vadd.f32 %v5518, %v5597
        %v5599 = vpop.f32.mrb[0].mxu0
        %5600 = vmatprep.mubr.bf16.mxu0 0
        %5601 = vmatmul.mubr.bf16.gmra.mrb[0].mxu0 %v5542
        %v5602 = vpop.f32.mrb[0].mxu0
        %v5603 = vadd.f32 %v5518, %v5602
        %v5604 = vpop.f32.mrb[0].mxu0
        %v5605 = vpop.f32.mrb[0].mxu0
        %v5606 = vadd.f32 %v5518, %v5605
        %v5607 = vpop.f32.mrb[0].mxu0
        %5608 = vdwg.mxu0
        %5609 = vst [vmem:[%s979] sm:$0xff] %v5579
        %5610 = vst [vmem:[%s979 + $0x8] sm:$0xff] %v5582
        %5611 = vst [vmem:[%s979 + $0x10] sm:$0xff] %v5587
        %5612 = vst [vmem:[%s979 + $0x18] sm:$0xff] %v5590
        %5613 = vst [vmem:[%s979 + $0x20] sm:$0xff] %v5595
        %5614 = vst [vmem:[%s979 + $0x28] sm:$0xff] %v5598
        %5615 = vst [vmem:[%s979 + $0x30] sm:$0xff] %v5603
        %5616 = vst [vmem:[%s979 + $0x38] sm:$0xff] %v5606
        %s5617 = sand.u32 %s764, 1
        %s5618 = scalar_lea.sflag [#allocation4], %s5617
        %s5619 = sand.u32 %s764, 1
        %s5620 = smul.addr %s5619, 64
        %s5621 = scalar_lea.vmem [#allocation3], %s5620
        // Predicated region
        $region149: #{tpu_custom_call.1} parent=147 // pred_check
          %p5622 = pneg %p774
        $region150: #{tpu_custom_call.1} parent=147 // pred_check_branch
          %5624 = sbr.rel (%p5622) target = $region152
        $region151: #{tpu_custom_call.1} parent=147 // pred_region
          %s5626 = ssub.s32 1024, 1024
          %5627 = vsyncadd %s5618, %s5626
          %s5628 = smul.addr %s79, 8
          %s5629 = smul.addr %s5628, 128
          %s5630 = scalar_lea.hbm %s65, %s5629
          %s5631 = sshll.u32 %s5621, 4
          %s5632 = int_to_ptr.vmem [resolvable:$true] %s5631
          %5637 = dma.vmem_to_hbm [thread:$0]  %s5632, 1024, %s5630, %s5618, 128, 128, 8
        $region152: #{tpu_custom_call.1} parent=147 // pred_fallthru
          _
      $region148: #{tpu_custom_call.1} parent=5 // pred_fallthru
        _
      %p5638 = scmp.le.s32.totalorder 2, %s74
      // Predicated region
      $region153: #{tpu_custom_call.1} parent=5 // pred_check
        %p5639 = pneg %p5638
      $region154: #{tpu_custom_call.1} parent=5 // pred_check_branch
        %5641 = sbr.rel (%p5639) target = $region156
      $region155: #{tpu_custom_call.1} parent=5 // pred_region
        %s5642 = ssub.s32 %s74, 2
        // Predicated region
        $region157: #{tpu_custom_call.1} parent=155 // pred_check
          %p5643 = pneg %p780
        $region158: #{tpu_custom_call.1} parent=155 // pred_check_branch
          %5645 = sbr.rel (%p5643) target = $region160
        $region159: #{tpu_custom_call.1} parent=155 // pred_region
          %s5646 = sand.u32 %s765, 1
          %s5647 = scalar_lea.sflag [#allocation4], %s5646
          %s5648 = sand.u32 %s765, 1
          %s5649 = smul.addr %s5648, 64
          %s5650 = scalar_lea.vmem [#allocation3], %s5649
          %5651 = dma.done %s5647, 1024
        $region160: #{tpu_custom_call.1} parent=155 // pred_fallthru
          _
      $region156: #{tpu_custom_call.1} parent=5 // pred_fallthru
        _
    $region6: #{tpu_custom_call.1} parent=1 // loop_footer
      %s78 = sadd.s32 1, %s74
    $region7: #{tpu_custom_call.1} parent=1 // loop_footer_branch
      %73 = sbr.rel target = $region3
    $region8: #{tpu_custom_call.1} parent=1 // loop_exit
      _
    %5652 = vsyncpa [#allocation4], 1
    %s5653 = scalar_lea.sflag [#allocation4], 1
    %5654 = vsyncpa %s5653, 1

</llo_original>
